<compile_context>
chip_gen: v7x
topology: tpu7x:2x2x1
jax: 0.10.0
libtpu: 0.0.40
codegen_flags: <defaults>
</compile_context>

<pallas_src>
import math
from functools import partial

import jax
import jax.numpy as jnp
from jax import lax
from jax.experimental import pallas as pl
from jax.experimental.pallas import tpu as pltpu


def _cdiv(a, b):
    return (a + b - 1) // b


def _round_up(a, b):
    return _cdiv(a, b) * b


def _fit(x, axis, target):
    """Zero-pad or crop `x` along `axis` to length `target`."""
    cur = x.shape[axis]
    if cur < target:
        pads = [(0, 0)] * x.ndim
        pads[axis] = (0, target - cur)
        x = jnp.pad(x, pads)
    elif cur > target:
        x = lax.slice_in_dim(x, 0, target, axis=axis)
    return x


# -----------------------------------------------------------------------------
# Pallas kernel: one output row-tile = sum over taps of (M x Cin) @ (Cin x Cout),
# bf16 operands, f32 accumulation, fused bias + PReLU epilogue.
# -----------------------------------------------------------------------------
def _conv_tap_kernel(x_ref, w_ref, ba_ref, o_ref, *, taps, th, wop, cin, cout):
    # x_ref : (n_phases, th + halo_h, wop + halo_w, cin)  bf16 input slab (+halo)
    # w_ref : (n_taps, cin, cout)                         bf16 per-tap weights
    # ba_ref: (2, cout)                                   f32 [bias ; prelu alpha]
    # o_ref : (1, th, wop, cout)                          output tile
    m = th * wop
    acc = jnp.zeros((m, cout), jnp.float32)
    for t, (ph, oy, ox) in enumerate(taps):            # static (unrolled) tap loop
        xs = x_ref[ph, oy:oy + th, ox:ox + wop, :]      # (th, wop, cin), contiguous
        acc = acc + jnp.dot(xs.reshape(m, cin), w_ref[t],
                            preferred_element_type=jnp.float32)
    bias = ba_ref[0:1, :]                               # (1, cout)
    alpha = ba_ref[1:2, :]                              # (1, cout)
    y = acc + bias
    y = jnp.where(y >= 0.0, y, y * alpha)               # PReLU (per-channel)
    o_ref[0] = y.reshape(th, wop, cout).astype(o_ref.dtype)


# -----------------------------------------------------------------------------
# Conv2d + PReLU wrapper (NHWC in / NHWC out).  All preprocessing is a single
# cheap pass over the activation (pad + phase split + row slabbing); the 9x
# im2col copy of the old implementation is gone.
# -----------------------------------------------------------------------------
def conv2d_prelu(x_nhwc, prep, *, stride, pad, out_dtype=jnp.bfloat16):
    N, H, W, Cin = x_nhwc.shape
    kh, kw, cin_w, cout = prep["w"].shape
    assert cin_w == Cin
    s = stride
    Ho = (H + 2 * pad - kh) // s + 1
    Wo = (W + 2 * pad - kw) // s + 1
    hH, hW = (kh - 1) // s, (kw - 1) // s               # halo in phase coordinates
    n_ph = s * s

    # Sublane-friendly output width (garbage columns are cropped afterwards).
    wop = _round_up(Wo, 8)
    wph = wop + hW

    # Shape-adaptive row tile: ~1K output pixels per grid step; keep >=2 grid
    # blocks so both TensorCores of a v7x chip can be used.
    th = max(1, min(Ho, 1024 // wop))
    n_tiles = _cdiv(Ho, th)
    if N * n_tiles < 2 and Ho > 1:
        th = _cdiv(Ho, 2)
        n_tiles = _cdiv(Ho, th)
    h_slab = th + hH
    hph = n_tiles * th + hH

    # Pad + space-to-depth phase split so every tap is a static contiguous slice.
    xp = jnp.pad(x_nhwc, ((0, 0), (pad, pad), (pad, pad), (0, 0)))
    xp = _fit(xp, 1, s * hph)
    xp = _fit(xp, 2, s * wph)
    xph = xp.reshape(N, hph, s, wph, s, Cin)
    xph = xph.transpose(0, 2, 4, 1, 3, 5).reshape(N, n_ph, hph, wph, Cin)

    # Overlapping row slabs (halo duplication is only hH/th, a few percent).
    slabs = [xph[:, :, i * th:i * th + h_slab] for i in range(n_tiles)]
    x_slab = jnp.stack(slabs, axis=1)                   # (N, n_tiles, n_ph, h_slab, wph, Cin)
    x_slab = x_slab.reshape(N * n_tiles * n_ph, h_slab, wph, Cin).astype(jnp.bfloat16)

    # tap -> (phase index, row offset, col offset), all static Python ints.
    taps = tuple(((ky % s) * s + (kx % s), ky // s, kx // s)
                 for ky in range(kh) for kx in range(kw))
    w_flat = prep["w"].reshape(kh * kw, Cin, cout)      # bf16, prepared in init

    nt = N * n_tiles
    kernel = partial(_conv_tap_kernel, taps=taps, th=th, wop=wop,
                     cin=Cin, cout=cout)

    out = pl.pallas_call(
        kernel,
        out_shape=jax.ShapeDtypeStruct((nt, th, wop, cout), out_dtype),
        grid=(nt,),
        in_specs=[
            # one slab (all phases + halo) per grid step
            pl.BlockSpec((n_ph, h_slab, wph, Cin), lambda i: (i, 0, 0, 0)),
            # weights + bias/alpha stay resident in VMEM
            pl.BlockSpec((kh * kw, Cin, cout), lambda i: (0, 0, 0)),
            pl.BlockSpec((2, cout), lambda i: (0, 0)),
        ],
        out_specs=pl.BlockSpec((1, th, wop, cout), lambda i: (i, 0, 0, 0)),
        compiler_params=pltpu.CompilerParams(dimension_semantics=("parallel",)),
    )(x_slab, w_flat, prep["ba"])

    out = out.reshape(N, n_tiles * th, wop, cout)[:, :Ho, :Wo, :]
    return out


# -----------------------------------------------------------------------------
# Parameter preparation (hoisted weight relayout / bf16 cast) + Conv2n forward.
# -----------------------------------------------------------------------------
def prep_conv_params(w, b, alpha):
    """w: (Cout, Cin, kh, kw) f32 torch layout -> per-tap bf16 (kh, kw, Cin, Cout)."""
    w_taps = jnp.transpose(w, (2, 3, 1, 0)).astype(jnp.bfloat16)      # (kh, kw, Cin, Cout)
    ba = jnp.stack([b, alpha], axis=0).astype(jnp.float32)            # (2, Cout)
    return {"w": w_taps, "ba": ba}


def init_conv2n(key, in_planes, out_planes):
    keys = jax.random.split(key, 8)

    def layer(kw_, kb_, cin, cout, k):
        fan_in = cin * k * k
        bound = 1.0 / math.sqrt(fan_in)
        w = jax.random.uniform(kw_, (cout, cin, k, k), jnp.float32, -bound, bound)
        b = jax.random.uniform(kb_, (cout,), jnp.float32, -bound, bound)
        alpha = jnp.full((cout,), 0.25, jnp.float32)    # torch.nn.PReLU default
        return prep_conv_params(w, b, alpha)

    return {
        "conv1": layer(keys[0], keys[1], in_planes, in_planes, 3),
        "conv2": layer(keys[2], keys[3], in_planes, in_planes, 3),
        "conv3": layer(keys[4], keys[5], in_planes, in_planes, 1),
        "conv4": layer(keys[6], keys[7], in_planes, out_planes, 1),
    }


@partial(jax.jit, static_argnames=("stride",))
def conv2n_forward(params, x_nchw, stride=2):
    x = jnp.transpose(x_nchw, (0, 2, 3, 1))                             # NCHW -> NHWC
    x = conv2d_prelu(x, params["conv1"], stride=stride, pad=1)
    x = conv2d_prelu(x, params["conv2"], stride=1, pad=1)
    x = conv2d_prelu(x, params["conv3"], stride=1, pad=0)
    x = conv2d_prelu(x, params["conv4"], stride=1, pad=0, out_dtype=jnp.float32)
    return jnp.transpose(x, (0, 3, 1, 2))                               # NHWC -> NCHW


# -----------------------------------------------------------------------------
# Pure-JAX reference (same bf16 quantization points) for a correctness check.
# -----------------------------------------------------------------------------
def conv2n_reference(params, x_nchw, stride=2):
    def layer(x, prep, s, pad, out_dtype):
        w = prep["w"].astype(jnp.float32)                               # (kh,kw,Cin,Cout) HWIO
        y = lax.conv_general_dilated(
            x.astype(jnp.float32), w, (s, s), [(pad, pad), (pad, pad)],
            dimension_numbers=("NHWC", "HWIO", "NHWC"),
            precision=lax.Precision.HIGHEST)
        bias = prep["ba"][0]
        alpha = prep["ba"][1]
        y = y + bias
        y = jnp.where(y >= 0.0, y, y * alpha)
        return y.astype(out_dtype)

    x = jnp.transpose(x_nchw, (0, 2, 3, 1)).astype(jnp.bfloat16)
    x = layer(x, params["conv1"], stride, 1, jnp.bfloat16)
    x = layer(x, params["conv2"], 1, 1, jnp.bfloat16)
    x = layer(x, params["conv3"], 1, 0, jnp.bfloat16)
    x = layer(x, params["conv4"], 1, 0, jnp.float32)
    return jnp.transpose(x, (0, 3, 1, 2))


if __name__ == "__main__":
    key = jax.random.PRNGKey(0)
    kp, kx = jax.random.split(key)

    in_planes, out_planes = 8, 16
    params = init_conv2n(kp, in_planes, out_planes)
    x = jax.random.uniform(kx, (2, in_planes, 16, 16), jnp.float32)

    y = conv2n_forward(params, x, stride=2)
    y = jax.block_until_ready(y)

    assert y.shape == (2, out_planes, 8, 8), y.shape
    assert bool(jnp.all(jnp.isfinite(y)))

    y_ref = jax.block_until_ready(conv2n_reference(params, x, stride=2))
    err = float(jnp.max(jnp.abs(y - y_ref)))
    assert err < 5e-2, f"max abs error vs reference: {err}"

    print("KERNEL_OK")
</pallas_src>

<mosaic_0001>
module attributes {stable_mosaic.version = 11 : i64} {
  func.func @_conv_tap_kernel(%arg0: i32, %arg1: memref<4x9x9x8xbf16, #tpu.memory_space<vmem>>, %arg2: memref<9x8x8xbf16, #tpu.memory_space<vmem>>, %arg3: memref<2x8xf32, #tpu.memory_space<vmem>>, %arg4: memref<1x8x8x8xbf16, #tpu.memory_space<vmem>>) attributes {dimension_semantics = [#tpu.dimension_semantics<parallel>], iteration_bounds = array<i64: 2>, scalar_prefetch = 0 : i64, scratch_operands = 0 : i64, tpu.core_type = #tpu.core_type<tc>, window_params = [{transform_indices = @transform_0, window_bounds = array<i64: 4, 9, 9, 8>}, {pipeline_mode = #tpu.pipeline_mode<synchronous>, transform_indices = @transform_1, window_bounds = array<i64: 9, 8, 8>}, {pipeline_mode = #tpu.pipeline_mode<synchronous>, transform_indices = @transform_2, window_bounds = array<i64: 2, 8>}, {transform_indices = @transform_3, window_bounds = array<i64: 1, 8, 8, 8>}]} {
    %cst = arith.constant 0.000000e+00 : f32
    %0 = vector.broadcast %cst : f32 to vector<64x8xf32>
    %c0 = arith.constant 0 : index
    %c0_0 = arith.constant 0 : index
    %c0_1 = arith.constant 0 : index
    %c0_2 = arith.constant 0 : index
    %1 = vector.load %arg1[%c0, %c0_0, %c0_1, %c0_2] : memref<4x9x9x8xbf16, #tpu.memory_space<vmem>>, vector<1x8x8x8xbf16>
    %2 = vector.shape_cast %1 : vector<1x8x8x8xbf16> to vector<8x8x8xbf16>
    %3 = vector.shape_cast %2 : vector<8x8x8xbf16> to vector<64x8xbf16>
    %c0_3 = arith.constant 0 : index
    %c0_4 = arith.constant 0 : index
    %c0_5 = arith.constant 0 : index
    %4 = vector.load %arg2[%c0_3, %c0_4, %c0_5] : memref<9x8x8xbf16, #tpu.memory_space<vmem>>, vector<1x8x8xbf16>
    %5 = vector.shape_cast %4 : vector<1x8x8xbf16> to vector<8x8xbf16>
    %cst_6 = arith.constant dense<0.000000e+00> : vector<64x8xf32>
    %6 = tpu.matmul %3, %5, %cst_6 {dimension_numbers = #tpu.dot_dimension_numbers<[1], [0], [0], [1], [0, 0, 1, 1], [], []>} : vector<64x8xbf16>, vector<8x8xbf16>, vector<64x8xf32> -> vector<64x8xf32>
    %7 = arith.addf %0, %6 : vector<64x8xf32>
    %c1 = arith.constant 1 : index
    %c0_7 = arith.constant 0 : index
    %c0_8 = arith.constant 0 : index
    %c0_9 = arith.constant 0 : index
    %8 = vector.load %arg1[%c1, %c0_7, %c0_8, %c0_9] : memref<4x9x9x8xbf16, #tpu.memory_space<vmem>>, vector<1x8x8x8xbf16>
    %9 = vector.shape_cast %8 : vector<1x8x8x8xbf16> to vector<8x8x8xbf16>
    %10 = vector.shape_cast %9 : vector<8x8x8xbf16> to vector<64x8xbf16>
    %c1_10 = arith.constant 1 : index
    %c0_11 = arith.constant 0 : index
    %c0_12 = arith.constant 0 : index
    %11 = vector.load %arg2[%c1_10, %c0_11, %c0_12] : memref<9x8x8xbf16, #tpu.memory_space<vmem>>, vector<1x8x8xbf16>
    %12 = vector.shape_cast %11 : vector<1x8x8xbf16> to vector<8x8xbf16>
    %cst_13 = arith.constant dense<0.000000e+00> : vector<64x8xf32>
    %13 = tpu.matmul %10, %12, %cst_13 {dimension_numbers = #tpu.dot_dimension_numbers<[1], [0], [0], [1], [0, 0, 1, 1], [], []>} : vector<64x8xbf16>, vector<8x8xbf16>, vector<64x8xf32> -> vector<64x8xf32>
    %14 = arith.addf %7, %13 : vector<64x8xf32>
    %c0_14 = arith.constant 0 : index
    %c0_15 = arith.constant 0 : index
    %c1_16 = arith.constant 1 : index
    %c0_17 = arith.constant 0 : index
    %15 = vector.load %arg1[%c0_14, %c0_15, %c1_16, %c0_17] : memref<4x9x9x8xbf16, #tpu.memory_space<vmem>>, vector<1x8x8x8xbf16>
    %16 = vector.shape_cast %15 : vector<1x8x8x8xbf16> to vector<8x8x8xbf16>
    %17 = vector.shape_cast %16 : vector<8x8x8xbf16> to vector<64x8xbf16>
    %c2 = arith.constant 2 : index
    %c0_18 = arith.constant 0 : index
    %c0_19 = arith.constant 0 : index
    %18 = vector.load %arg2[%c2, %c0_18, %c0_19] : memref<9x8x8xbf16, #tpu.memory_space<vmem>>, vector<1x8x8xbf16>
    %19 = vector.shape_cast %18 : vector<1x8x8xbf16> to vector<8x8xbf16>
    %cst_20 = arith.constant dense<0.000000e+00> : vector<64x8xf32>
    %20 = tpu.matmul %17, %19, %cst_20 {dimension_numbers = #tpu.dot_dimension_numbers<[1], [0], [0], [1], [0, 0, 1, 1], [], []>} : vector<64x8xbf16>, vector<8x8xbf16>, vector<64x8xf32> -> vector<64x8xf32>
    %21 = arith.addf %14, %20 : vector<64x8xf32>
    %c2_21 = arith.constant 2 : index
    %c0_22 = arith.constant 0 : index
    %c0_23 = arith.constant 0 : index
    %c0_24 = arith.constant 0 : index
    %22 = vector.load %arg1[%c2_21, %c0_22, %c0_23, %c0_24] : memref<4x9x9x8xbf16, #tpu.memory_space<vmem>>, vector<1x8x8x8xbf16>
    %23 = vector.shape_cast %22 : vector<1x8x8x8xbf16> to vector<8x8x8xbf16>
    %24 = vector.shape_cast %23 : vector<8x8x8xbf16> to vector<64x8xbf16>
    %c3 = arith.constant 3 : index
    %c0_25 = arith.constant 0 : index
    %c0_26 = arith.constant 0 : index
    %25 = vector.load %arg2[%c3, %c0_25, %c0_26] : memref<9x8x8xbf16, #tpu.memory_space<vmem>>, vector<1x8x8xbf16>
    %26 = vector.shape_cast %25 : vector<1x8x8xbf16> to vector<8x8xbf16>
    %cst_27 = arith.constant dense<0.000000e+00> : vector<64x8xf32>
    %27 = tpu.matmul %24, %26, %cst_27 {dimension_numbers = #tpu.dot_dimension_numbers<[1], [0], [0], [1], [0, 0, 1, 1], [], []>} : vector<64x8xbf16>, vector<8x8xbf16>, vector<64x8xf32> -> vector<64x8xf32>
    %28 = arith.addf %21, %27 : vector<64x8xf32>
    %c3_28 = arith.constant 3 : index
    %c0_29 = arith.constant 0 : index
    %c0_30 = arith.constant 0 : index
    %c0_31 = arith.constant 0 : index
    %29 = vector.load %arg1[%c3_28, %c0_29, %c0_30, %c0_31] : memref<4x9x9x8xbf16, #tpu.memory_space<vmem>>, vector<1x8x8x8xbf16>
    %30 = vector.shape_cast %29 : vector<1x8x8x8xbf16> to vector<8x8x8xbf16>
    %31 = vector.shape_cast %30 : vector<8x8x8xbf16> to vector<64x8xbf16>
    %c4 = arith.constant 4 : index
    %c0_32 = arith.constant 0 : index
    %c0_33 = arith.constant 0 : index
    %32 = vector.load %arg2[%c4, %c0_32, %c0_33] : memref<9x8x8xbf16, #tpu.memory_space<vmem>>, vector<1x8x8xbf16>
    %33 = vector.shape_cast %32 : vector<1x8x8xbf16> to vector<8x8xbf16>
    %cst_34 = arith.constant dense<0.000000e+00> : vector<64x8xf32>
    %34 = tpu.matmul %31, %33, %cst_34 {dimension_numbers = #tpu.dot_dimension_numbers<[1], [0], [0], [1], [0, 0, 1, 1], [], []>} : vector<64x8xbf16>, vector<8x8xbf16>, vector<64x8xf32> -> vector<64x8xf32>
    %35 = arith.addf %28, %34 : vector<64x8xf32>
    %c2_35 = arith.constant 2 : index
    %c0_36 = arith.constant 0 : index
    %c1_37 = arith.constant 1 : index
    %c0_38 = arith.constant 0 : index
    %36 = vector.load %arg1[%c2_35, %c0_36, %c1_37, %c0_38] : memref<4x9x9x8xbf16, #tpu.memory_space<vmem>>, vector<1x8x8x8xbf16>
    %37 = vector.shape_cast %36 : vector<1x8x8x8xbf16> to vector<8x8x8xbf16>
    %38 = vector.shape_cast %37 : vector<8x8x8xbf16> to vector<64x8xbf16>
    %c5 = arith.constant 5 : index
    %c0_39 = arith.constant 0 : index
    %c0_40 = arith.constant 0 : index
    %39 = vector.load %arg2[%c5, %c0_39, %c0_40] : memref<9x8x8xbf16, #tpu.memory_space<vmem>>, vector<1x8x8xbf16>
    %40 = vector.shape_cast %39 : vector<1x8x8xbf16> to vector<8x8xbf16>
    %cst_41 = arith.constant dense<0.000000e+00> : vector<64x8xf32>
    %41 = tpu.matmul %38, %40, %cst_41 {dimension_numbers = #tpu.dot_dimension_numbers<[1], [0], [0], [1], [0, 0, 1, 1], [], []>} : vector<64x8xbf16>, vector<8x8xbf16>, vector<64x8xf32> -> vector<64x8xf32>
    %42 = arith.addf %35, %41 : vector<64x8xf32>
    %c0_42 = arith.constant 0 : index
    %c1_43 = arith.constant 1 : index
    %c0_44 = arith.constant 0 : index
    %c0_45 = arith.constant 0 : index
    %43 = vector.load %arg1[%c0_42, %c1_43, %c0_44, %c0_45] : memref<4x9x9x8xbf16, #tpu.memory_space<vmem>>, vector<1x8x8x8xbf16>
    %44 = vector.shape_cast %43 : vector<1x8x8x8xbf16> to vector<8x8x8xbf16>
    %45 = vector.shape_cast %44 : vector<8x8x8xbf16> to vector<64x8xbf16>
    %c6 = arith.constant 6 : index
    %c0_46 = arith.constant 0 : index
    %c0_47 = arith.constant 0 : index
    %46 = vector.load %arg2[%c6, %c0_46, %c0_47] : memref<9x8x8xbf16, #tpu.memory_space<vmem>>, vector<1x8x8xbf16>
    %47 = vector.shape_cast %46 : vector<1x8x8xbf16> to vector<8x8xbf16>
    %cst_48 = arith.constant dense<0.000000e+00> : vector<64x8xf32>
    %48 = tpu.matmul %45, %47, %cst_48 {dimension_numbers = #tpu.dot_dimension_numbers<[1], [0], [0], [1], [0, 0, 1, 1], [], []>} : vector<64x8xbf16>, vector<8x8xbf16>, vector<64x8xf32> -> vector<64x8xf32>
    %49 = arith.addf %42, %48 : vector<64x8xf32>
    %c1_49 = arith.constant 1 : index
    %c1_50 = arith.constant 1 : index
    %c0_51 = arith.constant 0 : index
    %c0_52 = arith.constant 0 : index
    %50 = vector.load %arg1[%c1_49, %c1_50, %c0_51, %c0_52] : memref<4x9x9x8xbf16, #tpu.memory_space<vmem>>, vector<1x8x8x8xbf16>
    %51 = vector.shape_cast %50 : vector<1x8x8x8xbf16> to vector<8x8x8xbf16>
    %52 = vector.shape_cast %51 : vector<8x8x8xbf16> to vector<64x8xbf16>
    %c7 = arith.constant 7 : index
    %c0_53 = arith.constant 0 : index
    %c0_54 = arith.constant 0 : index
    %53 = vector.load %arg2[%c7, %c0_53, %c0_54] : memref<9x8x8xbf16, #tpu.memory_space<vmem>>, vector<1x8x8xbf16>
    %54 = vector.shape_cast %53 : vector<1x8x8xbf16> to vector<8x8xbf16>
    %cst_55 = arith.constant dense<0.000000e+00> : vector<64x8xf32>
    %55 = tpu.matmul %52, %54, %cst_55 {dimension_numbers = #tpu.dot_dimension_numbers<[1], [0], [0], [1], [0, 0, 1, 1], [], []>} : vector<64x8xbf16>, vector<8x8xbf16>, vector<64x8xf32> -> vector<64x8xf32>
    %56 = arith.addf %49, %55 : vector<64x8xf32>
    %c0_56 = arith.constant 0 : index
    %c1_57 = arith.constant 1 : index
    %c1_58 = arith.constant 1 : index
    %c0_59 = arith.constant 0 : index
    %57 = vector.load %arg1[%c0_56, %c1_57, %c1_58, %c0_59] : memref<4x9x9x8xbf16, #tpu.memory_space<vmem>>, vector<1x8x8x8xbf16>
    %58 = vector.shape_cast %57 : vector<1x8x8x8xbf16> to vector<8x8x8xbf16>
    %59 = vector.shape_cast %58 : vector<8x8x8xbf16> to vector<64x8xbf16>
    %c8 = arith.constant 8 : index
    %c0_60 = arith.constant 0 : index
    %c0_61 = arith.constant 0 : index
    %60 = vector.load %arg2[%c8, %c0_60, %c0_61] : memref<9x8x8xbf16, #tpu.memory_space<vmem>>, vector<1x8x8xbf16>
    %61 = vector.shape_cast %60 : vector<1x8x8xbf16> to vector<8x8xbf16>
    %cst_62 = arith.constant dense<0.000000e+00> : vector<64x8xf32>
    %62 = tpu.matmul %59, %61, %cst_62 {dimension_numbers = #tpu.dot_dimension_numbers<[1], [0], [0], [1], [0, 0, 1, 1], [], []>} : vector<64x8xbf16>, vector<8x8xbf16>, vector<64x8xf32> -> vector<64x8xf32>
    %63 = arith.addf %56, %62 : vector<64x8xf32>
    %c0_63 = arith.constant 0 : index
    %c0_64 = arith.constant 0 : index
    %64 = vector.load %arg3[%c0_63, %c0_64] : memref<2x8xf32, #tpu.memory_space<vmem>>, vector<1x8xf32>
    %c1_65 = arith.constant 1 : index
    %c0_66 = arith.constant 0 : index
    %65 = vector.load %arg3[%c1_65, %c0_66] : memref<2x8xf32, #tpu.memory_space<vmem>>, vector<1x8xf32>
    %66 = vector.broadcast %64 : vector<1x8xf32> to vector<64x8xf32>
    %67 = arith.addf %63, %66 : vector<64x8xf32>
    %cst_67 = arith.constant 0.000000e+00 : f32
    %68 = vector.broadcast %cst_67 : f32 to vector<64x8xf32>
    %69 = arith.cmpf oge, %67, %68 : vector<64x8xf32>
    %70 = vector.broadcast %65 : vector<1x8xf32> to vector<64x8xf32>
    %71 = arith.mulf %67, %70 : vector<64x8xf32>
    %72 = arith.select %69, %67, %71 : vector<64x8xi1>, vector<64x8xf32>
    %73 = vector.shape_cast %72 : vector<64x8xf32> to vector<8x8x8xf32>
    %74 = arith.truncf %73 : vector<8x8x8xf32> to vector<8x8x8xbf16>
    %c0_68 = arith.constant 0 : index
    %c0_69 = arith.constant 0 : index
    %c0_70 = arith.constant 0 : index
    %c0_71 = arith.constant 0 : index
    %75 = vector.load %arg4[%c0_68, %c0_69, %c0_70, %c0_71] : memref<1x8x8x8xbf16, #tpu.memory_space<vmem>>, vector<1x8x8x8xbf16>
    %76 = vector.shape_cast %75 : vector<1x8x8x8xbf16> to vector<8x8x8xbf16>
    %77 = vector.shape_cast %74 : vector<8x8x8xbf16> to vector<1x8x8x8xbf16>
    tpu.vector_store %arg4[%c0_68, %c0_69, %c0_70, %c0_71], %77 {strides = array<i32>} : memref<1x8x8x8xbf16, #tpu.memory_space<vmem>>, vector<1x8x8x8xbf16>,
    return
  }
  func.func @transform_0(%arg0: i32) -> (i32, i32, i32, i32) {
    %c0_i32 = arith.constant 0 : i32
    %c0_i32_0 = arith.constant 0 : i32
    %c0_i32_1 = arith.constant 0 : i32
    %c0_i32_2 = arith.constant 0 : i32
    return %arg0, %c0_i32, %c0_i32_0, %c0_i32_1 : i32, i32, i32, i32
  }
  func.func @transform_1(%arg0: i32) -> (i32, i32, i32) {
    %c0_i32 = arith.constant 0 : i32
    %c0_i32_0 = arith.constant 0 : i32
    %c0_i32_1 = arith.constant 0 : i32
    %c0_i32_2 = arith.constant 0 : i32
    return %c0_i32, %c0_i32_0, %c0_i32_1 : i32, i32, i32
  }
  func.func @transform_2(%arg0: i32) -> (i32, i32) {
    %c0_i32 = arith.constant 0 : i32
    %c0_i32_0 = arith.constant 0 : i32
    %c0_i32_1 = arith.constant 0 : i32
    return %c0_i32, %c0_i32_0 : i32, i32
  }
  func.func @transform_3(%arg0: i32) -> (i32, i32, i32, i32) {
    %c0_i32 = arith.constant 0 : i32
    %c0_i32_0 = arith.constant 0 : i32
    %c0_i32_1 = arith.constant 0 : i32
    %c0_i32_2 = arith.constant 0 : i32
    return %arg0, %c0_i32, %c0_i32_0, %c0_i32_1 : i32, i32, i32, i32
  }
}

module attributes {stable_mosaic.version = 11 : i64} {
  func.func @_conv_tap_kernel(%arg0: i32, %arg1: memref<1x10x10x8xbf16, #tpu.memory_space<vmem>>, %arg2: memref<9x8x8xbf16, #tpu.memory_space<vmem>>, %arg3: memref<2x8xf32, #tpu.memory_space<vmem>>, %arg4: memref<1x8x8x8xbf16, #tpu.memory_space<vmem>>) attributes {dimension_semantics = [#tpu.dimension_semantics<parallel>], iteration_bounds = array<i64: 2>, scalar_prefetch = 0 : i64, scratch_operands = 0 : i64, tpu.core_type = #tpu.core_type<tc>, window_params = [{transform_indices = @transform_0, window_bounds = array<i64: 1, 10, 10, 8>}, {pipeline_mode = #tpu.pipeline_mode<synchronous>, transform_indices = @transform_1, window_bounds = array<i64: 9, 8, 8>}, {pipeline_mode = #tpu.pipeline_mode<synchronous>, transform_indices = @transform_2, window_bounds = array<i64: 2, 8>}, {transform_indices = @transform_3, window_bounds = array<i64: 1, 8, 8, 8>}]} {
    %cst = arith.constant 0.000000e+00 : f32
    %0 = vector.broadcast %cst : f32 to vector<64x8xf32>
    %c0 = arith.constant 0 : index
    %c0_0 = arith.constant 0 : index
    %c0_1 = arith.constant 0 : index
    %c0_2 = arith.constant 0 : index
    %1 = vector.load %arg1[%c0, %c0_0, %c0_1, %c0_2] : memref<1x10x10x8xbf16, #tpu.memory_space<vmem>>, vector<1x8x8x8xbf16>
    %2 = vector.shape_cast %1 : vector<1x8x8x8xbf16> to vector<8x8x8xbf16>
    %3 = vector.shape_cast %2 : vector<8x8x8xbf16> to vector<64x8xbf16>
    %c0_3 = arith.constant 0 : index
    %c0_4 = arith.constant 0 : index
    %c0_5 = arith.constant 0 : index
    %4 = vector.load %arg2[%c0_3, %c0_4, %c0_5] : memref<9x8x8xbf16, #tpu.memory_space<vmem>>, vector<1x8x8xbf16>
    %5 = vector.shape_cast %4 : vector<1x8x8xbf16> to vector<8x8xbf16>
    %cst_6 = arith.constant dense<0.000000e+00> : vector<64x8xf32>
    %6 = tpu.matmul %3, %5, %cst_6 {dimension_numbers = #tpu.dot_dimension_numbers<[1], [0], [0], [1], [0, 0, 1, 1], [], []>} : vector<64x8xbf16>, vector<8x8xbf16>, vector<64x8xf32> -> vector<64x8xf32>
    %7 = arith.addf %0, %6 : vector<64x8xf32>
    %c0_7 = arith.constant 0 : index
    %c0_8 = arith.constant 0 : index
    %c1 = arith.constant 1 : index
    %c0_9 = arith.constant 0 : index
    %8 = vector.load %arg1[%c0_7, %c0_8, %c1, %c0_9] : memref<1x10x10x8xbf16, #tpu.memory_space<vmem>>, vector<1x8x8x8xbf16>
    %9 = vector.shape_cast %8 : vector<1x8x8x8xbf16> to vector<8x8x8xbf16>
    %10 = vector.shape_cast %9 : vector<8x8x8xbf16> to vector<64x8xbf16>
    %c1_10 = arith.constant 1 : index
    %c0_11 = arith.constant 0 : index
    %c0_12 = arith.constant 0 : index
    %11 = vector.load %arg2[%c1_10, %c0_11, %c0_12] : memref<9x8x8xbf16, #tpu.memory_space<vmem>>, vector<1x8x8xbf16>
    %12 = vector.shape_cast %11 : vector<1x8x8xbf16> to vector<8x8xbf16>
    %cst_13 = arith.constant dense<0.000000e+00> : vector<64x8xf32>
    %13 = tpu.matmul %10, %12, %cst_13 {dimension_numbers = #tpu.dot_dimension_numbers<[1], [0], [0], [1], [0, 0, 1, 1], [], []>} : vector<64x8xbf16>, vector<8x8xbf16>, vector<64x8xf32> -> vector<64x8xf32>
    %14 = arith.addf %7, %13 : vector<64x8xf32>
    %c0_14 = arith.constant 0 : index
    %c0_15 = arith.constant 0 : index
    %c2 = arith.constant 2 : index
    %c0_16 = arith.constant 0 : index
    %15 = vector.load %arg1[%c0_14, %c0_15, %c2, %c0_16] : memref<1x10x10x8xbf16, #tpu.memory_space<vmem>>, vector<1x8x8x8xbf16>
    %16 = vector.shape_cast %15 : vector<1x8x8x8xbf16> to vector<8x8x8xbf16>
    %17 = vector.shape_cast %16 : vector<8x8x8xbf16> to vector<64x8xbf16>
    %c2_17 = arith.constant 2 : index
    %c0_18 = arith.constant 0 : index
    %c0_19 = arith.constant 0 : index
    %18 = vector.load %arg2[%c2_17, %c0_18, %c0_19] : memref<9x8x8xbf16, #tpu.memory_space<vmem>>, vector<1x8x8xbf16>
    %19 = vector.shape_cast %18 : vector<1x8x8xbf16> to vector<8x8xbf16>
    %cst_20 = arith.constant dense<0.000000e+00> : vector<64x8xf32>
    %20 = tpu.matmul %17, %19, %cst_20 {dimension_numbers = #tpu.dot_dimension_numbers<[1], [0], [0], [1], [0, 0, 1, 1], [], []>} : vector<64x8xbf16>, vector<8x8xbf16>, vector<64x8xf32> -> vector<64x8xf32>
    %21 = arith.addf %14, %20 : vector<64x8xf32>
    %c0_21 = arith.constant 0 : index
    %c1_22 = arith.constant 1 : index
    %c0_23 = arith.constant 0 : index
    %c0_24 = arith.constant 0 : index
    %22 = vector.load %arg1[%c0_21, %c1_22, %c0_23, %c0_24] : memref<1x10x10x8xbf16, #tpu.memory_space<vmem>>, vector<1x8x8x8xbf16>
    %23 = vector.shape_cast %22 : vector<1x8x8x8xbf16> to vector<8x8x8xbf16>
    %24 = vector.shape_cast %23 : vector<8x8x8xbf16> to vector<64x8xbf16>
    %c3 = arith.constant 3 : index
    %c0_25 = arith.constant 0 : index
    %c0_26 = arith.constant 0 : index
    %25 = vector.load %arg2[%c3, %c0_25, %c0_26] : memref<9x8x8xbf16, #tpu.memory_space<vmem>>, vector<1x8x8xbf16>
    %26 = vector.shape_cast %25 : vector<1x8x8xbf16> to vector<8x8xbf16>
    %cst_27 = arith.constant dense<0.000000e+00> : vector<64x8xf32>
    %27 = tpu.matmul %24, %26, %cst_27 {dimension_numbers = #tpu.dot_dimension_numbers<[1], [0], [0], [1], [0, 0, 1, 1], [], []>} : vector<64x8xbf16>, vector<8x8xbf16>, vector<64x8xf32> -> vector<64x8xf32>
    %28 = arith.addf %21, %27 : vector<64x8xf32>
    %c0_28 = arith.constant 0 : index
    %c1_29 = arith.constant 1 : index
    %c1_30 = arith.constant 1 : index
    %c0_31 = arith.constant 0 : index
    %29 = vector.load %arg1[%c0_28, %c1_29, %c1_30, %c0_31] : memref<1x10x10x8xbf16, #tpu.memory_space<vmem>>, vector<1x8x8x8xbf16>
    %30 = vector.shape_cast %29 : vector<1x8x8x8xbf16> to vector<8x8x8xbf16>
    %31 = vector.shape_cast %30 : vector<8x8x8xbf16> to vector<64x8xbf16>
    %c4 = arith.constant 4 : index
    %c0_32 = arith.constant 0 : index
    %c0_33 = arith.constant 0 : index
    %32 = vector.load %arg2[%c4, %c0_32, %c0_33] : memref<9x8x8xbf16, #tpu.memory_space<vmem>>, vector<1x8x8xbf16>
    %33 = vector.shape_cast %32 : vector<1x8x8xbf16> to vector<8x8xbf16>
    %cst_34 = arith.constant dense<0.000000e+00> : vector<64x8xf32>
    %34 = tpu.matmul %31, %33, %cst_34 {dimension_numbers = #tpu.dot_dimension_numbers<[1], [0], [0], [1], [0, 0, 1, 1], [], []>} : vector<64x8xbf16>, vector<8x8xbf16>, vector<64x8xf32> -> vector<64x8xf32>
    %35 = arith.addf %28, %34 : vector<64x8xf32>
    %c0_35 = arith.constant 0 : index
    %c1_36 = arith.constant 1 : index
    %c2_37 = arith.constant 2 : index
    %c0_38 = arith.constant 0 : index
    %36 = vector.load %arg1[%c0_35, %c1_36, %c2_37, %c0_38] : memref<1x10x10x8xbf16, #tpu.memory_space<vmem>>, vector<1x8x8x8xbf16>
    %37 = vector.shape_cast %36 : vector<1x8x8x8xbf16> to vector<8x8x8xbf16>
    %38 = vector.shape_cast %37 : vector<8x8x8xbf16> to vector<64x8xbf16>
    %c5 = arith.constant 5 : index
    %c0_39 = arith.constant 0 : index
    %c0_40 = arith.constant 0 : index
    %39 = vector.load %arg2[%c5, %c0_39, %c0_40] : memref<9x8x8xbf16, #tpu.memory_space<vmem>>, vector<1x8x8xbf16>
    %40 = vector.shape_cast %39 : vector<1x8x8xbf16> to vector<8x8xbf16>
    %cst_41 = arith.constant dense<0.000000e+00> : vector<64x8xf32>
    %41 = tpu.matmul %38, %40, %cst_41 {dimension_numbers = #tpu.dot_dimension_numbers<[1], [0], [0], [1], [0, 0, 1, 1], [], []>} : vector<64x8xbf16>, vector<8x8xbf16>, vector<64x8xf32> -> vector<64x8xf32>
    %42 = arith.addf %35, %41 : vector<64x8xf32>
    %c0_42 = arith.constant 0 : index
    %c2_43 = arith.constant 2 : index
    %c0_44 = arith.constant 0 : index
    %c0_45 = arith.constant 0 : index
    %43 = vector.load %arg1[%c0_42, %c2_43, %c0_44, %c0_45] : memref<1x10x10x8xbf16, #tpu.memory_space<vmem>>, vector<1x8x8x8xbf16>
    %44 = vector.shape_cast %43 : vector<1x8x8x8xbf16> to vector<8x8x8xbf16>
    %45 = vector.shape_cast %44 : vector<8x8x8xbf16> to vector<64x8xbf16>
    %c6 = arith.constant 6 : index
    %c0_46 = arith.constant 0 : index
    %c0_47 = arith.constant 0 : index
    %46 = vector.load %arg2[%c6, %c0_46, %c0_47] : memref<9x8x8xbf16, #tpu.memory_space<vmem>>, vector<1x8x8xbf16>
    %47 = vector.shape_cast %46 : vector<1x8x8xbf16> to vector<8x8xbf16>
    %cst_48 = arith.constant dense<0.000000e+00> : vector<64x8xf32>
    %48 = tpu.matmul %45, %47, %cst_48 {dimension_numbers = #tpu.dot_dimension_numbers<[1], [0], [0], [1], [0, 0, 1, 1], [], []>} : vector<64x8xbf16>, vector<8x8xbf16>, vector<64x8xf32> -> vector<64x8xf32>
    %49 = arith.addf %42, %48 : vector<64x8xf32>
    %c0_49 = arith.constant 0 : index
    %c2_50 = arith.constant 2 : index
    %c1_51 = arith.constant 1 : index
    %c0_52 = arith.constant 0 : index
    %50 = vector.load %arg1[%c0_49, %c2_50, %c1_51, %c0_52] : memref<1x10x10x8xbf16, #tpu.memory_space<vmem>>, vector<1x8x8x8xbf16>
    %51 = vector.shape_cast %50 : vector<1x8x8x8xbf16> to vector<8x8x8xbf16>
    %52 = vector.shape_cast %51 : vector<8x8x8xbf16> to vector<64x8xbf16>
    %c7 = arith.constant 7 : index
    %c0_53 = arith.constant 0 : index
    %c0_54 = arith.constant 0 : index
    %53 = vector.load %arg2[%c7, %c0_53, %c0_54] : memref<9x8x8xbf16, #tpu.memory_space<vmem>>, vector<1x8x8xbf16>
    %54 = vector.shape_cast %53 : vector<1x8x8xbf16> to vector<8x8xbf16>
    %cst_55 = arith.constant dense<0.000000e+00> : vector<64x8xf32>
    %55 = tpu.matmul %52, %54, %cst_55 {dimension_numbers = #tpu.dot_dimension_numbers<[1], [0], [0], [1], [0, 0, 1, 1], [], []>} : vector<64x8xbf16>, vector<8x8xbf16>, vector<64x8xf32> -> vector<64x8xf32>
    %56 = arith.addf %49, %55 : vector<64x8xf32>
    %c0_56 = arith.constant 0 : index
    %c2_57 = arith.constant 2 : index
    %c2_58 = arith.constant 2 : index
    %c0_59 = arith.constant 0 : index
    %57 = vector.load %arg1[%c0_56, %c2_57, %c2_58, %c0_59] : memref<1x10x10x8xbf16, #tpu.memory_space<vmem>>, vector<1x8x8x8xbf16>
    %58 = vector.shape_cast %57 : vector<1x8x8x8xbf16> to vector<8x8x8xbf16>
    %59 = vector.shape_cast %58 : vector<8x8x8xbf16> to vector<64x8xbf16>
    %c8 = arith.constant 8 : index
    %c0_60 = arith.constant 0 : index
    %c0_61 = arith.constant 0 : index
    %60 = vector.load %arg2[%c8, %c0_60, %c0_61] : memref<9x8x8xbf16, #tpu.memory_space<vmem>>, vector<1x8x8xbf16>
    %61 = vector.shape_cast %60 : vector<1x8x8xbf16> to vector<8x8xbf16>
    %cst_62 = arith.constant dense<0.000000e+00> : vector<64x8xf32>
    %62 = tpu.matmul %59, %61, %cst_62 {dimension_numbers = #tpu.dot_dimension_numbers<[1], [0], [0], [1], [0, 0, 1, 1], [], []>} : vector<64x8xbf16>, vector<8x8xbf16>, vector<64x8xf32> -> vector<64x8xf32>
    %63 = arith.addf %56, %62 : vector<64x8xf32>
    %c0_63 = arith.constant 0 : index
    %c0_64 = arith.constant 0 : index
    %64 = vector.load %arg3[%c0_63, %c0_64] : memref<2x8xf32, #tpu.memory_space<vmem>>, vector<1x8xf32>
    %c1_65 = arith.constant 1 : index
    %c0_66 = arith.constant 0 : index
    %65 = vector.load %arg3[%c1_65, %c0_66] : memref<2x8xf32, #tpu.memory_space<vmem>>, vector<1x8xf32>
    %66 = vector.broadcast %64 : vector<1x8xf32> to vector<64x8xf32>
    %67 = arith.addf %63, %66 : vector<64x8xf32>
    %cst_67 = arith.constant 0.000000e+00 : f32
    %68 = vector.broadcast %cst_67 : f32 to vector<64x8xf32>
    %69 = arith.cmpf oge, %67, %68 : vector<64x8xf32>
    %70 = vector.broadcast %65 : vector<1x8xf32> to vector<64x8xf32>
    %71 = arith.mulf %67, %70 : vector<64x8xf32>
    %72 = arith.select %69, %67, %71 : vector<64x8xi1>, vector<64x8xf32>
    %73 = vector.shape_cast %72 : vector<64x8xf32> to vector<8x8x8xf32>
    %74 = arith.truncf %73 : vector<8x8x8xf32> to vector<8x8x8xbf16>
    %c0_68 = arith.constant 0 : index
    %c0_69 = arith.constant 0 : index
    %c0_70 = arith.constant 0 : index
    %c0_71 = arith.constant 0 : index
    %75 = vector.load %arg4[%c0_68, %c0_69, %c0_70, %c0_71] : memref<1x8x8x8xbf16, #tpu.memory_space<vmem>>, vector<1x8x8x8xbf16>
    %76 = vector.shape_cast %75 : vector<1x8x8x8xbf16> to vector<8x8x8xbf16>
    %77 = vector.shape_cast %74 : vector<8x8x8xbf16> to vector<1x8x8x8xbf16>
    tpu.vector_store %arg4[%c0_68, %c0_69, %c0_70, %c0_71], %77 {strides = array<i32>} : memref<1x8x8x8xbf16, #tpu.memory_space<vmem>>, vector<1x8x8x8xbf16>,
    return
  }
  func.func @transform_0(%arg0: i32) -> (i32, i32, i32, i32) {
    %c0_i32 = arith.constant 0 : i32
    %c0_i32_0 = arith.constant 0 : i32
    %c0_i32_1 = arith.constant 0 : i32
    %c0_i32_2 = arith.constant 0 : i32
    return %arg0, %c0_i32, %c0_i32_0, %c0_i32_1 : i32, i32, i32, i32
  }
  func.func @transform_1(%arg0: i32) -> (i32, i32, i32) {
    %c0_i32 = arith.constant 0 : i32
    %c0_i32_0 = arith.constant 0 : i32
    %c0_i32_1 = arith.constant 0 : i32
    %c0_i32_2 = arith.constant 0 : i32
    return %c0_i32, %c0_i32_0, %c0_i32_1 : i32, i32, i32
  }
  func.func @transform_2(%arg0: i32) -> (i32, i32) {
    %c0_i32 = arith.constant 0 : i32
    %c0_i32_0 = arith.constant 0 : i32
    %c0_i32_1 = arith.constant 0 : i32
    return %c0_i32, %c0_i32_0 : i32, i32
  }
  func.func @transform_3(%arg0: i32) -> (i32, i32, i32, i32) {
    %c0_i32 = arith.constant 0 : i32
    %c0_i32_0 = arith.constant 0 : i32
    %c0_i32_1 = arith.constant 0 : i32
    %c0_i32_2 = arith.constant 0 : i32
    return %arg0, %c0_i32, %c0_i32_0, %c0_i32_1 : i32, i32, i32, i32
  }
}

module attributes {stable_mosaic.version = 11 : i64} {
  func.func @_conv_tap_kernel(%arg0: i32, %arg1: memref<1x8x8x8xbf16, #tpu.memory_space<vmem>>, %arg2: memref<1x8x8xbf16, #tpu.memory_space<vmem>>, %arg3: memref<2x8xf32, #tpu.memory_space<vmem>>, %arg4: memref<1x8x8x8xbf16, #tpu.memory_space<vmem>>) attributes {dimension_semantics = [#tpu.dimension_semantics<parallel>], iteration_bounds = array<i64: 2>, scalar_prefetch = 0 : i64, scratch_operands = 0 : i64, tpu.core_type = #tpu.core_type<tc>, window_params = [{transform_indices = @transform_0, window_bounds = array<i64: 1, 8, 8, 8>}, {pipeline_mode = #tpu.pipeline_mode<synchronous>, transform_indices = @transform_1, window_bounds = array<i64: 1, 8, 8>}, {pipeline_mode = #tpu.pipeline_mode<synchronous>, transform_indices = @transform_2, window_bounds = array<i64: 2, 8>}, {transform_indices = @transform_3, window_bounds = array<i64: 1, 8, 8, 8>}]} {
    %cst = arith.constant 0.000000e+00 : f32
    %0 = vector.broadcast %cst : f32 to vector<64x8xf32>
    %c0 = arith.constant 0 : index
    %c0_0 = arith.constant 0 : index
    %c0_1 = arith.constant 0 : index
    %c0_2 = arith.constant 0 : index
    %1 = vector.load %arg1[%c0, %c0_0, %c0_1, %c0_2] : memref<1x8x8x8xbf16, #tpu.memory_space<vmem>>, vector<1x8x8x8xbf16>
    %2 = vector.shape_cast %1 : vector<1x8x8x8xbf16> to vector<8x8x8xbf16>
    %3 = vector.shape_cast %2 : vector<8x8x8xbf16> to vector<64x8xbf16>
    %c0_3 = arith.constant 0 : index
    %c0_4 = arith.constant 0 : index
    %c0_5 = arith.constant 0 : index
    %4 = vector.load %arg2[%c0_3, %c0_4, %c0_5] : memref<1x8x8xbf16, #tpu.memory_space<vmem>>, vector<1x8x8xbf16>
    %5 = vector.shape_cast %4 : vector<1x8x8xbf16> to vector<8x8xbf16>
    %cst_6 = arith.constant dense<0.000000e+00> : vector<64x8xf32>
    %6 = tpu.matmul %3, %5, %cst_6 {dimension_numbers = #tpu.dot_dimension_numbers<[1], [0], [0], [1], [0, 0, 1, 1], [], []>} : vector<64x8xbf16>, vector<8x8xbf16>, vector<64x8xf32> -> vector<64x8xf32>
    %7 = arith.addf %0, %6 : vector<64x8xf32>
    %c0_7 = arith.constant 0 : index
    %c0_8 = arith.constant 0 : index
    %8 = vector.load %arg3[%c0_7, %c0_8] : memref<2x8xf32, #tpu.memory_space<vmem>>, vector<1x8xf32>
    %c1 = arith.constant 1 : index
    %c0_9 = arith.constant 0 : index
    %9 = vector.load %arg3[%c1, %c0_9] : memref<2x8xf32, #tpu.memory_space<vmem>>, vector<1x8xf32>
    %10 = vector.broadcast %8 : vector<1x8xf32> to vector<64x8xf32>
    %11 = arith.addf %7, %10 : vector<64x8xf32>
    %cst_10 = arith.constant 0.000000e+00 : f32
    %12 = vector.broadcast %cst_10 : f32 to vector<64x8xf32>
    %13 = arith.cmpf oge, %11, %12 : vector<64x8xf32>
    %14 = vector.broadcast %9 : vector<1x8xf32> to vector<64x8xf32>
    %15 = arith.mulf %11, %14 : vector<64x8xf32>
    %16 = arith.select %13, %11, %15 : vector<64x8xi1>, vector<64x8xf32>
    %17 = vector.shape_cast %16 : vector<64x8xf32> to vector<8x8x8xf32>
    %18 = arith.truncf %17 : vector<8x8x8xf32> to vector<8x8x8xbf16>
    %c0_11 = arith.constant 0 : index
    %c0_12 = arith.constant 0 : index
    %c0_13 = arith.constant 0 : index
    %c0_14 = arith.constant 0 : index
    %19 = vector.load %arg4[%c0_11, %c0_12, %c0_13, %c0_14] : memref<1x8x8x8xbf16, #tpu.memory_space<vmem>>, vector<1x8x8x8xbf16>
    %20 = vector.shape_cast %19 : vector<1x8x8x8xbf16> to vector<8x8x8xbf16>
    %21 = vector.shape_cast %18 : vector<8x8x8xbf16> to vector<1x8x8x8xbf16>
    tpu.vector_store %arg4[%c0_11, %c0_12, %c0_13, %c0_14], %21 {strides = array<i32>} : memref<1x8x8x8xbf16, #tpu.memory_space<vmem>>, vector<1x8x8x8xbf16>,
    return
  }
  func.func @transform_0(%arg0: i32) -> (i32, i32, i32, i32) {
    %c0_i32 = arith.constant 0 : i32
    %c0_i32_0 = arith.constant 0 : i32
    %c0_i32_1 = arith.constant 0 : i32
    %c0_i32_2 = arith.constant 0 : i32
    return %arg0, %c0_i32, %c0_i32_0, %c0_i32_1 : i32, i32, i32, i32
  }
  func.func @transform_1(%arg0: i32) -> (i32, i32, i32) {
    %c0_i32 = arith.constant 0 : i32
    %c0_i32_0 = arith.constant 0 : i32
    %c0_i32_1 = arith.constant 0 : i32
    %c0_i32_2 = arith.constant 0 : i32
    return %c0_i32, %c0_i32_0, %c0_i32_1 : i32, i32, i32
  }
  func.func @transform_2(%arg0: i32) -> (i32, i32) {
    %c0_i32 = arith.constant 0 : i32
    %c0_i32_0 = arith.constant 0 : i32
    %c0_i32_1 = arith.constant 0 : i32
    return %c0_i32, %c0_i32_0 : i32, i32
  }
  func.func @transform_3(%arg0: i32) -> (i32, i32, i32, i32) {
    %c0_i32 = arith.constant 0 : i32
    %c0_i32_0 = arith.constant 0 : i32
    %c0_i32_1 = arith.constant 0 : i32
    %c0_i32_2 = arith.constant 0 : i32
    return %arg0, %c0_i32, %c0_i32_0, %c0_i32_1 : i32, i32, i32, i32
  }
}

module attributes {stable_mosaic.version = 11 : i64} {
  func.func @_conv_tap_kernel(%arg0: i32, %arg1: memref<1x8x8x8xbf16, #tpu.memory_space<vmem>>, %arg2: memref<1x8x16xbf16, #tpu.memory_space<vmem>>, %arg3: memref<2x16xf32, #tpu.memory_space<vmem>>, %arg4: memref<1x8x8x16xf32, #tpu.memory_space<vmem>>) attributes {dimension_semantics = [#tpu.dimension_semantics<parallel>], iteration_bounds = array<i64: 2>, scalar_prefetch = 0 : i64, scratch_operands = 0 : i64, tpu.core_type = #tpu.core_type<tc>, window_params = [{transform_indices = @transform_0, window_bounds = array<i64: 1, 8, 8, 8>}, {pipeline_mode = #tpu.pipeline_mode<synchronous>, transform_indices = @transform_1, window_bounds = array<i64: 1, 8, 16>}, {pipeline_mode = #tpu.pipeline_mode<synchronous>, transform_indices = @transform_2, window_bounds = array<i64: 2, 16>}, {transform_indices = @transform_3, window_bounds = array<i64: 1, 8, 8, 16>}]} {
    %cst = arith.constant 0.000000e+00 : f32
    %0 = vector.broadcast %cst : f32 to vector<64x16xf32>
    %c0 = arith.constant 0 : index
    %c0_0 = arith.constant 0 : index
    %c0_1 = arith.constant 0 : index
    %c0_2 = arith.constant 0 : index
    %1 = vector.load %arg1[%c0, %c0_0, %c0_1, %c0_2] : memref<1x8x8x8xbf16, #tpu.memory_space<vmem>>, vector<1x8x8x8xbf16>
    %2 = vector.shape_cast %1 : vector<1x8x8x8xbf16> to vector<8x8x8xbf16>
    %3 = vector.shape_cast %2 : vector<8x8x8xbf16> to vector<64x8xbf16>
    %c0_3 = arith.constant 0 : index
    %c0_4 = arith.constant 0 : index
    %c0_5 = arith.constant 0 : index
    %4 = vector.load %arg2[%c0_3, %c0_4, %c0_5] : memref<1x8x16xbf16, #tpu.memory_space<vmem>>, vector<1x8x16xbf16>
    %5 = vector.shape_cast %4 : vector<1x8x16xbf16> to vector<8x16xbf16>
    %cst_6 = arith.constant dense<0.000000e+00> : vector<64x16xf32>
    %6 = tpu.matmul %3, %5, %cst_6 {dimension_numbers = #tpu.dot_dimension_numbers<[1], [0], [0], [1], [0, 0, 1, 1], [], []>} : vector<64x8xbf16>, vector<8x16xbf16>, vector<64x16xf32> -> vector<64x16xf32>
    %7 = arith.addf %0, %6 : vector<64x16xf32>
    %c0_7 = arith.constant 0 : index
    %c0_8 = arith.constant 0 : index
    %8 = vector.load %arg3[%c0_7, %c0_8] : memref<2x16xf32, #tpu.memory_space<vmem>>, vector<1x16xf32>
    %c1 = arith.constant 1 : index
    %c0_9 = arith.constant 0 : index
    %9 = vector.load %arg3[%c1, %c0_9] : memref<2x16xf32, #tpu.memory_space<vmem>>, vector<1x16xf32>
    %10 = vector.broadcast %8 : vector<1x16xf32> to vector<64x16xf32>
    %11 = arith.addf %7, %10 : vector<64x16xf32>
    %cst_10 = arith.constant 0.000000e+00 : f32
    %12 = vector.broadcast %cst_10 : f32 to vector<64x16xf32>
    %13 = arith.cmpf oge, %11, %12 : vector<64x16xf32>
    %14 = vector.broadcast %9 : vector<1x16xf32> to vector<64x16xf32>
    %15 = arith.mulf %11, %14 : vector<64x16xf32>
    %16 = arith.select %13, %11, %15 : vector<64x16xi1>, vector<64x16xf32>
    %17 = vector.shape_cast %16 : vector<64x16xf32> to vector<8x8x16xf32>
    %c0_11 = arith.constant 0 : index
    %c0_12 = arith.constant 0 : index
    %c0_13 = arith.constant 0 : index
    %c0_14 = arith.constant 0 : index
    %18 = vector.load %arg4[%c0_11, %c0_12, %c0_13, %c0_14] : memref<1x8x8x16xf32, #tpu.memory_space<vmem>>, vector<1x8x8x16xf32>
    %19 = vector.shape_cast %18 : vector<1x8x8x16xf32> to vector<8x8x16xf32>
    %20 = vector.shape_cast %17 : vector<8x8x16xf32> to vector<1x8x8x16xf32>
    tpu.vector_store %arg4[%c0_11, %c0_12, %c0_13, %c0_14], %20 {strides = array<i32>} : memref<1x8x8x16xf32, #tpu.memory_space<vmem>>, vector<1x8x8x16xf32>,
    return
  }
  func.func @transform_0(%arg0: i32) -> (i32, i32, i32, i32) {
    %c0_i32 = arith.constant 0 : i32
    %c0_i32_0 = arith.constant 0 : i32
    %c0_i32_1 = arith.constant 0 : i32
    %c0_i32_2 = arith.constant 0 : i32
    return %arg0, %c0_i32, %c0_i32_0, %c0_i32_1 : i32, i32, i32, i32
  }
  func.func @transform_1(%arg0: i32) -> (i32, i32, i32) {
    %c0_i32 = arith.constant 0 : i32
    %c0_i32_0 = arith.constant 0 : i32
    %c0_i32_1 = arith.constant 0 : i32
    %c0_i32_2 = arith.constant 0 : i32
    return %c0_i32, %c0_i32_0, %c0_i32_1 : i32, i32, i32
  }
  func.func @transform_2(%arg0: i32) -> (i32, i32) {
    %c0_i32 = arith.constant 0 : i32
    %c0_i32_0 = arith.constant 0 : i32
    %c0_i32_1 = arith.constant 0 : i32
    return %c0_i32, %c0_i32_0 : i32, i32
  }
  func.func @transform_3(%arg0: i32) -> (i32, i32, i32, i32) {
    %c0_i32 = arith.constant 0 : i32
    %c0_i32_0 = arith.constant 0 : i32
    %c0_i32_1 = arith.constant 0 : i32
    %c0_i32_2 = arith.constant 0 : i32
    return %arg0, %c0_i32, %c0_i32_0, %c0_i32_1 : i32, i32, i32, i32
  }
}

</mosaic_0001>

<llo_original>
// kernel: conv2n_forward.6
$region0: #{conv2n_forward.6}
  #allocation0 [shape = 'u32[]', space=smem, size = 0x4, offset = 0x4, fixed_abs, tag = 'smem constant byte address 0x4 - core index']
  #allocation1 [shape = 'u32[144,128]{1,0:T(1,128)}', space=vmem, size = 0x12000, scoped, tag = 'internal scratch']
  %s0 = inlined_call_operand.vmem [shape: bf16[2,8,8,8], index: 0, kind: input, shape index: {}]
  %s1 = inlined_call_operand.vmem [shape: bf16[1,8,8], index: 1, kind: input, shape index: {}]
  %s2 = inlined_call_operand.vmem [shape: f32[2,8], index: 2, kind: input, shape index: {}]
  %s3 = inlined_call_operand.vmem [shape: bf16[2,8,8,8], index: 3, kind: output, shape index: {}]
  %s4 = sld [smem:[#allocation0]]
  $region45: #{conv2n_forward.6} parent=0
    _
  %s6 = ssub.s32 1, %s4
  %s7 = scalar_select 0, %s6, %s4
  loop: start=0, step=1, limit=4
  $region2: #{conv2n_forward.6} parent=0 // loop_pre_header
    _
  $region3: #{conv2n_forward.6} parent=0 // loop_header
    %s9 = sphi 0, %s13
    %p10 = scmp.ge.s32.totalorder %s9, 4
    %s19 = sphi 0, %s21
    %s22 = sphi 0, %s19
    %s23 = sphi 0, %s22
    %s39 = sphi 0, %s23
    %s43 = sphi 0, %s43
    %s45 = sphi 0, %s43
    %s46 = sphi 0, %s45
    %s60 = sphi 0, %s46
    %s64 = sphi 0, %s64
    %s66 = sphi 0, %s64
    %s67 = sphi 0, %s66
    %s81 = sphi 0, %s67
    %s87 = sphi 0, %s89
    %s90 = sphi 0, %s87
    %s91 = sphi 0, %s90
    %s107 = sphi 0, %s91
  $region4: #{conv2n_forward.6} parent=0 // loop_header_branch
    %12 = sbr.rel (%p10) target = $region8
  $region5: #{conv2n_forward.6} parent=0 // loop_body
    %s14 = ssub.s32 %s9, 1
    %s15 = ssub.s32 %s9, 2
    %s16 = sadd.s32 %s9, 1
    %s17 = ssub.s32 %s9, %s16
    %p18 = scmp.eq.s32.totalorder %s17, 0
    %s20 = sadd.s32 %s19, 1
    %s21 = scalar_select %p18, %s19, %s20
    %p24 = pneg %p18
    %p25 = scmp.eq.s32.totalorder %s9, 1
    %p26 = por %p24, %p25
    %p27 = scmp.ne.s32.totalorder %s19, %s22
    %p28 = scmp.eq.s32.totalorder %s9, 0
    %p29 = por %p27, %p28
    %p30 = scmp.ne.s32.totalorder %s19, %s22
    %p31 = scmp.eq.s32.totalorder %s14, 1
    %p32 = por %p30, %p31
    %p33 = scmp.ne.s32.totalorder %s22, %s23
    %p34 = scmp.eq.s32.totalorder %s14, 0
    %p35 = por %p33, %p34
    %p36 = scmp.ne.s32.totalorder %s22, %s23
    %p37 = scmp.eq.s32.totalorder %s15, 1
    %p38 = por %p36, %p37
    %p40 = scmp.ne.s32.totalorder %s23, %s39
    %p41 = scmp.eq.s32.totalorder %s15, 0
    %p42 = por %p40, %p41
    %s44 = sadd.s32 %s43, 1
    %p47 = scmp.eq.s32.totalorder %s9, 1
    %p48 = scmp.ne.s32.totalorder %s43, %s45
    %p49 = scmp.eq.s32.totalorder %s9, 0
    %p50 = por %p48, %p49
    %p51 = scmp.ne.s32.totalorder %s43, %s45
    %p52 = scmp.eq.s32.totalorder %s14, 1
    %p53 = por %p51, %p52
    %p54 = scmp.ne.s32.totalorder %s45, %s46
    %p55 = scmp.eq.s32.totalorder %s14, 0
    %p56 = por %p54, %p55
    %p57 = scmp.ne.s32.totalorder %s45, %s46
    %p58 = scmp.eq.s32.totalorder %s15, 1
    %p59 = por %p57, %p58
    %p61 = scmp.ne.s32.totalorder %s46, %s60
    %p62 = scmp.eq.s32.totalorder %s15, 0
    %p63 = por %p61, %p62
    %s65 = sadd.s32 %s64, 1
    %p68 = scmp.eq.s32.totalorder %s9, 1
    %p69 = scmp.ne.s32.totalorder %s64, %s66
    %p70 = scmp.eq.s32.totalorder %s9, 0
    %p71 = por %p69, %p70
    %p72 = scmp.ne.s32.totalorder %s64, %s66
    %p73 = scmp.eq.s32.totalorder %s14, 1
    %p74 = por %p72, %p73
    %p75 = scmp.ne.s32.totalorder %s66, %s67
    %p76 = scmp.eq.s32.totalorder %s14, 0
    %p77 = por %p75, %p76
    %p78 = scmp.ne.s32.totalorder %s66, %s67
    %p79 = scmp.eq.s32.totalorder %s15, 1
    %p80 = por %p78, %p79
    %p82 = scmp.ne.s32.totalorder %s67, %s81
    %p83 = scmp.eq.s32.totalorder %s15, 0
    %p84 = por %p82, %p83
    %s85 = ssub.s32 %s9, %s16
    %p86 = scmp.eq.s32.totalorder %s85, 0
    %s88 = sadd.s32 %s87, 1
    %s89 = scalar_select %p86, %s87, %s88
    %p92 = pneg %p86
    %p93 = scmp.eq.s32.totalorder %s9, 1
    %p94 = por %p92, %p93
    %p95 = scmp.ne.s32.totalorder %s87, %s90
    %p96 = scmp.eq.s32.totalorder %s9, 0
    %p97 = por %p95, %p96
    %p98 = scmp.ne.s32.totalorder %s87, %s90
    %p99 = scmp.eq.s32.totalorder %s14, 1
    %p100 = por %p98, %p99
    %p101 = scmp.ne.s32.totalorder %s90, %s91
    %p102 = scmp.eq.s32.totalorder %s14, 0
    %p103 = por %p101, %p102
    %p104 = scmp.ne.s32.totalorder %s90, %s91
    %p105 = scmp.eq.s32.totalorder %s15, 1
    %p106 = por %p104, %p105
    %p108 = scmp.ne.s32.totalorder %s91, %s107
    %p109 = scmp.eq.s32.totalorder %s15, 0
    %p110 = por %p108, %p109
    %p111 = scmp.le.s32.totalorder 1, %s9
    %p112 = scmp.lt.s32.totalorder %s9, 3
    %p113 = pnand %p111, %p112
    %p114 = pneg %p113
    // Predicated region
    $region9: #{conv2n_forward.6} parent=5 // pred_check
      _
    $region10: #{conv2n_forward.6} parent=5 // pred_check_branch
      %116 = sbr.rel (%p113) target = $region12
    $region11: #{conv2n_forward.6} parent=5 // pred_region
      %s117 = ssub.s32 %s9, 1
      // Predicated region
      $region13: #{conv2n_forward.6} parent=11 // pred_check
        %p118 = pneg %p56
      $region14: #{conv2n_forward.6} parent=11 // pred_check_branch
        %120 = sbr.rel (%p118) target = $region16
      $region15: #{conv2n_forward.6} parent=11 // pred_region
        _
      $region16: #{conv2n_forward.6} parent=11 // pred_fallthru
        _
      // Predicated region
      $region17: #{conv2n_forward.6} parent=11 // pred_check
        %p121 = pneg %p77
      $region18: #{conv2n_forward.6} parent=11 // pred_check_branch
        %123 = sbr.rel (%p121) target = $region20
      $region19: #{conv2n_forward.6} parent=11 // pred_region
        _
      $region20: #{conv2n_forward.6} parent=11 // pred_fallthru
        _
    $region12: #{conv2n_forward.6} parent=5 // pred_fallthru
      _
    %p124 = scmp.lt.s32.totalorder %s9, 2
    // Predicated region
    $region21: #{conv2n_forward.6} parent=5 // pred_check
      %p125 = pneg %p124
    $region22: #{conv2n_forward.6} parent=5 // pred_check_branch
      %127 = sbr.rel (%p125) target = $region24
    $region23: #{conv2n_forward.6} parent=5 // pred_region
      // Predicated region
      $region25: #{conv2n_forward.6} parent=23 // pred_check
        %p128 = pneg %p29
      $region26: #{conv2n_forward.6} parent=23 // pred_check_branch
        %130 = sbr.rel (%p128) target = $region28
      $region27: #{conv2n_forward.6} parent=23 // pred_region
        %p131 = scmp.lt.s32.totalorder %s9, 1
        %s132 = scalar_select %p131, %s9, 1
        %s133 = smul.addr %s132, 8
        %s134 = smul.addr %s133, 4
        %s135 = scalar_lea.vmem %s0, %s134
      $region28: #{conv2n_forward.6} parent=23 // pred_fallthru
        _
    $region24: #{conv2n_forward.6} parent=5 // pred_fallthru
      _
    %p136 = scmp.le.s32.totalorder 1, %s9
    %p137 = scmp.lt.s32.totalorder %s9, 3
    %p138 = pnand %p136, %p137
    %p139 = pneg %p138
    // Predicated region
    $region29: #{conv2n_forward.6} parent=5 // pred_check
      _
    $region30: #{conv2n_forward.6} parent=5 // pred_check_branch
      %141 = sbr.rel (%p138) target = $region32
    $region31: #{conv2n_forward.6} parent=5 // pred_region
      %s142 = ssub.s32 %s9, 1
      %p143 = scmp.lt.s32.totalorder %s14, 1
      %s144 = scalar_select %p143, %s14, 1
      %s145 = smul.addr %s144, 8
      %s146 = smul.addr %s145, 4
      %s147 = scalar_lea.vmem %s0, %s146
      %p148 = pneg %p35
      %p149 = pneg %p32
      %p150 = pneg %p56
      %p151 = pneg %p53
      %p152 = pneg %p77
      %p153 = pneg %p74
      %p154 = pneg %p103
      %p155 = pneg %p100
      %p156 = scmp.lt.s32.totalorder %s14, 1
      %s157 = scalar_select %p156, %s14, 1
      %s158 = smul.addr %s157, 8
      %s159 = smul.addr %s158, 4
      %s160 = scalar_lea.vmem %s3, %s159
      %p161 = scmp.lt.s32.totalorder %s14, 1
      %s162 = scalar_select %p161, %s14, 1
      %s163 = smul.addr %s162, 8
      %s164 = smul.addr %s163, 4
      %s165 = scalar_lea.vmem %s0, %s164
      %p166 = scmp.lt.s32.totalorder %s14, 1
      %s167 = scalar_select %p166, %s14, 1
      %s168 = smul.addr %s167, 8
      %s169 = smul.addr %s168, 4
      %s170 = scalar_lea.vmem %s3, %s169
      %v172 = vld [vmem:[%s165] sm:$0xf]
      %v173 = vld [vmem:[%s165 + $0x4] sm:$0xf]
      %v174 = vld [vmem:[%s165 + $0x8] sm:$0xf]
      %v175 = vld [vmem:[%s165 + $0xc] sm:$0xf]
      %v176 = vld [vmem:[%s165 + $0x10] sm:$0xf]
      %v177 = vld [vmem:[%s165 + $0x14] sm:$0xf]
      %v178 = vld [vmem:[%s165 + $0x18] sm:$0xf]
      %v179 = vld [vmem:[%s165 + $0x1c] sm:$0xf]
      %v180 = vld [vmem:[%s1] sm:$0xf]
      %v181 = vld [vmem:[%s2] sm:$0x1]
      %v182 = vld [vmem:[%s2 + $0x1] sm:$0x1]
      %v183 = vlaneseq
      %v184 = vshrl.u32 %v183, 7
      %v185 = vsub.s32 0, %v184
      %v186 = vrot.slane %v181, %v185
      %v195 = vunpack.c.l.b16 %v172
      %v196 = vunpack.c.l.b16 %v173
      %v197 = vunpack.c.l.b16 %v174
      %v198 = vunpack.c.l.b16 %v175
      %v199 = vunpack.c.l.b16 %v176
      %v200 = vunpack.c.l.b16 %v177
      %v201 = vunpack.c.l.b16 %v178
      %v202 = vunpack.c.l.b16 %v179
      %v203 = vpack.c.b16 %v196, %v195
      %v204 = vpack.c.b16 %v198, %v197
      %v205 = vpack.c.b16 %v200, %v199
      %v206 = vpack.c.b16 %v202, %v201
      %vm207 = vcmask 64512
      %v209 = vsel %vm207, %v203, 0
      %v212 = vsel %vm207, %v204, 0
      %v215 = vsel %vm207, %v205, 0
      %v218 = vsel %vm207, %v206, 0
      %vm220 = vcmask 1043456
      %v222 = vsel %vm220, %v180, 0
      %224 = vmatprep.subr.bf16.mxu0 0
      %225 = vmatpush1.bf16.msra.mxu0 %v222
      %226 = vmatprep.subr.bf16.mxu0 0
      %227 = vmatpush1.bf16.msra.mxu0 0
      %228 = vmatprep.subr.bf16.mxu0 0
      %229 = vmatpush1.bf16.msra.mxu0 0
      %230 = vmatprep.subr.bf16.mxu0 0
      %231 = vmatpush1.bf16.msra.mxu0 0
      %232 = vmatprep.subr.bf16.mxu0 0
      %233 = vmatpush1.bf16.msra.mxu0 0
      %234 = vmatprep.subr.bf16.mxu0 0
      %235 = vmatpush1.bf16.msra.mxu0 0
      %236 = vmatprep.subr.bf16.mxu0 0
      %237 = vmatpush1.bf16.msra.mxu0 0
      %238 = vmatprep.subr.bf16.mxu0 0
      %239 = vmatpush1.bf16.msra.mxu0 0
      %240 = vmatprep.subr.bf16.mxu0 0
      %241 = vmatpush1.bf16.msra.mxu0 0
      %242 = vmatprep.subr.bf16.mxu0 0
      %243 = vmatpush1.bf16.msra.mxu0 0
      %244 = vmatprep.subr.bf16.mxu0 0
      %245 = vmatpush1.bf16.msra.mxu0 0
      %246 = vmatprep.subr.bf16.mxu0 0
      %247 = vmatpush1.bf16.msra.mxu0 0
      %248 = vmatprep.subr.bf16.mxu0 0
      %249 = vmatpush1.bf16.msra.mxu0 0
      %250 = vmatprep.subr.bf16.mxu0 0
      %251 = vmatpush1.bf16.msra.mxu0 0
      %252 = vmatprep.subr.bf16.mxu0 0
      %253 = vmatpush1.bf16.msra.mxu0 0
      %254 = vmatprep.subr.bf16.mxu0 0
      %255 = vmatpush1.bf16.msra.mxu0 0
      %256 = vmatprep.mubr.bf16.mxu0 0
      %257 = vmatmul.mubr.bf16.gmra.mrb[0].mxu0 %v209
      %v258 = vpop.f32.mrb[0].mxu0
      %v259 = vadd.f32 %v186, %v258
      %v260 = vpop.f32.mrb[0].mxu0
      %v261 = vpop.f32.mrb[0].mxu0
      %v262 = vadd.f32 %v186, %v261
      %v263 = vpop.f32.mrb[0].mxu0
      %264 = vmatprep.mubr.bf16.mxu0 0
      %265 = vmatmul.mubr.bf16.gmra.mrb[0].mxu0 %v212
      %v266 = vpop.f32.mrb[0].mxu0
      %v267 = vadd.f32 %v186, %v266
      %v268 = vpop.f32.mrb[0].mxu0
      %v269 = vpop.f32.mrb[0].mxu0
      %v270 = vadd.f32 %v186, %v269
      %v271 = vpop.f32.mrb[0].mxu0
      %272 = vmatprep.mubr.bf16.mxu0 0
      %273 = vmatmul.mubr.bf16.gmra.mrb[0].mxu0 %v215
      %v274 = vpop.f32.mrb[0].mxu0
      %v275 = vadd.f32 %v186, %v274
      %v276 = vpop.f32.mrb[0].mxu0
      %v277 = vpop.f32.mrb[0].mxu0
      %v278 = vadd.f32 %v186, %v277
      %v279 = vpop.f32.mrb[0].mxu0
      %280 = vmatprep.mubr.bf16.mxu0 0
      %281 = vmatmul.mubr.bf16.gmra.mrb[0].mxu0 %v218
      %v282 = vpop.f32.mrb[0].mxu0
      %v283 = vadd.f32 %v186, %v282
      %v284 = vpop.f32.mrb[0].mxu0
      %v285 = vpop.f32.mrb[0].mxu0
      %v286 = vadd.f32 %v186, %v285
      %v287 = vpop.f32.mrb[0].mxu0
      %288 = vdwg.mxu0
      %vm289 = vcmp.ge.f32.partialorder %v259, 0.0
      %vm290 = vcmp.ge.f32.partialorder %v262, 0.0
      %vm291 = vcmp.ge.f32.partialorder %v267, 0.0
      %vm292 = vcmp.ge.f32.partialorder %v270, 0.0
      %vm293 = vcmp.ge.f32.partialorder %v275, 0.0
      %vm294 = vcmp.ge.f32.partialorder %v278, 0.0
      %vm295 = vcmp.ge.f32.partialorder %v283, 0.0
      %vm296 = vcmp.ge.f32.partialorder %v286, 0.0
      %v297 = vlaneseq
      %v298 = vshrl.u32 %v297, 7
      %v299 = vsub.s32 0, %v298
      %v300 = vrot.slane %v182, %v299
      %v301 = vmul.f32 %v259, %v300
      %v302 = vmul.f32 %v262, %v300
      %v303 = vmul.f32 %v267, %v300
      %v304 = vmul.f32 %v270, %v300
      %v305 = vmul.f32 %v275, %v300
      %v306 = vmul.f32 %v278, %v300
      %v307 = vmul.f32 %v283, %v300
      %v308 = vmul.f32 %v286, %v300
      %v309 = vsel %vm289, %v259, %v301
      %v310 = vsel %vm290, %v262, %v302
      %v311 = vsel %vm291, %v267, %v303
      %v312 = vsel %vm292, %v270, %v304
      %v313 = vsel %vm293, %v275, %v305
      %v314 = vsel %vm294, %v278, %v306
      %v315 = vsel %vm295, %v283, %v307
      %v316 = vsel %vm296, %v286, %v308
      %v317 = vpack.c.bf16 %v309, %v309
      %v318 = vpack.c.bf16 %v310, %v310
      %v319 = vpack.c.bf16 %v311, %v311
      %v320 = vpack.c.bf16 %v312, %v312
      %v321 = vpack.c.bf16 %v313, %v313
      %v322 = vpack.c.bf16 %v314, %v314
      %v323 = vpack.c.bf16 %v315, %v315
      %v324 = vpack.c.bf16 %v316, %v316
      %vm325 = vcmask 60416
      %326 = vst.msk [vmem:[%s170] sm:$0xf] %vm325, %v317
      %327 = vst.msk [vmem:[%s170 + $0x4] sm:$0xf] %vm325, %v318
      %328 = vst.msk [vmem:[%s170 + $0x8] sm:$0xf] %vm325, %v319
      %329 = vst.msk [vmem:[%s170 + $0xc] sm:$0xf] %vm325, %v320
      %330 = vst.msk [vmem:[%s170 + $0x10] sm:$0xf] %vm325, %v321
      %331 = vst.msk [vmem:[%s170 + $0x14] sm:$0xf] %vm325, %v322
      %332 = vst.msk [vmem:[%s170 + $0x18] sm:$0xf] %vm325, %v323
      %333 = vst.msk [vmem:[%s170 + $0x1c] sm:$0xf] %vm325, %v324
      %p334 = scmp.lt.s32.totalorder %s14, 1
      %s335 = scalar_select %p334, %s14, 1
      %s336 = smul.addr %s335, 8
      %s337 = smul.addr %s336, 4
      %s338 = scalar_lea.vmem %s3, %s337
      // Predicated region
      $region33: #{conv2n_forward.6} parent=31 // pred_check
        %p339 = pneg %p100
      $region34: #{conv2n_forward.6} parent=31 // pred_check_branch
        %341 = sbr.rel (%p339) target = $region36
      $region35: #{conv2n_forward.6} parent=31 // pred_region
        _
      $region36: #{conv2n_forward.6} parent=31 // pred_fallthru
        _
    $region32: #{conv2n_forward.6} parent=5 // pred_fallthru
      _
    %p342 = scmp.le.s32.totalorder 2, %s9
    // Predicated region
    $region37: #{conv2n_forward.6} parent=5 // pred_check
      %p343 = pneg %p342
    $region38: #{conv2n_forward.6} parent=5 // pred_check_branch
      %345 = sbr.rel (%p343) target = $region40
    $region39: #{conv2n_forward.6} parent=5 // pred_region
      %s346 = ssub.s32 %s9, 2
      // Predicated region
      $region41: #{conv2n_forward.6} parent=39 // pred_check
        %p347 = pneg %p106
      $region42: #{conv2n_forward.6} parent=39 // pred_check_branch
        %349 = sbr.rel (%p347) target = $region44
      $region43: #{conv2n_forward.6} parent=39 // pred_region
        %p350 = scmp.lt.s32.totalorder %s15, 1
        %s351 = scalar_select %p350, %s15, 1
        %s352 = smul.addr %s351, 8
        %s353 = smul.addr %s352, 4
        %s354 = scalar_lea.vmem %s3, %s353
      $region44: #{conv2n_forward.6} parent=39 // pred_fallthru
        _
    $region40: #{conv2n_forward.6} parent=5 // pred_fallthru
      _
  $region6: #{conv2n_forward.6} parent=0 // loop_footer
    %s13 = sadd.s32 1, %s9
  $region7: #{conv2n_forward.6} parent=0 // loop_footer_branch
    %8 = sbr.rel target = $region3
  $region8: #{conv2n_forward.6} parent=0 // loop_exit
    _

// kernel: conv2n_forward.7
$region0: #{conv2n_forward.7}
  #allocation0 [shape = 'u32[]', space=smem, size = 0x4, offset = 0x4, fixed_abs, tag = 'smem constant byte address 0x4 - core index']
  #allocation1 [shape = 'u32[144,128]{1,0:T(1,128)}', space=vmem, size = 0x12000, scoped, tag = 'internal scratch']
  %s0 = inlined_call_operand.vmem [shape: bf16[2,8,8,8], index: 0, kind: input, shape index: {}]
  %s1 = inlined_call_operand.vmem [shape: bf16[1,8,16], index: 1, kind: input, shape index: {}]
  %s2 = inlined_call_operand.vmem [shape: f32[2,16], index: 2, kind: input, shape index: {}]
  %s3 = inlined_call_operand.hbm [shape: f32[2,8,8,16], index: 3, kind: output, shape index: {}]
  %s4 = sld [smem:[#allocation0]]
  $region45: #{conv2n_forward.7} parent=0
    _
  %s6 = ssub.s32 1, %s4
  %s7 = scalar_select 0, %s6, %s4
  $region1: #{conv2n_forward.7} parent=0
    #allocation2 [shape = 'u8[65536]{0}', space=vmem, size = 0x10000, scoped, tag = 'output window, operand 0']
    #allocation3 [shape = 's32[2]{0}', space=sflag, size = 0x8, scoped, tag = 'scoped memory for conv2n_forward.7']
    %8 = vsyncpa [#allocation3], 0
    %s9 = scalar_lea.sflag [#allocation3], 1
    %10 = vsyncpa %s9, 0
    loop: start=0, step=1, limit=4
    $region2: #{conv2n_forward.7} parent=1 // loop_pre_header
      _
    $region3: #{conv2n_forward.7} parent=1 // loop_header
      %s12 = sphi 0, %s16
      %p13 = scmp.ge.s32.totalorder %s12, 4
      %s22 = sphi 0, %s24
      %s25 = sphi 0, %s22
      %s26 = sphi 0, %s25
      %s42 = sphi 0, %s26
      %s46 = sphi 0, %s46
      %s48 = sphi 0, %s46
      %s49 = sphi 0, %s48
      %s63 = sphi 0, %s49
      %s67 = sphi 0, %s67
      %s69 = sphi 0, %s67
      %s70 = sphi 0, %s69
      %s84 = sphi 0, %s70
      %s90 = sphi 0, %s92
      %s93 = sphi 0, %s90
      %s94 = sphi 0, %s93
      %s110 = sphi 0, %s94
    $region4: #{conv2n_forward.7} parent=1 // loop_header_branch
      %15 = sbr.rel (%p13) target = $region8
    $region5: #{conv2n_forward.7} parent=1 // loop_body
      %s17 = ssub.s32 %s12, 1
      %s18 = ssub.s32 %s12, 2
      %s19 = sadd.s32 %s12, 1
      %s20 = ssub.s32 %s12, %s19
      %p21 = scmp.eq.s32.totalorder %s20, 0
      %s23 = sadd.s32 %s22, 1
      %s24 = scalar_select %p21, %s22, %s23
      %p27 = pneg %p21
      %p28 = scmp.eq.s32.totalorder %s12, 1
      %p29 = por %p27, %p28
      %p30 = scmp.ne.s32.totalorder %s22, %s25
      %p31 = scmp.eq.s32.totalorder %s12, 0
      %p32 = por %p30, %p31
      %p33 = scmp.ne.s32.totalorder %s22, %s25
      %p34 = scmp.eq.s32.totalorder %s17, 1
      %p35 = por %p33, %p34
      %p36 = scmp.ne.s32.totalorder %s25, %s26
      %p37 = scmp.eq.s32.totalorder %s17, 0
      %p38 = por %p36, %p37
      %p39 = scmp.ne.s32.totalorder %s25, %s26
      %p40 = scmp.eq.s32.totalorder %s18, 1
      %p41 = por %p39, %p40
      %p43 = scmp.ne.s32.totalorder %s26, %s42
      %p44 = scmp.eq.s32.totalorder %s18, 0
      %p45 = por %p43, %p44
      %s47 = sadd.s32 %s46, 1
      %p50 = scmp.eq.s32.totalorder %s12, 1
      %p51 = scmp.ne.s32.totalorder %s46, %s48
      %p52 = scmp.eq.s32.totalorder %s12, 0
      %p53 = por %p51, %p52
      %p54 = scmp.ne.s32.totalorder %s46, %s48
      %p55 = scmp.eq.s32.totalorder %s17, 1
      %p56 = por %p54, %p55
      %p57 = scmp.ne.s32.totalorder %s48, %s49
      %p58 = scmp.eq.s32.totalorder %s17, 0
      %p59 = por %p57, %p58
      %p60 = scmp.ne.s32.totalorder %s48, %s49
      %p61 = scmp.eq.s32.totalorder %s18, 1
      %p62 = por %p60, %p61
      %p64 = scmp.ne.s32.totalorder %s49, %s63
      %p65 = scmp.eq.s32.totalorder %s18, 0
      %p66 = por %p64, %p65
      %s68 = sadd.s32 %s67, 1
      %p71 = scmp.eq.s32.totalorder %s12, 1
      %p72 = scmp.ne.s32.totalorder %s67, %s69
      %p73 = scmp.eq.s32.totalorder %s12, 0
      %p74 = por %p72, %p73
      %p75 = scmp.ne.s32.totalorder %s67, %s69
      %p76 = scmp.eq.s32.totalorder %s17, 1
      %p77 = por %p75, %p76
      %p78 = scmp.ne.s32.totalorder %s69, %s70
      %p79 = scmp.eq.s32.totalorder %s17, 0
      %p80 = por %p78, %p79
      %p81 = scmp.ne.s32.totalorder %s69, %s70
      %p82 = scmp.eq.s32.totalorder %s18, 1
      %p83 = por %p81, %p82
      %p85 = scmp.ne.s32.totalorder %s70, %s84
      %p86 = scmp.eq.s32.totalorder %s18, 0
      %p87 = por %p85, %p86
      %s88 = ssub.s32 %s12, %s19
      %p89 = scmp.eq.s32.totalorder %s88, 0
      %s91 = sadd.s32 %s90, 1
      %s92 = scalar_select %p89, %s90, %s91
      %p95 = pneg %p89
      %p96 = scmp.eq.s32.totalorder %s12, 1
      %p97 = por %p95, %p96
      %p98 = scmp.ne.s32.totalorder %s90, %s93
      %p99 = scmp.eq.s32.totalorder %s12, 0
      %p100 = por %p98, %p99
      %p101 = scmp.ne.s32.totalorder %s90, %s93
      %p102 = scmp.eq.s32.totalorder %s17, 1
      %p103 = por %p101, %p102
      %p104 = scmp.ne.s32.totalorder %s93, %s94
      %p105 = scmp.eq.s32.totalorder %s17, 0
      %p106 = por %p104, %p105
      %p107 = scmp.ne.s32.totalorder %s93, %s94
      %p108 = scmp.eq.s32.totalorder %s18, 1
      %p109 = por %p107, %p108
      %p111 = scmp.ne.s32.totalorder %s94, %s110
      %p112 = scmp.eq.s32.totalorder %s18, 0
      %p113 = por %p111, %p112
      %p114 = scmp.le.s32.totalorder 1, %s12
      %p115 = scmp.lt.s32.totalorder %s12, 3
      %p116 = pnand %p114, %p115
      %p117 = pneg %p116
      // Predicated region
      $region9: #{conv2n_forward.7} parent=5 // pred_check
        _
      $region10: #{conv2n_forward.7} parent=5 // pred_check_branch
        %119 = sbr.rel (%p116) target = $region12
      $region11: #{conv2n_forward.7} parent=5 // pred_region
        %s120 = ssub.s32 %s12, 1
        // Predicated region
        $region13: #{conv2n_forward.7} parent=11 // pred_check
          %p121 = pneg %p59
        $region14: #{conv2n_forward.7} parent=11 // pred_check_branch
          %123 = sbr.rel (%p121) target = $region16
        $region15: #{conv2n_forward.7} parent=11 // pred_region
          _
        $region16: #{conv2n_forward.7} parent=11 // pred_fallthru
          _
        // Predicated region
        $region17: #{conv2n_forward.7} parent=11 // pred_check
          %p124 = pneg %p80
        $region18: #{conv2n_forward.7} parent=11 // pred_check_branch
          %126 = sbr.rel (%p124) target = $region20
        $region19: #{conv2n_forward.7} parent=11 // pred_region
          _
        $region20: #{conv2n_forward.7} parent=11 // pred_fallthru
          _
      $region12: #{conv2n_forward.7} parent=5 // pred_fallthru
        _
      %p127 = scmp.lt.s32.totalorder %s12, 2
      // Predicated region
      $region21: #{conv2n_forward.7} parent=5 // pred_check
        %p128 = pneg %p127
      $region22: #{conv2n_forward.7} parent=5 // pred_check_branch
        %130 = sbr.rel (%p128) target = $region24
      $region23: #{conv2n_forward.7} parent=5 // pred_region
        // Predicated region
        $region25: #{conv2n_forward.7} parent=23 // pred_check
          %p131 = pneg %p32
        $region26: #{conv2n_forward.7} parent=23 // pred_check_branch
          %133 = sbr.rel (%p131) target = $region28
        $region27: #{conv2n_forward.7} parent=23 // pred_region
          %p134 = scmp.lt.s32.totalorder %s12, 1
          %s135 = scalar_select %p134, %s12, 1
          %s136 = smul.addr %s135, 8
          %s137 = smul.addr %s136, 4
          %s138 = scalar_lea.vmem %s0, %s137
        $region28: #{conv2n_forward.7} parent=23 // pred_fallthru
          _
      $region24: #{conv2n_forward.7} parent=5 // pred_fallthru
        _
      %p139 = scmp.le.s32.totalorder 1, %s12
      %p140 = scmp.lt.s32.totalorder %s12, 3
      %p141 = pnand %p139, %p140
      %p142 = pneg %p141
      // Predicated region
      $region29: #{conv2n_forward.7} parent=5 // pred_check
        _
      $region30: #{conv2n_forward.7} parent=5 // pred_check_branch
        %144 = sbr.rel (%p141) target = $region32
      $region31: #{conv2n_forward.7} parent=5 // pred_region
        %s145 = ssub.s32 %s12, 1
        %p146 = scmp.lt.s32.totalorder %s17, 1
        %s147 = scalar_select %p146, %s17, 1
        %s148 = smul.addr %s147, 8
        %s149 = smul.addr %s148, 4
        %s150 = scalar_lea.vmem %s0, %s149
        %p151 = pneg %p38
        %p152 = pneg %p35
        %p153 = pneg %p59
        %p154 = pneg %p56
        %p155 = pneg %p80
        %p156 = pneg %p77
        %p157 = pneg %p106
        %p158 = pneg %p103
        %s159 = sand.u32 %s93, 1
        %s160 = scalar_lea.sflag [#allocation3], %s159
        %s161 = sand.u32 %s93, 1
        %s162 = smul.addr %s161, 64
        %s163 = scalar_lea.vmem [#allocation2], %s162
        %p164 = scmp.lt.s32.totalorder %s17, 1
        %s165 = scalar_select %p164, %s17, 1
        %s166 = smul.addr %s165, 8
        %s167 = smul.addr %s166, 4
        %s168 = scalar_lea.vmem %s0, %s167
        %v170 = vld [vmem:[%s168] sm:$0xf]
        %v171 = vld [vmem:[%s168 + $0x4] sm:$0xf]
        %v172 = vld [vmem:[%s168 + $0x8] sm:$0xf]
        %v173 = vld [vmem:[%s168 + $0xc] sm:$0xf]
        %v174 = vld [vmem:[%s168 + $0x10] sm:$0xf]
        %v175 = vld [vmem:[%s168 + $0x14] sm:$0xf]
        %v176 = vld [vmem:[%s168 + $0x18] sm:$0xf]
        %v177 = vld [vmem:[%s168 + $0x1c] sm:$0xf]
        %v178 = vld [vmem:[%s1] sm:$0xf]
        %v179 = vld [vmem:[%s2] sm:$0x1]
        %v180 = vld [vmem:[%s2 + $0x1] sm:$0x1]
        %v181 = vlaneseq
        %v182 = vshrl.u32 %v181, 7
        %v183 = vsub.s32 0, %v182
        %v184 = vrot.slane %v179, %v183
        %v193 = vunpack.c.l.b16 %v170
        %v194 = vunpack.c.l.b16 %v171
        %v195 = vunpack.c.l.b16 %v172
        %v196 = vunpack.c.l.b16 %v173
        %v197 = vunpack.c.l.b16 %v174
        %v198 = vunpack.c.l.b16 %v175
        %v199 = vunpack.c.l.b16 %v176
        %v200 = vunpack.c.l.b16 %v177
        %v201 = vpack.c.b16 %v194, %v193
        %v202 = vpack.c.b16 %v196, %v195
        %v203 = vpack.c.b16 %v198, %v197
        %v204 = vpack.c.b16 %v200, %v199
        %vm205 = vcmask 64512
        %v207 = vsel %vm205, %v201, 0
        %v210 = vsel %vm205, %v202, 0
        %v213 = vsel %vm205, %v203, 0
        %v216 = vsel %vm205, %v204, 0
        %vm218 = vcmask 1043456
        %v220 = vsel %vm218, %v178, 0
        %222 = vmatprep.subr.bf16.mxu0 0
        %223 = vmatpush1.bf16.msra.mxu0 %v220
        %224 = vmatprep.subr.bf16.mxu0 0
        %225 = vmatpush1.bf16.msra.mxu0 0
        %226 = vmatprep.subr.bf16.mxu0 0
        %227 = vmatpush1.bf16.msra.mxu0 0
        %228 = vmatprep.subr.bf16.mxu0 0
        %229 = vmatpush1.bf16.msra.mxu0 0
        %230 = vmatprep.subr.bf16.mxu0 0
        %231 = vmatpush1.bf16.msra.mxu0 0
        %232 = vmatprep.subr.bf16.mxu0 0
        %233 = vmatpush1.bf16.msra.mxu0 0
        %234 = vmatprep.subr.bf16.mxu0 0
        %235 = vmatpush1.bf16.msra.mxu0 0
        %236 = vmatprep.subr.bf16.mxu0 0
        %237 = vmatpush1.bf16.msra.mxu0 0
        %238 = vmatprep.subr.bf16.mxu0 0
        %239 = vmatpush1.bf16.msra.mxu0 0
        %240 = vmatprep.subr.bf16.mxu0 0
        %241 = vmatpush1.bf16.msra.mxu0 0
        %242 = vmatprep.subr.bf16.mxu0 0
        %243 = vmatpush1.bf16.msra.mxu0 0
        %244 = vmatprep.subr.bf16.mxu0 0
        %245 = vmatpush1.bf16.msra.mxu0 0
        %246 = vmatprep.subr.bf16.mxu0 0
        %247 = vmatpush1.bf16.msra.mxu0 0
        %248 = vmatprep.subr.bf16.mxu0 0
        %249 = vmatpush1.bf16.msra.mxu0 0
        %250 = vmatprep.subr.bf16.mxu0 0
        %251 = vmatpush1.bf16.msra.mxu0 0
        %252 = vmatprep.subr.bf16.mxu0 0
        %253 = vmatpush1.bf16.msra.mxu0 0
        %254 = vmatprep.mubr.bf16.mxu0 0
        %255 = vmatmul.mubr.bf16.gmra.mrb[0].mxu0 %v207
        %v256 = vpop.f32.mrb[0].mxu0
        %v257 = vadd.f32 %v184, %v256
        %v258 = vpop.f32.mrb[0].mxu0
        %v259 = vpop.f32.mrb[0].mxu0
        %v260 = vadd.f32 %v184, %v259
        %v261 = vpop.f32.mrb[0].mxu0
        %262 = vmatprep.mubr.bf16.mxu0 0
        %263 = vmatmul.mubr.bf16.gmra.mrb[0].mxu0 %v210
        %v264 = vpop.f32.mrb[0].mxu0
        %v265 = vadd.f32 %v184, %v264
        %v266 = vpop.f32.mrb[0].mxu0
        %v267 = vpop.f32.mrb[0].mxu0
        %v268 = vadd.f32 %v184, %v267
        %v269 = vpop.f32.mrb[0].mxu0
        %270 = vmatprep.mubr.bf16.mxu0 0
        %271 = vmatmul.mubr.bf16.gmra.mrb[0].mxu0 %v213
        %v272 = vpop.f32.mrb[0].mxu0
        %v273 = vadd.f32 %v184, %v272
        %v274 = vpop.f32.mrb[0].mxu0
        %v275 = vpop.f32.mrb[0].mxu0
        %v276 = vadd.f32 %v184, %v275
        %v277 = vpop.f32.mrb[0].mxu0
        %278 = vmatprep.mubr.bf16.mxu0 0
        %279 = vmatmul.mubr.bf16.gmra.mrb[0].mxu0 %v216
        %v280 = vpop.f32.mrb[0].mxu0
        %v281 = vadd.f32 %v184, %v280
        %v282 = vpop.f32.mrb[0].mxu0
        %v283 = vpop.f32.mrb[0].mxu0
        %v284 = vadd.f32 %v184, %v283
        %v285 = vpop.f32.mrb[0].mxu0
        %286 = vdwg.mxu0
        %vm287 = vcmp.ge.f32.partialorder %v257, 0.0
        %vm288 = vcmp.ge.f32.partialorder %v260, 0.0
        %vm289 = vcmp.ge.f32.partialorder %v265, 0.0
        %vm290 = vcmp.ge.f32.partialorder %v268, 0.0
        %vm291 = vcmp.ge.f32.partialorder %v273, 0.0
        %vm292 = vcmp.ge.f32.partialorder %v276, 0.0
        %vm293 = vcmp.ge.f32.partialorder %v281, 0.0
        %vm294 = vcmp.ge.f32.partialorder %v284, 0.0
        %v295 = vlaneseq
        %v296 = vshrl.u32 %v295, 7
        %v297 = vsub.s32 0, %v296
        %v298 = vrot.slane %v180, %v297
        %v299 = vmul.f32 %v257, %v298
        %v300 = vmul.f32 %v260, %v298
        %v301 = vmul.f32 %v265, %v298
        %v302 = vmul.f32 %v268, %v298
        %v303 = vmul.f32 %v273, %v298
        %v304 = vmul.f32 %v276, %v298
        %v305 = vmul.f32 %v281, %v298
        %v306 = vmul.f32 %v284, %v298
        %v307 = vsel %vm287, %v257, %v299
        %v308 = vsel %vm288, %v260, %v300
        %v309 = vsel %vm289, %v265, %v301
        %v310 = vsel %vm290, %v268, %v302
        %v311 = vsel %vm291, %v273, %v303
        %v312 = vsel %vm292, %v276, %v304
        %v313 = vsel %vm293, %v281, %v305
        %v314 = vsel %vm294, %v284, %v306
        %vm315 = vcmask 130048
        %316 = vst.msk [vmem:[%s163] sm:$0xff] %vm315, %v307
        %317 = vst.msk [vmem:[%s163 + $0x8] sm:$0xff] %vm315, %v308
        %318 = vst.msk [vmem:[%s163 + $0x10] sm:$0xff] %vm315, %v309
        %319 = vst.msk [vmem:[%s163 + $0x18] sm:$0xff] %vm315, %v310
        %320 = vst.msk [vmem:[%s163 + $0x20] sm:$0xff] %vm315, %v311
        %321 = vst.msk [vmem:[%s163 + $0x28] sm:$0xff] %vm315, %v312
        %322 = vst.msk [vmem:[%s163 + $0x30] sm:$0xff] %vm315, %v313
        %323 = vst.msk [vmem:[%s163 + $0x38] sm:$0xff] %vm315, %v314
        %s324 = sand.u32 %s93, 1
        %s325 = scalar_lea.sflag [#allocation3], %s324
        %s326 = sand.u32 %s93, 1
        %s327 = smul.addr %s326, 64
        %s328 = scalar_lea.vmem [#allocation2], %s327
        // Predicated region
        $region33: #{conv2n_forward.7} parent=31 // pred_check
          %p329 = pneg %p103
        $region34: #{conv2n_forward.7} parent=31 // pred_check_branch
          %331 = sbr.rel (%p329) target = $region36
        $region35: #{conv2n_forward.7} parent=31 // pred_region
          %s333 = ssub.s32 1024, 1024
          %334 = vsyncadd %s325, %s333
          %s335 = smul.addr %s17, 8
          %s336 = smul.addr %s335, 128
          %s337 = scalar_lea.hbm %s3, %s336
          %s338 = sshll.u32 %s328, 4
          %s339 = int_to_ptr.vmem [resolvable:$true] %s338
          %344 = dma.vmem_to_hbm [thread:$0]  %s339, 1024, %s337, %s325, 128, 128, 8
        $region36: #{conv2n_forward.7} parent=31 // pred_fallthru
          _
      $region32: #{conv2n_forward.7} parent=5 // pred_fallthru
        _
      %p345 = scmp.le.s32.totalorder 2, %s12
      // Predicated region
      $region37: #{conv2n_forward.7} parent=5 // pred_check
        %p346 = pneg %p345
      $region38: #{conv2n_forward.7} parent=5 // pred_check_branch
        %348 = sbr.rel (%p346) target = $region40
      $region39: #{conv2n_forward.7} parent=5 // pred_region
        %s349 = ssub.s32 %s12, 2
        // Predicated region
        $region41: #{conv2n_forward.7} parent=39 // pred_check
          %p350 = pneg %p109
        $region42: #{conv2n_forward.7} parent=39 // pred_check_branch
          %352 = sbr.rel (%p350) target = $region44
        $region43: #{conv2n_forward.7} parent=39 // pred_region
          %s353 = sand.u32 %s94, 1
          %s354 = scalar_lea.sflag [#allocation3], %s353
          %s355 = sand.u32 %s94, 1
          %s356 = smul.addr %s355, 64
          %s357 = scalar_lea.vmem [#allocation2], %s356
          %358 = dma.done %s354, 1024
        $region44: #{conv2n_forward.7} parent=39 // pred_fallthru
          _
      $region40: #{conv2n_forward.7} parent=5 // pred_fallthru
        _
    $region6: #{conv2n_forward.7} parent=1 // loop_footer
      %s16 = sadd.s32 1, %s12
    $region7: #{conv2n_forward.7} parent=1 // loop_footer_branch
      %11 = sbr.rel target = $region3
    $region8: #{conv2n_forward.7} parent=1 // loop_exit
      _
    %359 = vsyncpa [#allocation3], 1
    %s360 = scalar_lea.sflag [#allocation3], 1
    %361 = vsyncpa %s360, 1

// kernel: conv2n_forward.5
$region0: #{conv2n_forward.5}
  #allocation0 [shape = 'u32[]', space=smem, size = 0x4, offset = 0x4, fixed_abs, tag = 'smem constant byte address 0x4 - core index']
  #allocation1 [shape = 'u32[144,128]{1,0:T(1,128)}', space=vmem, size = 0x12000, scoped, tag = 'internal scratch']
  %s0 = inlined_call_operand.vmem [shape: bf16[2,10,10,8], index: 0, kind: input, shape index: {}]
  %s1 = inlined_call_operand.vmem [shape: bf16[9,8,8], index: 1, kind: input, shape index: {}]
  %s2 = inlined_call_operand.vmem [shape: f32[2,8], index: 2, kind: input, shape index: {}]
  %s3 = inlined_call_operand.vmem [shape: bf16[2,8,8,8], index: 3, kind: output, shape index: {}]
  %s4 = sld [smem:[#allocation0]]
  $region45: #{conv2n_forward.5} parent=0
    _
  %s6 = ssub.s32 1, %s4
  %s7 = scalar_select 0, %s6, %s4
  loop: start=0, step=1, limit=4
  $region2: #{conv2n_forward.5} parent=0 // loop_pre_header
    _
  $region3: #{conv2n_forward.5} parent=0 // loop_header
    %s9 = sphi 0, %s13
    %p10 = scmp.ge.s32.totalorder %s9, 4
    %s19 = sphi 0, %s21
    %s22 = sphi 0, %s19
    %s23 = sphi 0, %s22
    %s39 = sphi 0, %s23
    %s43 = sphi 0, %s43
    %s45 = sphi 0, %s43
    %s46 = sphi 0, %s45
    %s60 = sphi 0, %s46
    %s64 = sphi 0, %s64
    %s66 = sphi 0, %s64
    %s67 = sphi 0, %s66
    %s81 = sphi 0, %s67
    %s87 = sphi 0, %s89
    %s90 = sphi 0, %s87
    %s91 = sphi 0, %s90
    %s107 = sphi 0, %s91
  $region4: #{conv2n_forward.5} parent=0 // loop_header_branch
    %12 = sbr.rel (%p10) target = $region8
  $region5: #{conv2n_forward.5} parent=0 // loop_body
    %s14 = ssub.s32 %s9, 1
    %s15 = ssub.s32 %s9, 2
    %s16 = sadd.s32 %s9, 1
    %s17 = ssub.s32 %s9, %s16
    %p18 = scmp.eq.s32.totalorder %s17, 0
    %s20 = sadd.s32 %s19, 1
    %s21 = scalar_select %p18, %s19, %s20
    %p24 = pneg %p18
    %p25 = scmp.eq.s32.totalorder %s9, 1
    %p26 = por %p24, %p25
    %p27 = scmp.ne.s32.totalorder %s19, %s22
    %p28 = scmp.eq.s32.totalorder %s9, 0
    %p29 = por %p27, %p28
    %p30 = scmp.ne.s32.totalorder %s19, %s22
    %p31 = scmp.eq.s32.totalorder %s14, 1
    %p32 = por %p30, %p31
    %p33 = scmp.ne.s32.totalorder %s22, %s23
    %p34 = scmp.eq.s32.totalorder %s14, 0
    %p35 = por %p33, %p34
    %p36 = scmp.ne.s32.totalorder %s22, %s23
    %p37 = scmp.eq.s32.totalorder %s15, 1
    %p38 = por %p36, %p37
    %p40 = scmp.ne.s32.totalorder %s23, %s39
    %p41 = scmp.eq.s32.totalorder %s15, 0
    %p42 = por %p40, %p41
    %s44 = sadd.s32 %s43, 1
    %p47 = scmp.eq.s32.totalorder %s9, 1
    %p48 = scmp.ne.s32.totalorder %s43, %s45
    %p49 = scmp.eq.s32.totalorder %s9, 0
    %p50 = por %p48, %p49
    %p51 = scmp.ne.s32.totalorder %s43, %s45
    %p52 = scmp.eq.s32.totalorder %s14, 1
    %p53 = por %p51, %p52
    %p54 = scmp.ne.s32.totalorder %s45, %s46
    %p55 = scmp.eq.s32.totalorder %s14, 0
    %p56 = por %p54, %p55
    %p57 = scmp.ne.s32.totalorder %s45, %s46
    %p58 = scmp.eq.s32.totalorder %s15, 1
    %p59 = por %p57, %p58
    %p61 = scmp.ne.s32.totalorder %s46, %s60
    %p62 = scmp.eq.s32.totalorder %s15, 0
    %p63 = por %p61, %p62
    %s65 = sadd.s32 %s64, 1
    %p68 = scmp.eq.s32.totalorder %s9, 1
    %p69 = scmp.ne.s32.totalorder %s64, %s66
    %p70 = scmp.eq.s32.totalorder %s9, 0
    %p71 = por %p69, %p70
    %p72 = scmp.ne.s32.totalorder %s64, %s66
    %p73 = scmp.eq.s32.totalorder %s14, 1
    %p74 = por %p72, %p73
    %p75 = scmp.ne.s32.totalorder %s66, %s67
    %p76 = scmp.eq.s32.totalorder %s14, 0
    %p77 = por %p75, %p76
    %p78 = scmp.ne.s32.totalorder %s66, %s67
    %p79 = scmp.eq.s32.totalorder %s15, 1
    %p80 = por %p78, %p79
    %p82 = scmp.ne.s32.totalorder %s67, %s81
    %p83 = scmp.eq.s32.totalorder %s15, 0
    %p84 = por %p82, %p83
    %s85 = ssub.s32 %s9, %s16
    %p86 = scmp.eq.s32.totalorder %s85, 0
    %s88 = sadd.s32 %s87, 1
    %s89 = scalar_select %p86, %s87, %s88
    %p92 = pneg %p86
    %p93 = scmp.eq.s32.totalorder %s9, 1
    %p94 = por %p92, %p93
    %p95 = scmp.ne.s32.totalorder %s87, %s90
    %p96 = scmp.eq.s32.totalorder %s9, 0
    %p97 = por %p95, %p96
    %p98 = scmp.ne.s32.totalorder %s87, %s90
    %p99 = scmp.eq.s32.totalorder %s14, 1
    %p100 = por %p98, %p99
    %p101 = scmp.ne.s32.totalorder %s90, %s91
    %p102 = scmp.eq.s32.totalorder %s14, 0
    %p103 = por %p101, %p102
    %p104 = scmp.ne.s32.totalorder %s90, %s91
    %p105 = scmp.eq.s32.totalorder %s15, 1
    %p106 = por %p104, %p105
    %p108 = scmp.ne.s32.totalorder %s91, %s107
    %p109 = scmp.eq.s32.totalorder %s15, 0
    %p110 = por %p108, %p109
    %p111 = scmp.le.s32.totalorder 1, %s9
    %p112 = scmp.lt.s32.totalorder %s9, 3
    %p113 = pnand %p111, %p112
    %p114 = pneg %p113
    // Predicated region
    $region9: #{conv2n_forward.5} parent=5 // pred_check
      _
    $region10: #{conv2n_forward.5} parent=5 // pred_check_branch
      %116 = sbr.rel (%p113) target = $region12
    $region11: #{conv2n_forward.5} parent=5 // pred_region
      %s117 = ssub.s32 %s9, 1
      // Predicated region
      $region13: #{conv2n_forward.5} parent=11 // pred_check
        %p118 = pneg %p56
      $region14: #{conv2n_forward.5} parent=11 // pred_check_branch
        %120 = sbr.rel (%p118) target = $region16
      $region15: #{conv2n_forward.5} parent=11 // pred_region
        _
      $region16: #{conv2n_forward.5} parent=11 // pred_fallthru
        _
      // Predicated region
      $region17: #{conv2n_forward.5} parent=11 // pred_check
        %p121 = pneg %p77
      $region18: #{conv2n_forward.5} parent=11 // pred_check_branch
        %123 = sbr.rel (%p121) target = $region20
      $region19: #{conv2n_forward.5} parent=11 // pred_region
        _
      $region20: #{conv2n_forward.5} parent=11 // pred_fallthru
        _
    $region12: #{conv2n_forward.5} parent=5 // pred_fallthru
      _
    %p124 = scmp.lt.s32.totalorder %s9, 2
    // Predicated region
    $region21: #{conv2n_forward.5} parent=5 // pred_check
      %p125 = pneg %p124
    $region22: #{conv2n_forward.5} parent=5 // pred_check_branch
      %127 = sbr.rel (%p125) target = $region24
    $region23: #{conv2n_forward.5} parent=5 // pred_region
      // Predicated region
      $region25: #{conv2n_forward.5} parent=23 // pred_check
        %p128 = pneg %p29
      $region26: #{conv2n_forward.5} parent=23 // pred_check_branch
        %130 = sbr.rel (%p128) target = $region28
      $region27: #{conv2n_forward.5} parent=23 // pred_region
        %p131 = scmp.lt.s32.totalorder %s9, 1
        %s132 = scalar_select %p131, %s9, 1
        %s133 = smul.addr %s132, 20
        %s134 = smul.addr %s133, 4
        %s135 = scalar_lea.vmem %s0, %s134
      $region28: #{conv2n_forward.5} parent=23 // pred_fallthru
        _
    $region24: #{conv2n_forward.5} parent=5 // pred_fallthru
      _
    %p136 = scmp.le.s32.totalorder 1, %s9
    %p137 = scmp.lt.s32.totalorder %s9, 3
    %p138 = pnand %p136, %p137
    %p139 = pneg %p138
    // Predicated region
    $region29: #{conv2n_forward.5} parent=5 // pred_check
      _
    $region30: #{conv2n_forward.5} parent=5 // pred_check_branch
      %141 = sbr.rel (%p138) target = $region32
    $region31: #{conv2n_forward.5} parent=5 // pred_region
      %s142 = ssub.s32 %s9, 1
      %p143 = scmp.lt.s32.totalorder %s14, 1
      %s144 = scalar_select %p143, %s14, 1
      %s145 = smul.addr %s144, 20
      %s146 = smul.addr %s145, 4
      %s147 = scalar_lea.vmem %s0, %s146
      %p148 = pneg %p35
      %p149 = pneg %p32
      %p150 = pneg %p56
      %p151 = pneg %p53
      %p152 = pneg %p77
      %p153 = pneg %p74
      %p154 = pneg %p103
      %p155 = pneg %p100
      %p156 = scmp.lt.s32.totalorder %s14, 1
      %s157 = scalar_select %p156, %s14, 1
      %s158 = smul.addr %s157, 8
      %s159 = smul.addr %s158, 4
      %s160 = scalar_lea.vmem %s3, %s159
      %p161 = scmp.lt.s32.totalorder %s14, 1
      %s162 = scalar_select %p161, %s14, 1
      %s163 = smul.addr %s162, 20
      %s164 = smul.addr %s163, 4
      %s165 = scalar_lea.vmem %s0, %s164
      %p166 = scmp.lt.s32.totalorder %s14, 1
      %s167 = scalar_select %p166, %s14, 1
      %s168 = smul.addr %s167, 8
      %s169 = smul.addr %s168, 4
      %s170 = scalar_lea.vmem %s3, %s169
      %v172 = vld [vmem:[%s165] sm:$0xf]
      %v173 = vld [vmem:[%s165 + $0x8] sm:$0xf]
      %v174 = vld [vmem:[%s165 + $0x10] sm:$0xf]
      %v175 = vld [vmem:[%s165 + $0x18] sm:$0xf]
      %v176 = vld [vmem:[%s165 + $0x20] sm:$0xf]
      %v177 = vld [vmem:[%s165 + $0x28] sm:$0xf]
      %v178 = vld [vmem:[%s165 + $0x30] sm:$0xf]
      %v179 = vld [vmem:[%s165 + $0x38] sm:$0xf]
      %v180 = vld [vmem:[%s1] sm:$0xf]
      %v181 = vld [vmem:[%s165 + $0x4] sm:$0x1]
      %v182 = vld [vmem:[%s165 + $0xc] sm:$0x1]
      %v183 = vld [vmem:[%s165 + $0x14] sm:$0x1]
      %v184 = vld [vmem:[%s165 + $0x1c] sm:$0x1]
      %v185 = vld [vmem:[%s165 + $0x24] sm:$0x1]
      %v186 = vld [vmem:[%s165 + $0x2c] sm:$0x1]
      %v187 = vld [vmem:[%s165 + $0x34] sm:$0x1]
      %v188 = vld [vmem:[%s165 + $0x3c] sm:$0x1]
      %vm189 = vsmask.f32 3328
      %vm190 = vsmask.f32 7440
      %vm191 = vmor %vm189, %vm190
      %v193 = vshrl.u32 %v172, 16
      %v195 = vrot.slane %v193, 4
      %v196 = vshll.u32 %v172, 16
      %v198 = vrot.slane %v196, 5
      %v199 = vor.u32 %v195, %v198
      %v200 = vrot.slane %v199, 4
      %v202 = vshll.u32 %v181, 16
      %v204 = vrot.slane %v202, 5
      %v205 = vsel %vm191, %v200, %v204
      %v207 = vshrl.u32 %v173, 16
      %v209 = vrot.slane %v207, 4
      %v210 = vshll.u32 %v173, 16
      %v212 = vrot.slane %v210, 5
      %v213 = vor.u32 %v209, %v212
      %v214 = vrot.slane %v213, 4
      %v216 = vshll.u32 %v182, 16
      %v218 = vrot.slane %v216, 5
      %v219 = vsel %vm191, %v214, %v218
      %v221 = vshrl.u32 %v174, 16
      %v223 = vrot.slane %v221, 4
      %v224 = vshll.u32 %v174, 16
      %v226 = vrot.slane %v224, 5
      %v227 = vor.u32 %v223, %v226
      %v228 = vrot.slane %v227, 4
      %v230 = vshll.u32 %v183, 16
      %v232 = vrot.slane %v230, 5
      %v233 = vsel %vm191, %v228, %v232
      %v235 = vshrl.u32 %v175, 16
      %v237 = vrot.slane %v235, 4
      %v238 = vshll.u32 %v175, 16
      %v240 = vrot.slane %v238, 5
      %v241 = vor.u32 %v237, %v240
      %v242 = vrot.slane %v241, 4
      %v244 = vshll.u32 %v184, 16
      %v246 = vrot.slane %v244, 5
      %v247 = vsel %vm191, %v242, %v246
      %v249 = vshrl.u32 %v176, 16
      %v251 = vrot.slane %v249, 4
      %v252 = vshll.u32 %v176, 16
      %v254 = vrot.slane %v252, 5
      %v255 = vor.u32 %v251, %v254
      %v256 = vrot.slane %v255, 4
      %v258 = vshll.u32 %v185, 16
      %v260 = vrot.slane %v258, 5
      %v261 = vsel %vm191, %v256, %v260
      %v263 = vshrl.u32 %v177, 16
      %v265 = vrot.slane %v263, 4
      %v266 = vshll.u32 %v177, 16
      %v268 = vrot.slane %v266, 5
      %v269 = vor.u32 %v265, %v268
      %v270 = vrot.slane %v269, 4
      %v272 = vshll.u32 %v186, 16
      %v274 = vrot.slane %v272, 5
      %v275 = vsel %vm191, %v270, %v274
      %v277 = vshrl.u32 %v178, 16
      %v279 = vrot.slane %v277, 4
      %v280 = vshll.u32 %v178, 16
      %v282 = vrot.slane %v280, 5
      %v283 = vor.u32 %v279, %v282
      %v284 = vrot.slane %v283, 4
      %v286 = vshll.u32 %v187, 16
      %v288 = vrot.slane %v286, 5
      %v289 = vsel %vm191, %v284, %v288
      %v291 = vshrl.u32 %v179, 16
      %v293 = vrot.slane %v291, 4
      %v294 = vshll.u32 %v179, 16
      %v296 = vrot.slane %v294, 5
      %v297 = vor.u32 %v293, %v296
      %v298 = vrot.slane %v297, 4
      %v300 = vshll.u32 %v188, 16
      %v302 = vrot.slane %v300, 5
      %v303 = vsel %vm191, %v298, %v302
      %s304 = scalar_lea.vmem %s1, 4
      %v305 = vld [vmem:[%s304] sm:$0xf]
      %v306 = vunpack.c.l.b16 %v205
      %v307 = vunpack.c.l.b16 %v219
      %v308 = vunpack.c.l.b16 %v233
      %v309 = vunpack.c.l.b16 %v247
      %v310 = vunpack.c.l.b16 %v261
      %v311 = vunpack.c.l.b16 %v275
      %v312 = vunpack.c.l.b16 %v289
      %v313 = vunpack.c.l.b16 %v303
      %v314 = vpack.c.b16 %v307, %v306
      %v315 = vpack.c.b16 %v309, %v308
      %v316 = vpack.c.b16 %v311, %v310
      %v317 = vpack.c.b16 %v313, %v312
      %vm318 = vcmask 64512
      %v320 = vsel %vm318, %v314, 0
      %v323 = vsel %vm318, %v315, 0
      %v326 = vsel %vm318, %v316, 0
      %v329 = vsel %vm318, %v317, 0
      %vm331 = vcmask 1043456
      %v333 = vsel %vm331, %v305, 0
      %335 = vmatprep.subr.bf16.mxu0 0
      %336 = vmatpush1.bf16.msra.mxu0 %v333
      %337 = vmatprep.subr.bf16.mxu0 0
      %338 = vmatpush1.bf16.msra.mxu0 0
      %339 = vmatprep.subr.bf16.mxu0 0
      %340 = vmatpush1.bf16.msra.mxu0 0
      %341 = vmatprep.subr.bf16.mxu0 0
      %342 = vmatpush1.bf16.msra.mxu0 0
      %343 = vmatprep.subr.bf16.mxu0 0
      %344 = vmatpush1.bf16.msra.mxu0 0
      %345 = vmatprep.subr.bf16.mxu0 0
      %346 = vmatpush1.bf16.msra.mxu0 0
      %347 = vmatprep.subr.bf16.mxu0 0
      %348 = vmatpush1.bf16.msra.mxu0 0
      %349 = vmatprep.subr.bf16.mxu0 0
      %350 = vmatpush1.bf16.msra.mxu0 0
      %351 = vmatprep.subr.bf16.mxu0 0
      %352 = vmatpush1.bf16.msra.mxu0 0
      %353 = vmatprep.subr.bf16.mxu0 0
      %354 = vmatpush1.bf16.msra.mxu0 0
      %355 = vmatprep.subr.bf16.mxu0 0
      %356 = vmatpush1.bf16.msra.mxu0 0
      %357 = vmatprep.subr.bf16.mxu0 0
      %358 = vmatpush1.bf16.msra.mxu0 0
      %359 = vmatprep.subr.bf16.mxu0 0
      %360 = vmatpush1.bf16.msra.mxu0 0
      %361 = vmatprep.subr.bf16.mxu0 0
      %362 = vmatpush1.bf16.msra.mxu0 0
      %363 = vmatprep.subr.bf16.mxu0 0
      %364 = vmatpush1.bf16.msra.mxu0 0
      %365 = vmatprep.subr.bf16.mxu0 0
      %366 = vmatpush1.bf16.msra.mxu0 0
      %367 = vmatprep.mubr.bf16.mxu0 0
      %368 = vmatmul.mubr.bf16.gmra.mrb[0].mxu0 %v320
      %v369 = vpop.f32.mrb[0].mxu0
      %v370 = vadd.f32 0.0, %v369
      %v371 = vpop.f32.mrb[0].mxu0
      %v372 = vpop.f32.mrb[0].mxu0
      %v373 = vadd.f32 0.0, %v372
      %v374 = vpop.f32.mrb[0].mxu0
      %375 = vmatprep.mubr.bf16.mxu0 0
      %376 = vmatmul.mubr.bf16.gmra.mrb[0].mxu0 %v323
      %v377 = vpop.f32.mrb[0].mxu0
      %v378 = vadd.f32 0.0, %v377
      %v379 = vpop.f32.mrb[0].mxu0
      %v380 = vpop.f32.mrb[0].mxu0
      %v381 = vadd.f32 0.0, %v380
      %v382 = vpop.f32.mrb[0].mxu0
      %383 = vmatprep.mubr.bf16.mxu0 0
      %384 = vmatmul.mubr.bf16.gmra.mrb[0].mxu0 %v326
      %v385 = vpop.f32.mrb[0].mxu0
      %v386 = vadd.f32 0.0, %v385
      %v387 = vpop.f32.mrb[0].mxu0
      %v388 = vpop.f32.mrb[0].mxu0
      %v389 = vadd.f32 0.0, %v388
      %v390 = vpop.f32.mrb[0].mxu0
      %391 = vmatprep.mubr.bf16.mxu0 0
      %392 = vmatmul.mubr.bf16.gmra.mrb[0].mxu0 %v329
      %v393 = vpop.f32.mrb[0].mxu0
      %v394 = vadd.f32 0.0, %v393
      %v395 = vpop.f32.mrb[0].mxu0
      %v396 = vpop.f32.mrb[0].mxu0
      %v397 = vadd.f32 0.0, %v396
      %v398 = vpop.f32.mrb[0].mxu0
      %399 = vdwg.mxu0
      %v408 = vunpack.c.l.b16 %v172
      %v409 = vunpack.c.l.b16 %v173
      %v410 = vunpack.c.l.b16 %v174
      %v411 = vunpack.c.l.b16 %v175
      %v412 = vunpack.c.l.b16 %v176
      %v413 = vunpack.c.l.b16 %v177
      %v414 = vunpack.c.l.b16 %v178
      %v415 = vunpack.c.l.b16 %v179
      %v416 = vpack.c.b16 %v409, %v408
      %v417 = vpack.c.b16 %v411, %v410
      %v418 = vpack.c.b16 %v413, %v412
      %v419 = vpack.c.b16 %v415, %v414
      %v421 = vsel %vm318, %v416, 0
      %v424 = vsel %vm318, %v417, 0
      %v427 = vsel %vm318, %v418, 0
      %v430 = vsel %vm318, %v419, 0
      %v433 = vsel %vm331, %v180, 0
      %435 = vmatprep.subr.bf16.mxu0 0
      %436 = vmatpush1.bf16.msra.mxu0 %v433
      %437 = vmatprep.subr.bf16.mxu0 0
      %438 = vmatpush1.bf16.msra.mxu0 0
      %439 = vmatprep.subr.bf16.mxu0 0
      %440 = vmatpush1.bf16.msra.mxu0 0
      %441 = vmatprep.subr.bf16.mxu0 0
      %442 = vmatpush1.bf16.msra.mxu0 0
      %443 = vmatprep.subr.bf16.mxu0 0
      %444 = vmatpush1.bf16.msra.mxu0 0
      %445 = vmatprep.subr.bf16.mxu0 0
      %446 = vmatpush1.bf16.msra.mxu0 0
      %447 = vmatprep.subr.bf16.mxu0 0
      %448 = vmatpush1.bf16.msra.mxu0 0
      %449 = vmatprep.subr.bf16.mxu0 0
      %450 = vmatpush1.bf16.msra.mxu0 0
      %451 = vmatprep.subr.bf16.mxu0 0
      %452 = vmatpush1.bf16.msra.mxu0 0
      %453 = vmatprep.subr.bf16.mxu0 0
      %454 = vmatpush1.bf16.msra.mxu0 0
      %455 = vmatprep.subr.bf16.mxu0 0
      %456 = vmatpush1.bf16.msra.mxu0 0
      %457 = vmatprep.subr.bf16.mxu0 0
      %458 = vmatpush1.bf16.msra.mxu0 0
      %459 = vmatprep.subr.bf16.mxu0 0
      %460 = vmatpush1.bf16.msra.mxu0 0
      %461 = vmatprep.subr.bf16.mxu0 0
      %462 = vmatpush1.bf16.msra.mxu0 0
      %463 = vmatprep.subr.bf16.mxu0 0
      %464 = vmatpush1.bf16.msra.mxu0 0
      %465 = vmatprep.subr.bf16.mxu0 0
      %466 = vmatpush1.bf16.msra.mxu0 0
      %467 = vmatprep.mubr.bf16.mxu0 0
      %468 = vmatmul.mubr.bf16.gmra.mrb[0].mxu0 %v421
      %v469 = vpop.f32.mrb[0].mxu0
      %v470 = vadd.f32 %v370, %v469
      %v471 = vpop.f32.mrb[0].mxu0
      %v472 = vpop.f32.mrb[0].mxu0
      %v473 = vadd.f32 %v373, %v472
      %v474 = vpop.f32.mrb[0].mxu0
      %475 = vmatprep.mubr.bf16.mxu0 0
      %476 = vmatmul.mubr.bf16.gmra.mrb[0].mxu0 %v424
      %v477 = vpop.f32.mrb[0].mxu0
      %v478 = vadd.f32 %v378, %v477
      %v479 = vpop.f32.mrb[0].mxu0
      %v480 = vpop.f32.mrb[0].mxu0
      %v481 = vadd.f32 %v381, %v480
      %v482 = vpop.f32.mrb[0].mxu0
      %483 = vmatprep.mubr.bf16.mxu0 0
      %484 = vmatmul.mubr.bf16.gmra.mrb[0].mxu0 %v427
      %v485 = vpop.f32.mrb[0].mxu0
      %v486 = vadd.f32 %v386, %v485
      %v487 = vpop.f32.mrb[0].mxu0
      %v488 = vpop.f32.mrb[0].mxu0
      %v489 = vadd.f32 %v389, %v488
      %v490 = vpop.f32.mrb[0].mxu0
      %491 = vmatprep.mubr.bf16.mxu0 0
      %492 = vmatmul.mubr.bf16.gmra.mrb[0].mxu0 %v430
      %v493 = vpop.f32.mrb[0].mxu0
      %v494 = vadd.f32 %v394, %v493
      %v495 = vpop.f32.mrb[0].mxu0
      %v496 = vpop.f32.mrb[0].mxu0
      %v497 = vadd.f32 %v397, %v496
      %v498 = vpop.f32.mrb[0].mxu0
      %499 = vdwg.mxu0
      %v500 = vld [vmem:[%s165] sm:$0xe]
      %v501 = vld [vmem:[%s165 + $0x8] sm:$0xe]
      %v502 = vld [vmem:[%s165 + $0x10] sm:$0xe]
      %v503 = vld [vmem:[%s165 + $0x18] sm:$0xe]
      %v504 = vld [vmem:[%s165 + $0x20] sm:$0xe]
      %v505 = vld [vmem:[%s165 + $0x28] sm:$0xe]
      %v506 = vld [vmem:[%s165 + $0x30] sm:$0xe]
      %v507 = vld [vmem:[%s165 + $0x38] sm:$0xe]
      %vm524 = vcmask 1042432
      %vm525 = vcmask 1046532
      %vm526 = vmor %vm524, %vm525
      %v527 = vrot.slane %v500, 5
      %v528 = vrot.slane %v527, 4
      %v529 = vrot.slane %v181, 5
      %v530 = vsel %vm526, %v528, %v529
      %v531 = vrot.slane %v501, 5
      %v532 = vrot.slane %v531, 4
      %v533 = vrot.slane %v182, 5
      %v534 = vsel %vm526, %v532, %v533
      %v535 = vrot.slane %v502, 5
      %v536 = vrot.slane %v535, 4
      %v537 = vrot.slane %v183, 5
      %v538 = vsel %vm526, %v536, %v537
      %v539 = vrot.slane %v503, 5
      %v540 = vrot.slane %v539, 4
      %v541 = vrot.slane %v184, 5
      %v542 = vsel %vm526, %v540, %v541
      %v543 = vrot.slane %v504, 5
      %v544 = vrot.slane %v543, 4
      %v545 = vrot.slane %v185, 5
      %v546 = vsel %vm526, %v544, %v545
      %v547 = vrot.slane %v505, 5
      %v548 = vrot.slane %v547, 4
      %v549 = vrot.slane %v186, 5
      %v550 = vsel %vm526, %v548, %v549
      %v551 = vrot.slane %v506, 5
      %v552 = vrot.slane %v551, 4
      %v553 = vrot.slane %v187, 5
      %v554 = vsel %vm526, %v552, %v553
      %v555 = vrot.slane %v507, 5
      %v556 = vrot.slane %v555, 4
      %v557 = vrot.slane %v188, 5
      %v558 = vsel %vm526, %v556, %v557
      %s559 = scalar_lea.vmem %s1, 8
      %v560 = vld [vmem:[%s559] sm:$0xf]
      %v561 = vunpack.c.l.b16 %v530
      %v562 = vunpack.c.l.b16 %v534
      %v563 = vunpack.c.l.b16 %v538
      %v564 = vunpack.c.l.b16 %v542
      %v565 = vunpack.c.l.b16 %v546
      %v566 = vunpack.c.l.b16 %v550
      %v567 = vunpack.c.l.b16 %v554
      %v568 = vunpack.c.l.b16 %v558
      %v569 = vpack.c.b16 %v562, %v561
      %v570 = vpack.c.b16 %v564, %v563
      %v571 = vpack.c.b16 %v566, %v565
      %v572 = vpack.c.b16 %v568, %v567
      %v574 = vsel %vm318, %v569, 0
      %v577 = vsel %vm318, %v570, 0
      %v580 = vsel %vm318, %v571, 0
      %v583 = vsel %vm318, %v572, 0
      %v586 = vsel %vm331, %v560, 0
      %588 = vmatprep.subr.bf16.mxu0 0
      %589 = vmatpush1.bf16.msra.mxu0 %v586
      %590 = vmatprep.subr.bf16.mxu0 0
      %591 = vmatpush1.bf16.msra.mxu0 0
      %592 = vmatprep.subr.bf16.mxu0 0
      %593 = vmatpush1.bf16.msra.mxu0 0
      %594 = vmatprep.subr.bf16.mxu0 0
      %595 = vmatpush1.bf16.msra.mxu0 0
      %596 = vmatprep.subr.bf16.mxu0 0
      %597 = vmatpush1.bf16.msra.mxu0 0
      %598 = vmatprep.subr.bf16.mxu0 0
      %599 = vmatpush1.bf16.msra.mxu0 0
      %600 = vmatprep.subr.bf16.mxu0 0
      %601 = vmatpush1.bf16.msra.mxu0 0
      %602 = vmatprep.subr.bf16.mxu0 0
      %603 = vmatpush1.bf16.msra.mxu0 0
      %604 = vmatprep.subr.bf16.mxu0 0
      %605 = vmatpush1.bf16.msra.mxu0 0
      %606 = vmatprep.subr.bf16.mxu0 0
      %607 = vmatpush1.bf16.msra.mxu0 0
      %608 = vmatprep.subr.bf16.mxu0 0
      %609 = vmatpush1.bf16.msra.mxu0 0
      %610 = vmatprep.subr.bf16.mxu0 0
      %611 = vmatpush1.bf16.msra.mxu0 0
      %612 = vmatprep.subr.bf16.mxu0 0
      %613 = vmatpush1.bf16.msra.mxu0 0
      %614 = vmatprep.subr.bf16.mxu0 0
      %615 = vmatpush1.bf16.msra.mxu0 0
      %616 = vmatprep.subr.bf16.mxu0 0
      %617 = vmatpush1.bf16.msra.mxu0 0
      %618 = vmatprep.subr.bf16.mxu0 0
      %619 = vmatpush1.bf16.msra.mxu0 0
      %620 = vmatprep.mubr.bf16.mxu0 0
      %621 = vmatmul.mubr.bf16.gmra.mrb[0].mxu0 %v574
      %v622 = vpop.f32.mrb[0].mxu0
      %v623 = vadd.f32 0.0, %v622
      %v624 = vpop.f32.mrb[0].mxu0
      %v625 = vpop.f32.mrb[0].mxu0
      %v626 = vadd.f32 0.0, %v625
      %v627 = vpop.f32.mrb[0].mxu0
      %628 = vmatprep.mubr.bf16.mxu0 0
      %629 = vmatmul.mubr.bf16.gmra.mrb[0].mxu0 %v577
      %v630 = vpop.f32.mrb[0].mxu0
      %v631 = vadd.f32 0.0, %v630
      %v632 = vpop.f32.mrb[0].mxu0
      %v633 = vpop.f32.mrb[0].mxu0
      %v634 = vadd.f32 0.0, %v633
      %v635 = vpop.f32.mrb[0].mxu0
      %636 = vmatprep.mubr.bf16.mxu0 0
      %637 = vmatmul.mubr.bf16.gmra.mrb[0].mxu0 %v580
      %v638 = vpop.f32.mrb[0].mxu0
      %v639 = vadd.f32 0.0, %v638
      %v640 = vpop.f32.mrb[0].mxu0
      %v641 = vpop.f32.mrb[0].mxu0
      %v642 = vadd.f32 0.0, %v641
      %v643 = vpop.f32.mrb[0].mxu0
      %644 = vmatprep.mubr.bf16.mxu0 0
      %645 = vmatmul.mubr.bf16.gmra.mrb[0].mxu0 %v583
      %v646 = vpop.f32.mrb[0].mxu0
      %v647 = vadd.f32 0.0, %v646
      %v648 = vpop.f32.mrb[0].mxu0
      %v649 = vpop.f32.mrb[0].mxu0
      %v650 = vadd.f32 0.0, %v649
      %v651 = vpop.f32.mrb[0].mxu0
      %652 = vdwg.mxu0
      %v653 = vadd.f32 %v470, %v623
      %v654 = vadd.f32 %v473, %v626
      %v655 = vadd.f32 %v478, %v631
      %v656 = vadd.f32 %v481, %v634
      %v657 = vadd.f32 %v486, %v639
      %v658 = vadd.f32 %v489, %v642
      %v659 = vadd.f32 %v494, %v647
      %v660 = vadd.f32 %v497, %v650
      %s661 = scalar_lea.vmem %s165, 8
      %v662 = vld [vmem:[%s661] sm:$0xf]
      %v663 = vld [vmem:[%s661 + $0x8] sm:$0xf]
      %v664 = vld [vmem:[%s661 + $0x10] sm:$0xf]
      %v665 = vld [vmem:[%s661 + $0x18] sm:$0xf]
      %v666 = vld [vmem:[%s661 + $0x20] sm:$0xf]
      %v667 = vld [vmem:[%s661 + $0x28] sm:$0xf]
      %v668 = vld [vmem:[%s661 + $0x30] sm:$0xf]
      %v669 = vld [vmem:[%s661 + $0x38] sm:$0xf]
      %s670 = scalar_lea.vmem %s1, 12
      %v671 = vld [vmem:[%s670] sm:$0xf]
      %v680 = vunpack.c.l.b16 %v662
      %v681 = vunpack.c.l.b16 %v663
      %v682 = vunpack.c.l.b16 %v664
      %v683 = vunpack.c.l.b16 %v665
      %v684 = vunpack.c.l.b16 %v666
      %v685 = vunpack.c.l.b16 %v667
      %v686 = vunpack.c.l.b16 %v668
      %v687 = vunpack.c.l.b16 %v669
      %v688 = vpack.c.b16 %v681, %v680
      %v689 = vpack.c.b16 %v683, %v682
      %v690 = vpack.c.b16 %v685, %v684
      %v691 = vpack.c.b16 %v687, %v686
      %v693 = vsel %vm318, %v688, 0
      %v696 = vsel %vm318, %v689, 0
      %v699 = vsel %vm318, %v690, 0
      %v702 = vsel %vm318, %v691, 0
      %v705 = vsel %vm331, %v671, 0
      %707 = vmatprep.subr.bf16.mxu0 0
      %708 = vmatpush1.bf16.msra.mxu0 %v705
      %709 = vmatprep.subr.bf16.mxu0 0
      %710 = vmatpush1.bf16.msra.mxu0 0
      %711 = vmatprep.subr.bf16.mxu0 0
      %712 = vmatpush1.bf16.msra.mxu0 0
      %713 = vmatprep.subr.bf16.mxu0 0
      %714 = vmatpush1.bf16.msra.mxu0 0
      %715 = vmatprep.subr.bf16.mxu0 0
      %716 = vmatpush1.bf16.msra.mxu0 0
      %717 = vmatprep.subr.bf16.mxu0 0
      %718 = vmatpush1.bf16.msra.mxu0 0
      %719 = vmatprep.subr.bf16.mxu0 0
      %720 = vmatpush1.bf16.msra.mxu0 0
      %721 = vmatprep.subr.bf16.mxu0 0
      %722 = vmatpush1.bf16.msra.mxu0 0
      %723 = vmatprep.subr.bf16.mxu0 0
      %724 = vmatpush1.bf16.msra.mxu0 0
      %725 = vmatprep.subr.bf16.mxu0 0
      %726 = vmatpush1.bf16.msra.mxu0 0
      %727 = vmatprep.subr.bf16.mxu0 0
      %728 = vmatpush1.bf16.msra.mxu0 0
      %729 = vmatprep.subr.bf16.mxu0 0
      %730 = vmatpush1.bf16.msra.mxu0 0
      %731 = vmatprep.subr.bf16.mxu0 0
      %732 = vmatpush1.bf16.msra.mxu0 0
      %733 = vmatprep.subr.bf16.mxu0 0
      %734 = vmatpush1.bf16.msra.mxu0 0
      %735 = vmatprep.subr.bf16.mxu0 0
      %736 = vmatpush1.bf16.msra.mxu0 0
      %737 = vmatprep.subr.bf16.mxu0 0
      %738 = vmatpush1.bf16.msra.mxu0 0
      %739 = vmatprep.mubr.bf16.mxu0 0
      %740 = vmatmul.mubr.bf16.gmra.mrb[0].mxu0 %v693
      %v741 = vpop.f32.mrb[0].mxu0
      %v742 = vadd.f32 0.0, %v741
      %v743 = vpop.f32.mrb[0].mxu0
      %v744 = vpop.f32.mrb[0].mxu0
      %v745 = vadd.f32 0.0, %v744
      %v746 = vpop.f32.mrb[0].mxu0
      %747 = vmatprep.mubr.bf16.mxu0 0
      %748 = vmatmul.mubr.bf16.gmra.mrb[0].mxu0 %v696
      %v749 = vpop.f32.mrb[0].mxu0
      %v750 = vadd.f32 0.0, %v749
      %v751 = vpop.f32.mrb[0].mxu0
      %v752 = vpop.f32.mrb[0].mxu0
      %v753 = vadd.f32 0.0, %v752
      %v754 = vpop.f32.mrb[0].mxu0
      %755 = vmatprep.mubr.bf16.mxu0 0
      %756 = vmatmul.mubr.bf16.gmra.mrb[0].mxu0 %v699
      %v757 = vpop.f32.mrb[0].mxu0
      %v758 = vadd.f32 0.0, %v757
      %v759 = vpop.f32.mrb[0].mxu0
      %v760 = vpop.f32.mrb[0].mxu0
      %v761 = vadd.f32 0.0, %v760
      %v762 = vpop.f32.mrb[0].mxu0
      %763 = vmatprep.mubr.bf16.mxu0 0
      %764 = vmatmul.mubr.bf16.gmra.mrb[0].mxu0 %v702
      %v765 = vpop.f32.mrb[0].mxu0
      %v766 = vadd.f32 0.0, %v765
      %v767 = vpop.f32.mrb[0].mxu0
      %v768 = vpop.f32.mrb[0].mxu0
      %v769 = vadd.f32 0.0, %v768
      %v770 = vpop.f32.mrb[0].mxu0
      %771 = vdwg.mxu0
      %v772 = vadd.f32 %v653, %v742
      %v773 = vadd.f32 %v654, %v745
      %v774 = vadd.f32 %v655, %v750
      %v775 = vadd.f32 %v656, %v753
      %v776 = vadd.f32 %v657, %v758
      %v777 = vadd.f32 %v658, %v761
      %v778 = vadd.f32 %v659, %v766
      %v779 = vadd.f32 %v660, %v769
      %v780 = vld [vmem:[%s661] sm:$0xf]
      %v781 = vld [vmem:[%s661 + $0x4] sm:$0x1]
      %v782 = vld [vmem:[%s661 + $0x8] sm:$0xf]
      %v783 = vld [vmem:[%s661 + $0xc] sm:$0x1]
      %v784 = vld [vmem:[%s661 + $0x10] sm:$0xf]
      %v785 = vld [vmem:[%s661 + $0x14] sm:$0x1]
      %v786 = vld [vmem:[%s661 + $0x18] sm:$0xf]
      %v787 = vld [vmem:[%s661 + $0x1c] sm:$0x1]
      %v788 = vld [vmem:[%s661 + $0x20] sm:$0xf]
      %v789 = vld [vmem:[%s661 + $0x24] sm:$0x1]
      %v790 = vld [vmem:[%s661 + $0x28] sm:$0xf]
      %v791 = vld [vmem:[%s661 + $0x2c] sm:$0x1]
      %v792 = vld [vmem:[%s661 + $0x30] sm:$0xf]
      %v793 = vld [vmem:[%s661 + $0x34] sm:$0x1]
      %v794 = vld [vmem:[%s661 + $0x38] sm:$0xf]
      %v795 = vld [vmem:[%s661 + $0x3c] sm:$0x1]
      %v797 = vshrl.u32 %v780, 16
      %v799 = vrot.slane %v797, 4
      %v800 = vshll.u32 %v780, 16
      %v802 = vrot.slane %v800, 5
      %v803 = vor.u32 %v799, %v802
      %v804 = vrot.slane %v803, 4
      %v806 = vshll.u32 %v781, 16
      %v808 = vrot.slane %v806, 5
      %v809 = vsel %vm191, %v804, %v808
      %v811 = vshrl.u32 %v782, 16
      %v813 = vrot.slane %v811, 4
      %v814 = vshll.u32 %v782, 16
      %v816 = vrot.slane %v814, 5
      %v817 = vor.u32 %v813, %v816
      %v818 = vrot.slane %v817, 4
      %v820 = vshll.u32 %v783, 16
      %v822 = vrot.slane %v820, 5
      %v823 = vsel %vm191, %v818, %v822
      %v825 = vshrl.u32 %v784, 16
      %v827 = vrot.slane %v825, 4
      %v828 = vshll.u32 %v784, 16
      %v830 = vrot.slane %v828, 5
      %v831 = vor.u32 %v827, %v830
      %v832 = vrot.slane %v831, 4
      %v834 = vshll.u32 %v785, 16
      %v836 = vrot.slane %v834, 5
      %v837 = vsel %vm191, %v832, %v836
      %v839 = vshrl.u32 %v786, 16
      %v841 = vrot.slane %v839, 4
      %v842 = vshll.u32 %v786, 16
      %v844 = vrot.slane %v842, 5
      %v845 = vor.u32 %v841, %v844
      %v846 = vrot.slane %v845, 4
      %v848 = vshll.u32 %v787, 16
      %v850 = vrot.slane %v848, 5
      %v851 = vsel %vm191, %v846, %v850
      %v853 = vshrl.u32 %v788, 16
      %v855 = vrot.slane %v853, 4
      %v856 = vshll.u32 %v788, 16
      %v858 = vrot.slane %v856, 5
      %v859 = vor.u32 %v855, %v858
      %v860 = vrot.slane %v859, 4
      %v862 = vshll.u32 %v789, 16
      %v864 = vrot.slane %v862, 5
      %v865 = vsel %vm191, %v860, %v864
      %v867 = vshrl.u32 %v790, 16
      %v869 = vrot.slane %v867, 4
      %v870 = vshll.u32 %v790, 16
      %v872 = vrot.slane %v870, 5
      %v873 = vor.u32 %v869, %v872
      %v874 = vrot.slane %v873, 4
      %v876 = vshll.u32 %v791, 16
      %v878 = vrot.slane %v876, 5
      %v879 = vsel %vm191, %v874, %v878
      %v881 = vshrl.u32 %v792, 16
      %v883 = vrot.slane %v881, 4
      %v884 = vshll.u32 %v792, 16
      %v886 = vrot.slane %v884, 5
      %v887 = vor.u32 %v883, %v886
      %v888 = vrot.slane %v887, 4
      %v890 = vshll.u32 %v793, 16
      %v892 = vrot.slane %v890, 5
      %v893 = vsel %vm191, %v888, %v892
      %v895 = vshrl.u32 %v794, 16
      %v897 = vrot.slane %v895, 4
      %v898 = vshll.u32 %v794, 16
      %v900 = vrot.slane %v898, 5
      %v901 = vor.u32 %v897, %v900
      %v902 = vrot.slane %v901, 4
      %v904 = vshll.u32 %v795, 16
      %v906 = vrot.slane %v904, 5
      %v907 = vsel %vm191, %v902, %v906
      %s908 = scalar_lea.vmem %s1, 16
      %v909 = vld [vmem:[%s908] sm:$0xf]
      %v910 = vunpack.c.l.b16 %v809
      %v911 = vunpack.c.l.b16 %v823
      %v912 = vunpack.c.l.b16 %v837
      %v913 = vunpack.c.l.b16 %v851
      %v914 = vunpack.c.l.b16 %v865
      %v915 = vunpack.c.l.b16 %v879
      %v916 = vunpack.c.l.b16 %v893
      %v917 = vunpack.c.l.b16 %v907
      %v918 = vpack.c.b16 %v911, %v910
      %v919 = vpack.c.b16 %v913, %v912
      %v920 = vpack.c.b16 %v915, %v914
      %v921 = vpack.c.b16 %v917, %v916
      %v923 = vsel %vm318, %v918, 0
      %v926 = vsel %vm318, %v919, 0
      %v929 = vsel %vm318, %v920, 0
      %v932 = vsel %vm318, %v921, 0
      %v935 = vsel %vm331, %v909, 0
      %937 = vmatprep.subr.bf16.mxu0 0
      %938 = vmatpush1.bf16.msra.mxu0 %v935
      %939 = vmatprep.subr.bf16.mxu0 0
      %940 = vmatpush1.bf16.msra.mxu0 0
      %941 = vmatprep.subr.bf16.mxu0 0
      %942 = vmatpush1.bf16.msra.mxu0 0
      %943 = vmatprep.subr.bf16.mxu0 0
      %944 = vmatpush1.bf16.msra.mxu0 0
      %945 = vmatprep.subr.bf16.mxu0 0
      %946 = vmatpush1.bf16.msra.mxu0 0
      %947 = vmatprep.subr.bf16.mxu0 0
      %948 = vmatpush1.bf16.msra.mxu0 0
      %949 = vmatprep.subr.bf16.mxu0 0
      %950 = vmatpush1.bf16.msra.mxu0 0
      %951 = vmatprep.subr.bf16.mxu0 0
      %952 = vmatpush1.bf16.msra.mxu0 0
      %953 = vmatprep.subr.bf16.mxu0 0
      %954 = vmatpush1.bf16.msra.mxu0 0
      %955 = vmatprep.subr.bf16.mxu0 0
      %956 = vmatpush1.bf16.msra.mxu0 0
      %957 = vmatprep.subr.bf16.mxu0 0
      %958 = vmatpush1.bf16.msra.mxu0 0
      %959 = vmatprep.subr.bf16.mxu0 0
      %960 = vmatpush1.bf16.msra.mxu0 0
      %961 = vmatprep.subr.bf16.mxu0 0
      %962 = vmatpush1.bf16.msra.mxu0 0
      %963 = vmatprep.subr.bf16.mxu0 0
      %964 = vmatpush1.bf16.msra.mxu0 0
      %965 = vmatprep.subr.bf16.mxu0 0
      %966 = vmatpush1.bf16.msra.mxu0 0
      %967 = vmatprep.subr.bf16.mxu0 0
      %968 = vmatpush1.bf16.msra.mxu0 0
      %969 = vmatprep.mubr.bf16.mxu0 0
      %970 = vmatmul.mubr.bf16.gmra.mrb[0].mxu0 %v923
      %v971 = vpop.f32.mrb[0].mxu0
      %v972 = vadd.f32 0.0, %v971
      %v973 = vpop.f32.mrb[0].mxu0
      %v974 = vpop.f32.mrb[0].mxu0
      %v975 = vadd.f32 0.0, %v974
      %v976 = vpop.f32.mrb[0].mxu0
      %977 = vmatprep.mubr.bf16.mxu0 0
      %978 = vmatmul.mubr.bf16.gmra.mrb[0].mxu0 %v926
      %v979 = vpop.f32.mrb[0].mxu0
      %v980 = vadd.f32 0.0, %v979
      %v981 = vpop.f32.mrb[0].mxu0
      %v982 = vpop.f32.mrb[0].mxu0
      %v983 = vadd.f32 0.0, %v982
      %v984 = vpop.f32.mrb[0].mxu0
      %985 = vmatprep.mubr.bf16.mxu0 0
      %986 = vmatmul.mubr.bf16.gmra.mrb[0].mxu0 %v929
      %v987 = vpop.f32.mrb[0].mxu0
      %v988 = vadd.f32 0.0, %v987
      %v989 = vpop.f32.mrb[0].mxu0
      %v990 = vpop.f32.mrb[0].mxu0
      %v991 = vadd.f32 0.0, %v990
      %v992 = vpop.f32.mrb[0].mxu0
      %993 = vmatprep.mubr.bf16.mxu0 0
      %994 = vmatmul.mubr.bf16.gmra.mrb[0].mxu0 %v932
      %v995 = vpop.f32.mrb[0].mxu0
      %v996 = vadd.f32 0.0, %v995
      %v997 = vpop.f32.mrb[0].mxu0
      %v998 = vpop.f32.mrb[0].mxu0
      %v999 = vadd.f32 0.0, %v998
      %v1000 = vpop.f32.mrb[0].mxu0
      %1001 = vdwg.mxu0
      %v1002 = vadd.f32 %v772, %v972
      %v1003 = vadd.f32 %v773, %v975
      %v1004 = vadd.f32 %v774, %v980
      %v1005 = vadd.f32 %v775, %v983
      %v1006 = vadd.f32 %v776, %v988
      %v1007 = vadd.f32 %v777, %v991
      %v1008 = vadd.f32 %v778, %v996
      %v1009 = vadd.f32 %v779, %v999
      %v1010 = vld [vmem:[%s661] sm:$0xe]
      %v1011 = vld [vmem:[%s661 + $0x8] sm:$0xe]
      %v1012 = vld [vmem:[%s661 + $0x10] sm:$0xe]
      %v1013 = vld [vmem:[%s661 + $0x18] sm:$0xe]
      %v1014 = vld [vmem:[%s661 + $0x20] sm:$0xe]
      %v1015 = vld [vmem:[%s661 + $0x28] sm:$0xe]
      %v1016 = vld [vmem:[%s661 + $0x30] sm:$0xe]
      %v1017 = vld [vmem:[%s661 + $0x38] sm:$0xe]
      %v1034 = vrot.slane %v1010, 5
      %v1035 = vrot.slane %v1034, 4
      %v1036 = vrot.slane %v781, 5
      %v1037 = vsel %vm526, %v1035, %v1036
      %v1038 = vrot.slane %v1011, 5
      %v1039 = vrot.slane %v1038, 4
      %v1040 = vrot.slane %v783, 5
      %v1041 = vsel %vm526, %v1039, %v1040
      %v1042 = vrot.slane %v1012, 5
      %v1043 = vrot.slane %v1042, 4
      %v1044 = vrot.slane %v785, 5
      %v1045 = vsel %vm526, %v1043, %v1044
      %v1046 = vrot.slane %v1013, 5
      %v1047 = vrot.slane %v1046, 4
      %v1048 = vrot.slane %v787, 5
      %v1049 = vsel %vm526, %v1047, %v1048
      %v1050 = vrot.slane %v1014, 5
      %v1051 = vrot.slane %v1050, 4
      %v1052 = vrot.slane %v789, 5
      %v1053 = vsel %vm526, %v1051, %v1052
      %v1054 = vrot.slane %v1015, 5
      %v1055 = vrot.slane %v1054, 4
      %v1056 = vrot.slane %v791, 5
      %v1057 = vsel %vm526, %v1055, %v1056
      %v1058 = vrot.slane %v1016, 5
      %v1059 = vrot.slane %v1058, 4
      %v1060 = vrot.slane %v793, 5
      %v1061 = vsel %vm526, %v1059, %v1060
      %v1062 = vrot.slane %v1017, 5
      %v1063 = vrot.slane %v1062, 4
      %v1064 = vrot.slane %v795, 5
      %v1065 = vsel %vm526, %v1063, %v1064
      %s1066 = scalar_lea.vmem %s1, 20
      %v1067 = vld [vmem:[%s1066] sm:$0xf]
      %v1068 = vunpack.c.l.b16 %v1037
      %v1069 = vunpack.c.l.b16 %v1041
      %v1070 = vunpack.c.l.b16 %v1045
      %v1071 = vunpack.c.l.b16 %v1049
      %v1072 = vunpack.c.l.b16 %v1053
      %v1073 = vunpack.c.l.b16 %v1057
      %v1074 = vunpack.c.l.b16 %v1061
      %v1075 = vunpack.c.l.b16 %v1065
      %v1076 = vpack.c.b16 %v1069, %v1068
      %v1077 = vpack.c.b16 %v1071, %v1070
      %v1078 = vpack.c.b16 %v1073, %v1072
      %v1079 = vpack.c.b16 %v1075, %v1074
      %v1081 = vsel %vm318, %v1076, 0
      %v1084 = vsel %vm318, %v1077, 0
      %v1087 = vsel %vm318, %v1078, 0
      %v1090 = vsel %vm318, %v1079, 0
      %v1093 = vsel %vm331, %v1067, 0
      %1095 = vmatprep.subr.bf16.mxu0 0
      %1096 = vmatpush1.bf16.msra.mxu0 %v1093
      %1097 = vmatprep.subr.bf16.mxu0 0
      %1098 = vmatpush1.bf16.msra.mxu0 0
      %1099 = vmatprep.subr.bf16.mxu0 0
      %1100 = vmatpush1.bf16.msra.mxu0 0
      %1101 = vmatprep.subr.bf16.mxu0 0
      %1102 = vmatpush1.bf16.msra.mxu0 0
      %1103 = vmatprep.subr.bf16.mxu0 0
      %1104 = vmatpush1.bf16.msra.mxu0 0
      %1105 = vmatprep.subr.bf16.mxu0 0
      %1106 = vmatpush1.bf16.msra.mxu0 0
      %1107 = vmatprep.subr.bf16.mxu0 0
      %1108 = vmatpush1.bf16.msra.mxu0 0
      %1109 = vmatprep.subr.bf16.mxu0 0
      %1110 = vmatpush1.bf16.msra.mxu0 0
      %1111 = vmatprep.subr.bf16.mxu0 0
      %1112 = vmatpush1.bf16.msra.mxu0 0
      %1113 = vmatprep.subr.bf16.mxu0 0
      %1114 = vmatpush1.bf16.msra.mxu0 0
      %1115 = vmatprep.subr.bf16.mxu0 0
      %1116 = vmatpush1.bf16.msra.mxu0 0
      %1117 = vmatprep.subr.bf16.mxu0 0
      %1118 = vmatpush1.bf16.msra.mxu0 0
      %1119 = vmatprep.subr.bf16.mxu0 0
      %1120 = vmatpush1.bf16.msra.mxu0 0
      %1121 = vmatprep.subr.bf16.mxu0 0
      %1122 = vmatpush1.bf16.msra.mxu0 0
      %1123 = vmatprep.subr.bf16.mxu0 0
      %1124 = vmatpush1.bf16.msra.mxu0 0
      %1125 = vmatprep.subr.bf16.mxu0 0
      %1126 = vmatpush1.bf16.msra.mxu0 0
      %1127 = vmatprep.mubr.bf16.mxu0 0
      %1128 = vmatmul.mubr.bf16.gmra.mrb[0].mxu0 %v1081
      %v1129 = vpop.f32.mrb[0].mxu0
      %v1130 = vadd.f32 0.0, %v1129
      %v1131 = vpop.f32.mrb[0].mxu0
      %v1132 = vpop.f32.mrb[0].mxu0
      %v1133 = vadd.f32 0.0, %v1132
      %v1134 = vpop.f32.mrb[0].mxu0
      %1135 = vmatprep.mubr.bf16.mxu0 0
      %1136 = vmatmul.mubr.bf16.gmra.mrb[0].mxu0 %v1084
      %v1137 = vpop.f32.mrb[0].mxu0
      %v1138 = vadd.f32 0.0, %v1137
      %v1139 = vpop.f32.mrb[0].mxu0
      %v1140 = vpop.f32.mrb[0].mxu0
      %v1141 = vadd.f32 0.0, %v1140
      %v1142 = vpop.f32.mrb[0].mxu0
      %1143 = vmatprep.mubr.bf16.mxu0 0
      %1144 = vmatmul.mubr.bf16.gmra.mrb[0].mxu0 %v1087
      %v1145 = vpop.f32.mrb[0].mxu0
      %v1146 = vadd.f32 0.0, %v1145
      %v1147 = vpop.f32.mrb[0].mxu0
      %v1148 = vpop.f32.mrb[0].mxu0
      %v1149 = vadd.f32 0.0, %v1148
      %v1150 = vpop.f32.mrb[0].mxu0
      %1151 = vmatprep.mubr.bf16.mxu0 0
      %1152 = vmatmul.mubr.bf16.gmra.mrb[0].mxu0 %v1090
      %v1153 = vpop.f32.mrb[0].mxu0
      %v1154 = vadd.f32 0.0, %v1153
      %v1155 = vpop.f32.mrb[0].mxu0
      %v1156 = vpop.f32.mrb[0].mxu0
      %v1157 = vadd.f32 0.0, %v1156
      %v1158 = vpop.f32.mrb[0].mxu0
      %1159 = vdwg.mxu0
      %v1160 = vadd.f32 %v1002, %v1130
      %v1161 = vadd.f32 %v1003, %v1133
      %v1162 = vadd.f32 %v1004, %v1138
      %v1163 = vadd.f32 %v1005, %v1141
      %v1164 = vadd.f32 %v1006, %v1146
      %v1165 = vadd.f32 %v1007, %v1149
      %v1166 = vadd.f32 %v1008, %v1154
      %v1167 = vadd.f32 %v1009, %v1157
      %s1168 = scalar_lea.vmem %s165, 16
      %v1169 = vld [vmem:[%s1168] sm:$0xf]
      %v1170 = vld [vmem:[%s1168 + $0x8] sm:$0xf]
      %v1171 = vld [vmem:[%s1168 + $0x10] sm:$0xf]
      %v1172 = vld [vmem:[%s1168 + $0x18] sm:$0xf]
      %v1173 = vld [vmem:[%s1168 + $0x20] sm:$0xf]
      %v1174 = vld [vmem:[%s1168 + $0x28] sm:$0xf]
      %v1175 = vld [vmem:[%s1168 + $0x30] sm:$0xf]
      %v1176 = vld [vmem:[%s1168 + $0x38] sm:$0xf]
      %s1177 = scalar_lea.vmem %s1, 24
      %v1178 = vld [vmem:[%s1177] sm:$0xf]
      %v1187 = vunpack.c.l.b16 %v1169
      %v1188 = vunpack.c.l.b16 %v1170
      %v1189 = vunpack.c.l.b16 %v1171
      %v1190 = vunpack.c.l.b16 %v1172
      %v1191 = vunpack.c.l.b16 %v1173
      %v1192 = vunpack.c.l.b16 %v1174
      %v1193 = vunpack.c.l.b16 %v1175
      %v1194 = vunpack.c.l.b16 %v1176
      %v1195 = vpack.c.b16 %v1188, %v1187
      %v1196 = vpack.c.b16 %v1190, %v1189
      %v1197 = vpack.c.b16 %v1192, %v1191
      %v1198 = vpack.c.b16 %v1194, %v1193
      %v1200 = vsel %vm318, %v1195, 0
      %v1203 = vsel %vm318, %v1196, 0
      %v1206 = vsel %vm318, %v1197, 0
      %v1209 = vsel %vm318, %v1198, 0
      %v1212 = vsel %vm331, %v1178, 0
      %1214 = vmatprep.subr.bf16.mxu0 0
      %1215 = vmatpush1.bf16.msra.mxu0 %v1212
      %1216 = vmatprep.subr.bf16.mxu0 0
      %1217 = vmatpush1.bf16.msra.mxu0 0
      %1218 = vmatprep.subr.bf16.mxu0 0
      %1219 = vmatpush1.bf16.msra.mxu0 0
      %1220 = vmatprep.subr.bf16.mxu0 0
      %1221 = vmatpush1.bf16.msra.mxu0 0
      %1222 = vmatprep.subr.bf16.mxu0 0
      %1223 = vmatpush1.bf16.msra.mxu0 0
      %1224 = vmatprep.subr.bf16.mxu0 0
      %1225 = vmatpush1.bf16.msra.mxu0 0
      %1226 = vmatprep.subr.bf16.mxu0 0
      %1227 = vmatpush1.bf16.msra.mxu0 0
      %1228 = vmatprep.subr.bf16.mxu0 0
      %1229 = vmatpush1.bf16.msra.mxu0 0
      %1230 = vmatprep.subr.bf16.mxu0 0
      %1231 = vmatpush1.bf16.msra.mxu0 0
      %1232 = vmatprep.subr.bf16.mxu0 0
      %1233 = vmatpush1.bf16.msra.mxu0 0
      %1234 = vmatprep.subr.bf16.mxu0 0
      %1235 = vmatpush1.bf16.msra.mxu0 0
      %1236 = vmatprep.subr.bf16.mxu0 0
      %1237 = vmatpush1.bf16.msra.mxu0 0
      %1238 = vmatprep.subr.bf16.mxu0 0
      %1239 = vmatpush1.bf16.msra.mxu0 0
      %1240 = vmatprep.subr.bf16.mxu0 0
      %1241 = vmatpush1.bf16.msra.mxu0 0
      %1242 = vmatprep.subr.bf16.mxu0 0
      %1243 = vmatpush1.bf16.msra.mxu0 0
      %1244 = vmatprep.subr.bf16.mxu0 0
      %1245 = vmatpush1.bf16.msra.mxu0 0
      %1246 = vmatprep.mubr.bf16.mxu0 0
      %1247 = vmatmul.mubr.bf16.gmra.mrb[0].mxu0 %v1200
      %v1248 = vpop.f32.mrb[0].mxu0
      %v1249 = vadd.f32 0.0, %v1248
      %v1250 = vpop.f32.mrb[0].mxu0
      %v1251 = vpop.f32.mrb[0].mxu0
      %v1252 = vadd.f32 0.0, %v1251
      %v1253 = vpop.f32.mrb[0].mxu0
      %1254 = vmatprep.mubr.bf16.mxu0 0
      %1255 = vmatmul.mubr.bf16.gmra.mrb[0].mxu0 %v1203
      %v1256 = vpop.f32.mrb[0].mxu0
      %v1257 = vadd.f32 0.0, %v1256
      %v1258 = vpop.f32.mrb[0].mxu0
      %v1259 = vpop.f32.mrb[0].mxu0
      %v1260 = vadd.f32 0.0, %v1259
      %v1261 = vpop.f32.mrb[0].mxu0
      %1262 = vmatprep.mubr.bf16.mxu0 0
      %1263 = vmatmul.mubr.bf16.gmra.mrb[0].mxu0 %v1206
      %v1264 = vpop.f32.mrb[0].mxu0
      %v1265 = vadd.f32 0.0, %v1264
      %v1266 = vpop.f32.mrb[0].mxu0
      %v1267 = vpop.f32.mrb[0].mxu0
      %v1268 = vadd.f32 0.0, %v1267
      %v1269 = vpop.f32.mrb[0].mxu0
      %1270 = vmatprep.mubr.bf16.mxu0 0
      %1271 = vmatmul.mubr.bf16.gmra.mrb[0].mxu0 %v1209
      %v1272 = vpop.f32.mrb[0].mxu0
      %v1273 = vadd.f32 0.0, %v1272
      %v1274 = vpop.f32.mrb[0].mxu0
      %v1275 = vpop.f32.mrb[0].mxu0
      %v1276 = vadd.f32 0.0, %v1275
      %v1277 = vpop.f32.mrb[0].mxu0
      %1278 = vdwg.mxu0
      %v1279 = vadd.f32 %v1160, %v1249
      %v1280 = vadd.f32 %v1161, %v1252
      %v1281 = vadd.f32 %v1162, %v1257
      %v1282 = vadd.f32 %v1163, %v1260
      %v1283 = vadd.f32 %v1164, %v1265
      %v1284 = vadd.f32 %v1165, %v1268
      %v1285 = vadd.f32 %v1166, %v1273
      %v1286 = vadd.f32 %v1167, %v1276
      %v1287 = vld [vmem:[%s1168] sm:$0xf]
      %v1288 = vld [vmem:[%s1168 + $0x4] sm:$0x1]
      %v1289 = vld [vmem:[%s1168 + $0x8] sm:$0xf]
      %v1290 = vld [vmem:[%s1168 + $0xc] sm:$0x1]
      %v1291 = vld [vmem:[%s1168 + $0x10] sm:$0xf]
      %v1292 = vld [vmem:[%s1168 + $0x14] sm:$0x1]
      %v1293 = vld [vmem:[%s1168 + $0x18] sm:$0xf]
      %v1294 = vld [vmem:[%s1168 + $0x1c] sm:$0x1]
      %v1295 = vld [vmem:[%s1168 + $0x20] sm:$0xf]
      %v1296 = vld [vmem:[%s1168 + $0x24] sm:$0x1]
      %v1297 = vld [vmem:[%s1168 + $0x28] sm:$0xf]
      %v1298 = vld [vmem:[%s1168 + $0x2c] sm:$0x1]
      %v1299 = vld [vmem:[%s1168 + $0x30] sm:$0xf]
      %v1300 = vld [vmem:[%s1168 + $0x34] sm:$0x1]
      %v1301 = vld [vmem:[%s1168 + $0x38] sm:$0xf]
      %v1302 = vld [vmem:[%s1168 + $0x3c] sm:$0x1]
      %v1304 = vshrl.u32 %v1287, 16
      %v1306 = vrot.slane %v1304, 4
      %v1307 = vshll.u32 %v1287, 16
      %v1309 = vrot.slane %v1307, 5
      %v1310 = vor.u32 %v1306, %v1309
      %v1311 = vrot.slane %v1310, 4
      %v1313 = vshll.u32 %v1288, 16
      %v1315 = vrot.slane %v1313, 5
      %v1316 = vsel %vm191, %v1311, %v1315
      %v1318 = vshrl.u32 %v1289, 16
      %v1320 = vrot.slane %v1318, 4
      %v1321 = vshll.u32 %v1289, 16
      %v1323 = vrot.slane %v1321, 5
      %v1324 = vor.u32 %v1320, %v1323
      %v1325 = vrot.slane %v1324, 4
      %v1327 = vshll.u32 %v1290, 16
      %v1329 = vrot.slane %v1327, 5
      %v1330 = vsel %vm191, %v1325, %v1329
      %v1332 = vshrl.u32 %v1291, 16
      %v1334 = vrot.slane %v1332, 4
      %v1335 = vshll.u32 %v1291, 16
      %v1337 = vrot.slane %v1335, 5
      %v1338 = vor.u32 %v1334, %v1337
      %v1339 = vrot.slane %v1338, 4
      %v1341 = vshll.u32 %v1292, 16
      %v1343 = vrot.slane %v1341, 5
      %v1344 = vsel %vm191, %v1339, %v1343
      %v1346 = vshrl.u32 %v1293, 16
      %v1348 = vrot.slane %v1346, 4
      %v1349 = vshll.u32 %v1293, 16
      %v1351 = vrot.slane %v1349, 5
      %v1352 = vor.u32 %v1348, %v1351
      %v1353 = vrot.slane %v1352, 4
      %v1355 = vshll.u32 %v1294, 16
      %v1357 = vrot.slane %v1355, 5
      %v1358 = vsel %vm191, %v1353, %v1357
      %v1360 = vshrl.u32 %v1295, 16
      %v1362 = vrot.slane %v1360, 4
      %v1363 = vshll.u32 %v1295, 16
      %v1365 = vrot.slane %v1363, 5
      %v1366 = vor.u32 %v1362, %v1365
      %v1367 = vrot.slane %v1366, 4
      %v1369 = vshll.u32 %v1296, 16
      %v1371 = vrot.slane %v1369, 5
      %v1372 = vsel %vm191, %v1367, %v1371
      %v1374 = vshrl.u32 %v1297, 16
      %v1376 = vrot.slane %v1374, 4
      %v1377 = vshll.u32 %v1297, 16
      %v1379 = vrot.slane %v1377, 5
      %v1380 = vor.u32 %v1376, %v1379
      %v1381 = vrot.slane %v1380, 4
      %v1383 = vshll.u32 %v1298, 16
      %v1385 = vrot.slane %v1383, 5
      %v1386 = vsel %vm191, %v1381, %v1385
      %v1388 = vshrl.u32 %v1299, 16
      %v1390 = vrot.slane %v1388, 4
      %v1391 = vshll.u32 %v1299, 16
      %v1393 = vrot.slane %v1391, 5
      %v1394 = vor.u32 %v1390, %v1393
      %v1395 = vrot.slane %v1394, 4
      %v1397 = vshll.u32 %v1300, 16
      %v1399 = vrot.slane %v1397, 5
      %v1400 = vsel %vm191, %v1395, %v1399
      %v1402 = vshrl.u32 %v1301, 16
      %v1404 = vrot.slane %v1402, 4
      %v1405 = vshll.u32 %v1301, 16
      %v1407 = vrot.slane %v1405, 5
      %v1408 = vor.u32 %v1404, %v1407
      %v1409 = vrot.slane %v1408, 4
      %v1411 = vshll.u32 %v1302, 16
      %v1413 = vrot.slane %v1411, 5
      %v1414 = vsel %vm191, %v1409, %v1413
      %s1415 = scalar_lea.vmem %s1, 28
      %v1416 = vld [vmem:[%s1415] sm:$0xf]
      %v1417 = vunpack.c.l.b16 %v1316
      %v1418 = vunpack.c.l.b16 %v1330
      %v1419 = vunpack.c.l.b16 %v1344
      %v1420 = vunpack.c.l.b16 %v1358
      %v1421 = vunpack.c.l.b16 %v1372
      %v1422 = vunpack.c.l.b16 %v1386
      %v1423 = vunpack.c.l.b16 %v1400
      %v1424 = vunpack.c.l.b16 %v1414
      %v1425 = vpack.c.b16 %v1418, %v1417
      %v1426 = vpack.c.b16 %v1420, %v1419
      %v1427 = vpack.c.b16 %v1422, %v1421
      %v1428 = vpack.c.b16 %v1424, %v1423
      %v1430 = vsel %vm318, %v1425, 0
      %v1433 = vsel %vm318, %v1426, 0
      %v1436 = vsel %vm318, %v1427, 0
      %v1439 = vsel %vm318, %v1428, 0
      %v1442 = vsel %vm331, %v1416, 0
      %1444 = vmatprep.subr.bf16.mxu0 0
      %1445 = vmatpush1.bf16.msra.mxu0 %v1442
      %1446 = vmatprep.subr.bf16.mxu0 0
      %1447 = vmatpush1.bf16.msra.mxu0 0
      %1448 = vmatprep.subr.bf16.mxu0 0
      %1449 = vmatpush1.bf16.msra.mxu0 0
      %1450 = vmatprep.subr.bf16.mxu0 0
      %1451 = vmatpush1.bf16.msra.mxu0 0
      %1452 = vmatprep.subr.bf16.mxu0 0
      %1453 = vmatpush1.bf16.msra.mxu0 0
      %1454 = vmatprep.subr.bf16.mxu0 0
      %1455 = vmatpush1.bf16.msra.mxu0 0
      %1456 = vmatprep.subr.bf16.mxu0 0
      %1457 = vmatpush1.bf16.msra.mxu0 0
      %1458 = vmatprep.subr.bf16.mxu0 0
      %1459 = vmatpush1.bf16.msra.mxu0 0
      %1460 = vmatprep.subr.bf16.mxu0 0
      %1461 = vmatpush1.bf16.msra.mxu0 0
      %1462 = vmatprep.subr.bf16.mxu0 0
      %1463 = vmatpush1.bf16.msra.mxu0 0
      %1464 = vmatprep.subr.bf16.mxu0 0
      %1465 = vmatpush1.bf16.msra.mxu0 0
      %1466 = vmatprep.subr.bf16.mxu0 0
      %1467 = vmatpush1.bf16.msra.mxu0 0
      %1468 = vmatprep.subr.bf16.mxu0 0
      %1469 = vmatpush1.bf16.msra.mxu0 0
      %1470 = vmatprep.subr.bf16.mxu0 0
      %1471 = vmatpush1.bf16.msra.mxu0 0
      %1472 = vmatprep.subr.bf16.mxu0 0
      %1473 = vmatpush1.bf16.msra.mxu0 0
      %1474 = vmatprep.subr.bf16.mxu0 0
      %1475 = vmatpush1.bf16.msra.mxu0 0
      %1476 = vmatprep.mubr.bf16.mxu0 0
      %1477 = vmatmul.mubr.bf16.gmra.mrb[0].mxu0 %v1430
      %v1478 = vpop.f32.mrb[0].mxu0
      %v1479 = vadd.f32 0.0, %v1478
      %v1480 = vpop.f32.mrb[0].mxu0
      %v1481 = vpop.f32.mrb[0].mxu0
      %v1482 = vadd.f32 0.0, %v1481
      %v1483 = vpop.f32.mrb[0].mxu0
      %1484 = vmatprep.mubr.bf16.mxu0 0
      %1485 = vmatmul.mubr.bf16.gmra.mrb[0].mxu0 %v1433
      %v1486 = vpop.f32.mrb[0].mxu0
      %v1487 = vadd.f32 0.0, %v1486
      %v1488 = vpop.f32.mrb[0].mxu0
      %v1489 = vpop.f32.mrb[0].mxu0
      %v1490 = vadd.f32 0.0, %v1489
      %v1491 = vpop.f32.mrb[0].mxu0
      %1492 = vmatprep.mubr.bf16.mxu0 0
      %1493 = vmatmul.mubr.bf16.gmra.mrb[0].mxu0 %v1436
      %v1494 = vpop.f32.mrb[0].mxu0
      %v1495 = vadd.f32 0.0, %v1494
      %v1496 = vpop.f32.mrb[0].mxu0
      %v1497 = vpop.f32.mrb[0].mxu0
      %v1498 = vadd.f32 0.0, %v1497
      %v1499 = vpop.f32.mrb[0].mxu0
      %1500 = vmatprep.mubr.bf16.mxu0 0
      %1501 = vmatmul.mubr.bf16.gmra.mrb[0].mxu0 %v1439
      %v1502 = vpop.f32.mrb[0].mxu0
      %v1503 = vadd.f32 0.0, %v1502
      %v1504 = vpop.f32.mrb[0].mxu0
      %v1505 = vpop.f32.mrb[0].mxu0
      %v1506 = vadd.f32 0.0, %v1505
      %v1507 = vpop.f32.mrb[0].mxu0
      %1508 = vdwg.mxu0
      %v1509 = vadd.f32 %v1279, %v1479
      %v1510 = vadd.f32 %v1280, %v1482
      %v1511 = vadd.f32 %v1281, %v1487
      %v1512 = vadd.f32 %v1282, %v1490
      %v1513 = vadd.f32 %v1283, %v1495
      %v1514 = vadd.f32 %v1284, %v1498
      %v1515 = vadd.f32 %v1285, %v1503
      %v1516 = vadd.f32 %v1286, %v1506
      %v1517 = vld [vmem:[%s1168] sm:$0xe]
      %v1518 = vld [vmem:[%s1168 + $0x8] sm:$0xe]
      %v1519 = vld [vmem:[%s1168 + $0x10] sm:$0xe]
      %v1520 = vld [vmem:[%s1168 + $0x18] sm:$0xe]
      %v1521 = vld [vmem:[%s1168 + $0x20] sm:$0xe]
      %v1522 = vld [vmem:[%s1168 + $0x28] sm:$0xe]
      %v1523 = vld [vmem:[%s1168 + $0x30] sm:$0xe]
      %v1524 = vld [vmem:[%s1168 + $0x38] sm:$0xe]
      %v1541 = vrot.slane %v1517, 5
      %v1542 = vrot.slane %v1541, 4
      %v1543 = vrot.slane %v1288, 5
      %v1544 = vsel %vm526, %v1542, %v1543
      %v1545 = vrot.slane %v1518, 5
      %v1546 = vrot.slane %v1545, 4
      %v1547 = vrot.slane %v1290, 5
      %v1548 = vsel %vm526, %v1546, %v1547
      %v1549 = vrot.slane %v1519, 5
      %v1550 = vrot.slane %v1549, 4
      %v1551 = vrot.slane %v1292, 5
      %v1552 = vsel %vm526, %v1550, %v1551
      %v1553 = vrot.slane %v1520, 5
      %v1554 = vrot.slane %v1553, 4
      %v1555 = vrot.slane %v1294, 5
      %v1556 = vsel %vm526, %v1554, %v1555
      %v1557 = vrot.slane %v1521, 5
      %v1558 = vrot.slane %v1557, 4
      %v1559 = vrot.slane %v1296, 5
      %v1560 = vsel %vm526, %v1558, %v1559
      %v1561 = vrot.slane %v1522, 5
      %v1562 = vrot.slane %v1561, 4
      %v1563 = vrot.slane %v1298, 5
      %v1564 = vsel %vm526, %v1562, %v1563
      %v1565 = vrot.slane %v1523, 5
      %v1566 = vrot.slane %v1565, 4
      %v1567 = vrot.slane %v1300, 5
      %v1568 = vsel %vm526, %v1566, %v1567
      %v1569 = vrot.slane %v1524, 5
      %v1570 = vrot.slane %v1569, 4
      %v1571 = vrot.slane %v1302, 5
      %v1572 = vsel %vm526, %v1570, %v1571
      %s1573 = scalar_lea.vmem %s1, 32
      %v1574 = vld [vmem:[%s1573] sm:$0xf]
      %v1575 = vunpack.c.l.b16 %v1544
      %v1576 = vunpack.c.l.b16 %v1548
      %v1577 = vunpack.c.l.b16 %v1552
      %v1578 = vunpack.c.l.b16 %v1556
      %v1579 = vunpack.c.l.b16 %v1560
      %v1580 = vunpack.c.l.b16 %v1564
      %v1581 = vunpack.c.l.b16 %v1568
      %v1582 = vunpack.c.l.b16 %v1572
      %v1583 = vpack.c.b16 %v1576, %v1575
      %v1584 = vpack.c.b16 %v1578, %v1577
      %v1585 = vpack.c.b16 %v1580, %v1579
      %v1586 = vpack.c.b16 %v1582, %v1581
      %v1588 = vsel %vm318, %v1583, 0
      %v1591 = vsel %vm318, %v1584, 0
      %v1594 = vsel %vm318, %v1585, 0
      %v1597 = vsel %vm318, %v1586, 0
      %v1600 = vsel %vm331, %v1574, 0
      %1602 = vmatprep.subr.bf16.mxu0 0
      %1603 = vmatpush1.bf16.msra.mxu0 %v1600
      %1604 = vmatprep.subr.bf16.mxu0 0
      %1605 = vmatpush1.bf16.msra.mxu0 0
      %1606 = vmatprep.subr.bf16.mxu0 0
      %1607 = vmatpush1.bf16.msra.mxu0 0
      %1608 = vmatprep.subr.bf16.mxu0 0
      %1609 = vmatpush1.bf16.msra.mxu0 0
      %1610 = vmatprep.subr.bf16.mxu0 0
      %1611 = vmatpush1.bf16.msra.mxu0 0
      %1612 = vmatprep.subr.bf16.mxu0 0
      %1613 = vmatpush1.bf16.msra.mxu0 0
      %1614 = vmatprep.subr.bf16.mxu0 0
      %1615 = vmatpush1.bf16.msra.mxu0 0
      %1616 = vmatprep.subr.bf16.mxu0 0
      %1617 = vmatpush1.bf16.msra.mxu0 0
      %1618 = vmatprep.subr.bf16.mxu0 0
      %1619 = vmatpush1.bf16.msra.mxu0 0
      %1620 = vmatprep.subr.bf16.mxu0 0
      %1621 = vmatpush1.bf16.msra.mxu0 0
      %1622 = vmatprep.subr.bf16.mxu0 0
      %1623 = vmatpush1.bf16.msra.mxu0 0
      %1624 = vmatprep.subr.bf16.mxu0 0
      %1625 = vmatpush1.bf16.msra.mxu0 0
      %1626 = vmatprep.subr.bf16.mxu0 0
      %1627 = vmatpush1.bf16.msra.mxu0 0
      %1628 = vmatprep.subr.bf16.mxu0 0
      %1629 = vmatpush1.bf16.msra.mxu0 0
      %1630 = vmatprep.subr.bf16.mxu0 0
      %1631 = vmatpush1.bf16.msra.mxu0 0
      %1632 = vmatprep.subr.bf16.mxu0 0
      %1633 = vmatpush1.bf16.msra.mxu0 0
      %1634 = vmatprep.mubr.bf16.mxu0 0
      %1635 = vmatmul.mubr.bf16.gmra.mrb[0].mxu0 %v1588
      %v1636 = vpop.f32.mrb[0].mxu0
      %v1637 = vadd.f32 0.0, %v1636
      %v1638 = vpop.f32.mrb[0].mxu0
      %v1639 = vpop.f32.mrb[0].mxu0
      %v1640 = vadd.f32 0.0, %v1639
      %v1641 = vpop.f32.mrb[0].mxu0
      %1642 = vmatprep.mubr.bf16.mxu0 0
      %1643 = vmatmul.mubr.bf16.gmra.mrb[0].mxu0 %v1591
      %v1644 = vpop.f32.mrb[0].mxu0
      %v1645 = vadd.f32 0.0, %v1644
      %v1646 = vpop.f32.mrb[0].mxu0
      %v1647 = vpop.f32.mrb[0].mxu0
      %v1648 = vadd.f32 0.0, %v1647
      %v1649 = vpop.f32.mrb[0].mxu0
      %1650 = vmatprep.mubr.bf16.mxu0 0
      %1651 = vmatmul.mubr.bf16.gmra.mrb[0].mxu0 %v1594
      %v1652 = vpop.f32.mrb[0].mxu0
      %v1653 = vadd.f32 0.0, %v1652
      %v1654 = vpop.f32.mrb[0].mxu0
      %v1655 = vpop.f32.mrb[0].mxu0
      %v1656 = vadd.f32 0.0, %v1655
      %v1657 = vpop.f32.mrb[0].mxu0
      %1658 = vmatprep.mubr.bf16.mxu0 0
      %1659 = vmatmul.mubr.bf16.gmra.mrb[0].mxu0 %v1597
      %v1660 = vpop.f32.mrb[0].mxu0
      %v1661 = vadd.f32 0.0, %v1660
      %v1662 = vpop.f32.mrb[0].mxu0
      %v1663 = vpop.f32.mrb[0].mxu0
      %v1664 = vadd.f32 0.0, %v1663
      %v1665 = vpop.f32.mrb[0].mxu0
      %1666 = vdwg.mxu0
      %v1667 = vadd.f32 %v1509, %v1637
      %v1668 = vadd.f32 %v1510, %v1640
      %v1669 = vadd.f32 %v1511, %v1645
      %v1670 = vadd.f32 %v1512, %v1648
      %v1671 = vadd.f32 %v1513, %v1653
      %v1672 = vadd.f32 %v1514, %v1656
      %v1673 = vadd.f32 %v1515, %v1661
      %v1674 = vadd.f32 %v1516, %v1664
      %v1675 = vld [vmem:[%s2] sm:$0x1]
      %v1676 = vld [vmem:[%s2 + $0x1] sm:$0x1]
      %v1677 = vlaneseq
      %v1678 = vshrl.u32 %v1677, 7
      %v1679 = vsub.s32 0, %v1678
      %v1680 = vrot.slane %v1675, %v1679
      %v1681 = vadd.f32 %v1667, %v1680
      %v1682 = vadd.f32 %v1668, %v1680
      %v1683 = vadd.f32 %v1669, %v1680
      %v1684 = vadd.f32 %v1670, %v1680
      %v1685 = vadd.f32 %v1671, %v1680
      %v1686 = vadd.f32 %v1672, %v1680
      %v1687 = vadd.f32 %v1673, %v1680
      %v1688 = vadd.f32 %v1674, %v1680
      %vm1689 = vcmp.ge.f32.partialorder %v1681, 0.0
      %vm1690 = vcmp.ge.f32.partialorder %v1682, 0.0
      %vm1691 = vcmp.ge.f32.partialorder %v1683, 0.0
      %vm1692 = vcmp.ge.f32.partialorder %v1684, 0.0
      %vm1693 = vcmp.ge.f32.partialorder %v1685, 0.0
      %vm1694 = vcmp.ge.f32.partialorder %v1686, 0.0
      %vm1695 = vcmp.ge.f32.partialorder %v1687, 0.0
      %vm1696 = vcmp.ge.f32.partialorder %v1688, 0.0
      %v1697 = vlaneseq
      %v1698 = vshrl.u32 %v1697, 7
      %v1699 = vsub.s32 0, %v1698
      %v1700 = vrot.slane %v1676, %v1699
      %v1701 = vmul.f32 %v1681, %v1700
      %v1702 = vmul.f32 %v1682, %v1700
      %v1703 = vmul.f32 %v1683, %v1700
      %v1704 = vmul.f32 %v1684, %v1700
      %v1705 = vmul.f32 %v1685, %v1700
      %v1706 = vmul.f32 %v1686, %v1700
      %v1707 = vmul.f32 %v1687, %v1700
      %v1708 = vmul.f32 %v1688, %v1700
      %v1709 = vsel %vm1689, %v1681, %v1701
      %v1710 = vsel %vm1690, %v1682, %v1702
      %v1711 = vsel %vm1691, %v1683, %v1703
      %v1712 = vsel %vm1692, %v1684, %v1704
      %v1713 = vsel %vm1693, %v1685, %v1705
      %v1714 = vsel %vm1694, %v1686, %v1706
      %v1715 = vsel %vm1695, %v1687, %v1707
      %v1716 = vsel %vm1696, %v1688, %v1708
      %v1717 = vpack.c.bf16 %v1709, %v1709
      %v1718 = vpack.c.bf16 %v1710, %v1710
      %v1719 = vpack.c.bf16 %v1711, %v1711
      %v1720 = vpack.c.bf16 %v1712, %v1712
      %v1721 = vpack.c.bf16 %v1713, %v1713
      %v1722 = vpack.c.bf16 %v1714, %v1714
      %v1723 = vpack.c.bf16 %v1715, %v1715
      %v1724 = vpack.c.bf16 %v1716, %v1716
      %vm1725 = vcmask 60416
      %1726 = vst.msk [vmem:[%s170] sm:$0xf] %vm1725, %v1717
      %1727 = vst.msk [vmem:[%s170 + $0x4] sm:$0xf] %vm1725, %v1718
      %1728 = vst.msk [vmem:[%s170 + $0x8] sm:$0xf] %vm1725, %v1719
      %1729 = vst.msk [vmem:[%s170 + $0xc] sm:$0xf] %vm1725, %v1720
      %1730 = vst.msk [vmem:[%s170 + $0x10] sm:$0xf] %vm1725, %v1721
      %1731 = vst.msk [vmem:[%s170 + $0x14] sm:$0xf] %vm1725, %v1722
      %1732 = vst.msk [vmem:[%s170 + $0x18] sm:$0xf] %vm1725, %v1723
      %1733 = vst.msk [vmem:[%s170 + $0x1c] sm:$0xf] %vm1725, %v1724
      %p1734 = scmp.lt.s32.totalorder %s14, 1
      %s1735 = scalar_select %p1734, %s14, 1
      %s1736 = smul.addr %s1735, 8
      %s1737 = smul.addr %s1736, 4
      %s1738 = scalar_lea.vmem %s3, %s1737
      // Predicated region
      $region33: #{conv2n_forward.5} parent=31 // pred_check
        %p1739 = pneg %p100
      $region34: #{conv2n_forward.5} parent=31 // pred_check_branch
        %1741 = sbr.rel (%p1739) target = $region36
      $region35: #{conv2n_forward.5} parent=31 // pred_region
        _
      $region36: #{conv2n_forward.5} parent=31 // pred_fallthru
        _
    $region32: #{conv2n_forward.5} parent=5 // pred_fallthru
      _
    %p1742 = scmp.le.s32.totalorder 2, %s9
    // Predicated region
    $region37: #{conv2n_forward.5} parent=5 // pred_check
      %p1743 = pneg %p1742
    $region38: #{conv2n_forward.5} parent=5 // pred_check_branch
      %1745 = sbr.rel (%p1743) target = $region40
    $region39: #{conv2n_forward.5} parent=5 // pred_region
      %s1746 = ssub.s32 %s9, 2
      // Predicated region
      $region41: #{conv2n_forward.5} parent=39 // pred_check
        %p1747 = pneg %p106
      $region42: #{conv2n_forward.5} parent=39 // pred_check_branch
        %1749 = sbr.rel (%p1747) target = $region44
      $region43: #{conv2n_forward.5} parent=39 // pred_region
        %p1750 = scmp.lt.s32.totalorder %s15, 1
        %s1751 = scalar_select %p1750, %s15, 1
        %s1752 = smul.addr %s1751, 8
        %s1753 = smul.addr %s1752, 4
        %s1754 = scalar_lea.vmem %s3, %s1753
      $region44: #{conv2n_forward.5} parent=39 // pred_fallthru
        _
    $region40: #{conv2n_forward.5} parent=5 // pred_fallthru
      _
  $region6: #{conv2n_forward.5} parent=0 // loop_footer
    %s13 = sadd.s32 1, %s9
  $region7: #{conv2n_forward.5} parent=0 // loop_footer_branch
    %8 = sbr.rel target = $region3
  $region8: #{conv2n_forward.5} parent=0 // loop_exit
    _

// kernel: conv2n_forward.4
$region0: #{conv2n_forward.4}
  #allocation0 [shape = 'u32[]', space=smem, size = 0x4, offset = 0x4, fixed_abs, tag = 'smem constant byte address 0x4 - core index']
  #allocation1 [shape = 'u32[144,128]{1,0:T(1,128)}', space=vmem, size = 0x12000, scoped, tag = 'internal scratch']
  %s0 = inlined_call_operand.vmem [shape: bf16[8,9,9,8], index: 0, kind: input, shape index: {}]
  %s1 = inlined_call_operand.vmem [shape: bf16[9,8,8], index: 1, kind: input, shape index: {}]
  %s2 = inlined_call_operand.vmem [shape: f32[2,8], index: 2, kind: input, shape index: {}]
  %s3 = inlined_call_operand.vmem [shape: bf16[2,8,8,8], index: 3, kind: output, shape index: {}]
  %s4 = sld [smem:[#allocation0]]
  $region45: #{conv2n_forward.4} parent=0
    _
  %s6 = ssub.s32 1, %s4
  %s7 = scalar_select 0, %s6, %s4
  loop: start=0, step=1, limit=4
  $region2: #{conv2n_forward.4} parent=0 // loop_pre_header
    _
  $region3: #{conv2n_forward.4} parent=0 // loop_header
    %s9 = sphi 0, %s13
    %p10 = scmp.ge.s32.totalorder %s9, 4
    %s19 = sphi 0, %s21
    %s22 = sphi 0, %s19
    %s23 = sphi 0, %s22
    %s39 = sphi 0, %s23
    %s43 = sphi 0, %s43
    %s45 = sphi 0, %s43
    %s46 = sphi 0, %s45
    %s60 = sphi 0, %s46
    %s64 = sphi 0, %s64
    %s66 = sphi 0, %s64
    %s67 = sphi 0, %s66
    %s81 = sphi 0, %s67
    %s87 = sphi 0, %s89
    %s90 = sphi 0, %s87
    %s91 = sphi 0, %s90
    %s107 = sphi 0, %s91
  $region4: #{conv2n_forward.4} parent=0 // loop_header_branch
    %12 = sbr.rel (%p10) target = $region8
  $region5: #{conv2n_forward.4} parent=0 // loop_body
    %s14 = ssub.s32 %s9, 1
    %s15 = ssub.s32 %s9, 2
    %s16 = sadd.s32 %s9, 1
    %s17 = ssub.s32 %s9, %s16
    %p18 = scmp.eq.s32.totalorder %s17, 0
    %s20 = sadd.s32 %s19, 1
    %s21 = scalar_select %p18, %s19, %s20
    %p24 = pneg %p18
    %p25 = scmp.eq.s32.totalorder %s9, 1
    %p26 = por %p24, %p25
    %p27 = scmp.ne.s32.totalorder %s19, %s22
    %p28 = scmp.eq.s32.totalorder %s9, 0
    %p29 = por %p27, %p28
    %p30 = scmp.ne.s32.totalorder %s19, %s22
    %p31 = scmp.eq.s32.totalorder %s14, 1
    %p32 = por %p30, %p31
    %p33 = scmp.ne.s32.totalorder %s22, %s23
    %p34 = scmp.eq.s32.totalorder %s14, 0
    %p35 = por %p33, %p34
    %p36 = scmp.ne.s32.totalorder %s22, %s23
    %p37 = scmp.eq.s32.totalorder %s15, 1
    %p38 = por %p36, %p37
    %p40 = scmp.ne.s32.totalorder %s23, %s39
    %p41 = scmp.eq.s32.totalorder %s15, 0
    %p42 = por %p40, %p41
    %s44 = sadd.s32 %s43, 1
    %p47 = scmp.eq.s32.totalorder %s9, 1
    %p48 = scmp.ne.s32.totalorder %s43, %s45
    %p49 = scmp.eq.s32.totalorder %s9, 0
    %p50 = por %p48, %p49
    %p51 = scmp.ne.s32.totalorder %s43, %s45
    %p52 = scmp.eq.s32.totalorder %s14, 1
    %p53 = por %p51, %p52
    %p54 = scmp.ne.s32.totalorder %s45, %s46
    %p55 = scmp.eq.s32.totalorder %s14, 0
    %p56 = por %p54, %p55
    %p57 = scmp.ne.s32.totalorder %s45, %s46
    %p58 = scmp.eq.s32.totalorder %s15, 1
    %p59 = por %p57, %p58
    %p61 = scmp.ne.s32.totalorder %s46, %s60
    %p62 = scmp.eq.s32.totalorder %s15, 0
    %p63 = por %p61, %p62
    %s65 = sadd.s32 %s64, 1
    %p68 = scmp.eq.s32.totalorder %s9, 1
    %p69 = scmp.ne.s32.totalorder %s64, %s66
    %p70 = scmp.eq.s32.totalorder %s9, 0
    %p71 = por %p69, %p70
    %p72 = scmp.ne.s32.totalorder %s64, %s66
    %p73 = scmp.eq.s32.totalorder %s14, 1
    %p74 = por %p72, %p73
    %p75 = scmp.ne.s32.totalorder %s66, %s67
    %p76 = scmp.eq.s32.totalorder %s14, 0
    %p77 = por %p75, %p76
    %p78 = scmp.ne.s32.totalorder %s66, %s67
    %p79 = scmp.eq.s32.totalorder %s15, 1
    %p80 = por %p78, %p79
    %p82 = scmp.ne.s32.totalorder %s67, %s81
    %p83 = scmp.eq.s32.totalorder %s15, 0
    %p84 = por %p82, %p83
    %s85 = ssub.s32 %s9, %s16
    %p86 = scmp.eq.s32.totalorder %s85, 0
    %s88 = sadd.s32 %s87, 1
    %s89 = scalar_select %p86, %s87, %s88
    %p92 = pneg %p86
    %p93 = scmp.eq.s32.totalorder %s9, 1
    %p94 = por %p92, %p93
    %p95 = scmp.ne.s32.totalorder %s87, %s90
    %p96 = scmp.eq.s32.totalorder %s9, 0
    %p97 = por %p95, %p96
    %p98 = scmp.ne.s32.totalorder %s87, %s90
    %p99 = scmp.eq.s32.totalorder %s14, 1
    %p100 = por %p98, %p99
    %p101 = scmp.ne.s32.totalorder %s90, %s91
    %p102 = scmp.eq.s32.totalorder %s14, 0
    %p103 = por %p101, %p102
    %p104 = scmp.ne.s32.totalorder %s90, %s91
    %p105 = scmp.eq.s32.totalorder %s15, 1
    %p106 = por %p104, %p105
    %p108 = scmp.ne.s32.totalorder %s91, %s107
    %p109 = scmp.eq.s32.totalorder %s15, 0
    %p110 = por %p108, %p109
    %p111 = scmp.le.s32.totalorder 1, %s9
    %p112 = scmp.lt.s32.totalorder %s9, 3
    %p113 = pnand %p111, %p112
    %p114 = pneg %p113
    // Predicated region
    $region9: #{conv2n_forward.4} parent=5 // pred_check
      _
    $region10: #{conv2n_forward.4} parent=5 // pred_check_branch
      %116 = sbr.rel (%p113) target = $region12
    $region11: #{conv2n_forward.4} parent=5 // pred_region
      %s117 = ssub.s32 %s9, 1
      // Predicated region
      $region13: #{conv2n_forward.4} parent=11 // pred_check
        %p118 = pneg %p56
      $region14: #{conv2n_forward.4} parent=11 // pred_check_branch
        %120 = sbr.rel (%p118) target = $region16
      $region15: #{conv2n_forward.4} parent=11 // pred_region
        _
      $region16: #{conv2n_forward.4} parent=11 // pred_fallthru
        _
      // Predicated region
      $region17: #{conv2n_forward.4} parent=11 // pred_check
        %p121 = pneg %p77
      $region18: #{conv2n_forward.4} parent=11 // pred_check_branch
        %123 = sbr.rel (%p121) target = $region20
      $region19: #{conv2n_forward.4} parent=11 // pred_region
        _
      $region20: #{conv2n_forward.4} parent=11 // pred_fallthru
        _
    $region12: #{conv2n_forward.4} parent=5 // pred_fallthru
      _
    %p124 = scmp.lt.s32.totalorder %s9, 2
    // Predicated region
    $region21: #{conv2n_forward.4} parent=5 // pred_check
      %p125 = pneg %p124
    $region22: #{conv2n_forward.4} parent=5 // pred_check_branch
      %127 = sbr.rel (%p125) target = $region24
    $region23: #{conv2n_forward.4} parent=5 // pred_region
      // Predicated region
      $region25: #{conv2n_forward.4} parent=23 // pred_check
        %p128 = pneg %p29
      $region26: #{conv2n_forward.4} parent=23 // pred_check_branch
        %130 = sbr.rel (%p128) target = $region28
      $region27: #{conv2n_forward.4} parent=23 // pred_region
        %s131 = smul.u32 4, %s9
        %p132 = scmp.lt.s32.totalorder %s131, 7
        %s133 = scalar_select %p132, %s131, 7
        %s134 = smul.addr %s133, 18
        %s135 = smul.addr %s134, 4
        %s136 = scalar_lea.vmem %s0, %s135
        %s137 = smul.u32 4, %s9
      $region28: #{conv2n_forward.4} parent=23 // pred_fallthru
        _
    $region24: #{conv2n_forward.4} parent=5 // pred_fallthru
      _
    %p138 = scmp.le.s32.totalorder 1, %s9
    %p139 = scmp.lt.s32.totalorder %s9, 3
    %p140 = pnand %p138, %p139
    %p141 = pneg %p140
    // Predicated region
    $region29: #{conv2n_forward.4} parent=5 // pred_check
      _
    $region30: #{conv2n_forward.4} parent=5 // pred_check_branch
      %143 = sbr.rel (%p140) target = $region32
    $region31: #{conv2n_forward.4} parent=5 // pred_region
      %s144 = ssub.s32 %s9, 1
      %s145 = smul.u32 4, %s14
      %p146 = scmp.lt.s32.totalorder %s145, 7
      %s147 = scalar_select %p146, %s145, 7
      %s148 = smul.addr %s147, 18
      %s149 = smul.addr %s148, 4
      %s150 = scalar_lea.vmem %s0, %s149
      %p151 = pneg %p35
      %p152 = pneg %p32
      %p153 = pneg %p56
      %p154 = pneg %p53
      %p155 = pneg %p77
      %p156 = pneg %p74
      %p157 = pneg %p103
      %p158 = pneg %p100
      %p159 = scmp.lt.s32.totalorder %s14, 1
      %s160 = scalar_select %p159, %s14, 1
      %s161 = smul.addr %s160, 8
      %s162 = smul.addr %s161, 4
      %s163 = scalar_lea.vmem %s3, %s162
      %s164 = smul.u32 4, %s14
      %p165 = scmp.lt.s32.totalorder %s164, 7
      %s166 = scalar_select %p165, %s164, 7
      %s167 = smul.addr %s166, 18
      %s168 = smul.addr %s167, 4
      %s169 = scalar_lea.vmem %s0, %s168
      %s170 = smul.u32 4, %s14
      %p171 = scmp.lt.s32.totalorder %s14, 1
      %s172 = scalar_select %p171, %s14, 1
      %s173 = smul.addr %s172, 8
      %s174 = smul.addr %s173, 4
      %s175 = scalar_lea.vmem %s3, %s174
      %v177 = vld [vmem:[%s169] sm:$0xf]
      %v178 = vld [vmem:[%s169 + $0x8] sm:$0xf]
      %v179 = vld [vmem:[%s169 + $0x10] sm:$0xf]
      %v180 = vld [vmem:[%s169 + $0x18] sm:$0xf]
      %v181 = vld [vmem:[%s169 + $0x20] sm:$0xf]
      %v182 = vld [vmem:[%s169 + $0x28] sm:$0xf]
      %v183 = vld [vmem:[%s169 + $0x30] sm:$0xf]
      %v184 = vld [vmem:[%s169 + $0x38] sm:$0xf]
      %v185 = vld [vmem:[%s1] sm:$0xf]
      %s186 = scalar_lea.vmem %s169, 72
      %v187 = vld [vmem:[%s186] sm:$0xf]
      %v188 = vld [vmem:[%s186 + $0x8] sm:$0xf]
      %v189 = vld [vmem:[%s186 + $0x10] sm:$0xf]
      %v190 = vld [vmem:[%s186 + $0x18] sm:$0xf]
      %v191 = vld [vmem:[%s186 + $0x20] sm:$0xf]
      %v192 = vld [vmem:[%s186 + $0x28] sm:$0xf]
      %v193 = vld [vmem:[%s186 + $0x30] sm:$0xf]
      %v194 = vld [vmem:[%s186 + $0x38] sm:$0xf]
      %s195 = scalar_lea.vmem %s1, 4
      %v196 = vld [vmem:[%s195] sm:$0xf]
      %v205 = vunpack.c.l.b16 %v187
      %v206 = vunpack.c.l.b16 %v188
      %v207 = vunpack.c.l.b16 %v189
      %v208 = vunpack.c.l.b16 %v190
      %v209 = vunpack.c.l.b16 %v191
      %v210 = vunpack.c.l.b16 %v192
      %v211 = vunpack.c.l.b16 %v193
      %v212 = vunpack.c.l.b16 %v194
      %v213 = vpack.c.b16 %v206, %v205
      %v214 = vpack.c.b16 %v208, %v207
      %v215 = vpack.c.b16 %v210, %v209
      %v216 = vpack.c.b16 %v212, %v211
      %vm217 = vcmask 64512
      %v219 = vsel %vm217, %v213, 0
      %v222 = vsel %vm217, %v214, 0
      %v225 = vsel %vm217, %v215, 0
      %v228 = vsel %vm217, %v216, 0
      %vm230 = vcmask 1043456
      %v232 = vsel %vm230, %v196, 0
      %234 = vmatprep.subr.bf16.mxu0 0
      %235 = vmatpush1.bf16.msra.mxu0 %v232
      %236 = vmatprep.subr.bf16.mxu0 0
      %237 = vmatpush1.bf16.msra.mxu0 0
      %238 = vmatprep.subr.bf16.mxu0 0
      %239 = vmatpush1.bf16.msra.mxu0 0
      %240 = vmatprep.subr.bf16.mxu0 0
      %241 = vmatpush1.bf16.msra.mxu0 0
      %242 = vmatprep.subr.bf16.mxu0 0
      %243 = vmatpush1.bf16.msra.mxu0 0
      %244 = vmatprep.subr.bf16.mxu0 0
      %245 = vmatpush1.bf16.msra.mxu0 0
      %246 = vmatprep.subr.bf16.mxu0 0
      %247 = vmatpush1.bf16.msra.mxu0 0
      %248 = vmatprep.subr.bf16.mxu0 0
      %249 = vmatpush1.bf16.msra.mxu0 0
      %250 = vmatprep.subr.bf16.mxu0 0
      %251 = vmatpush1.bf16.msra.mxu0 0
      %252 = vmatprep.subr.bf16.mxu0 0
      %253 = vmatpush1.bf16.msra.mxu0 0
      %254 = vmatprep.subr.bf16.mxu0 0
      %255 = vmatpush1.bf16.msra.mxu0 0
      %256 = vmatprep.subr.bf16.mxu0 0
      %257 = vmatpush1.bf16.msra.mxu0 0
      %258 = vmatprep.subr.bf16.mxu0 0
      %259 = vmatpush1.bf16.msra.mxu0 0
      %260 = vmatprep.subr.bf16.mxu0 0
      %261 = vmatpush1.bf16.msra.mxu0 0
      %262 = vmatprep.subr.bf16.mxu0 0
      %263 = vmatpush1.bf16.msra.mxu0 0
      %264 = vmatprep.subr.bf16.mxu0 0
      %265 = vmatpush1.bf16.msra.mxu0 0
      %266 = vmatprep.mubr.bf16.mxu0 0
      %267 = vmatmul.mubr.bf16.gmra.mrb[0].mxu0 %v219
      %v268 = vpop.f32.mrb[0].mxu0
      %v269 = vadd.f32 0.0, %v268
      %v270 = vpop.f32.mrb[0].mxu0
      %v271 = vpop.f32.mrb[0].mxu0
      %v272 = vadd.f32 0.0, %v271
      %v273 = vpop.f32.mrb[0].mxu0
      %274 = vmatprep.mubr.bf16.mxu0 0
      %275 = vmatmul.mubr.bf16.gmra.mrb[0].mxu0 %v222
      %v276 = vpop.f32.mrb[0].mxu0
      %v277 = vadd.f32 0.0, %v276
      %v278 = vpop.f32.mrb[0].mxu0
      %v279 = vpop.f32.mrb[0].mxu0
      %v280 = vadd.f32 0.0, %v279
      %v281 = vpop.f32.mrb[0].mxu0
      %282 = vmatprep.mubr.bf16.mxu0 0
      %283 = vmatmul.mubr.bf16.gmra.mrb[0].mxu0 %v225
      %v284 = vpop.f32.mrb[0].mxu0
      %v285 = vadd.f32 0.0, %v284
      %v286 = vpop.f32.mrb[0].mxu0
      %v287 = vpop.f32.mrb[0].mxu0
      %v288 = vadd.f32 0.0, %v287
      %v289 = vpop.f32.mrb[0].mxu0
      %290 = vmatprep.mubr.bf16.mxu0 0
      %291 = vmatmul.mubr.bf16.gmra.mrb[0].mxu0 %v228
      %v292 = vpop.f32.mrb[0].mxu0
      %v293 = vadd.f32 0.0, %v292
      %v294 = vpop.f32.mrb[0].mxu0
      %v295 = vpop.f32.mrb[0].mxu0
      %v296 = vadd.f32 0.0, %v295
      %v297 = vpop.f32.mrb[0].mxu0
      %298 = vdwg.mxu0
      %v307 = vunpack.c.l.b16 %v177
      %v308 = vunpack.c.l.b16 %v178
      %v309 = vunpack.c.l.b16 %v179
      %v310 = vunpack.c.l.b16 %v180
      %v311 = vunpack.c.l.b16 %v181
      %v312 = vunpack.c.l.b16 %v182
      %v313 = vunpack.c.l.b16 %v183
      %v314 = vunpack.c.l.b16 %v184
      %v315 = vpack.c.b16 %v308, %v307
      %v316 = vpack.c.b16 %v310, %v309
      %v317 = vpack.c.b16 %v312, %v311
      %v318 = vpack.c.b16 %v314, %v313
      %v320 = vsel %vm217, %v315, 0
      %v323 = vsel %vm217, %v316, 0
      %v326 = vsel %vm217, %v317, 0
      %v329 = vsel %vm217, %v318, 0
      %v332 = vsel %vm230, %v185, 0
      %334 = vmatprep.subr.bf16.mxu0 0
      %335 = vmatpush1.bf16.msra.mxu0 %v332
      %336 = vmatprep.subr.bf16.mxu0 0
      %337 = vmatpush1.bf16.msra.mxu0 0
      %338 = vmatprep.subr.bf16.mxu0 0
      %339 = vmatpush1.bf16.msra.mxu0 0
      %340 = vmatprep.subr.bf16.mxu0 0
      %341 = vmatpush1.bf16.msra.mxu0 0
      %342 = vmatprep.subr.bf16.mxu0 0
      %343 = vmatpush1.bf16.msra.mxu0 0
      %344 = vmatprep.subr.bf16.mxu0 0
      %345 = vmatpush1.bf16.msra.mxu0 0
      %346 = vmatprep.subr.bf16.mxu0 0
      %347 = vmatpush1.bf16.msra.mxu0 0
      %348 = vmatprep.subr.bf16.mxu0 0
      %349 = vmatpush1.bf16.msra.mxu0 0
      %350 = vmatprep.subr.bf16.mxu0 0
      %351 = vmatpush1.bf16.msra.mxu0 0
      %352 = vmatprep.subr.bf16.mxu0 0
      %353 = vmatpush1.bf16.msra.mxu0 0
      %354 = vmatprep.subr.bf16.mxu0 0
      %355 = vmatpush1.bf16.msra.mxu0 0
      %356 = vmatprep.subr.bf16.mxu0 0
      %357 = vmatpush1.bf16.msra.mxu0 0
      %358 = vmatprep.subr.bf16.mxu0 0
      %359 = vmatpush1.bf16.msra.mxu0 0
      %360 = vmatprep.subr.bf16.mxu0 0
      %361 = vmatpush1.bf16.msra.mxu0 0
      %362 = vmatprep.subr.bf16.mxu0 0
      %363 = vmatpush1.bf16.msra.mxu0 0
      %364 = vmatprep.subr.bf16.mxu0 0
      %365 = vmatpush1.bf16.msra.mxu0 0
      %366 = vmatprep.mubr.bf16.mxu0 0
      %367 = vmatmul.mubr.bf16.gmra.mrb[0].mxu0 %v320
      %v368 = vpop.f32.mrb[0].mxu0
      %v369 = vadd.f32 %v269, %v368
      %v370 = vpop.f32.mrb[0].mxu0
      %v371 = vpop.f32.mrb[0].mxu0
      %v372 = vadd.f32 %v272, %v371
      %v373 = vpop.f32.mrb[0].mxu0
      %374 = vmatprep.mubr.bf16.mxu0 0
      %375 = vmatmul.mubr.bf16.gmra.mrb[0].mxu0 %v323
      %v376 = vpop.f32.mrb[0].mxu0
      %v377 = vadd.f32 %v277, %v376
      %v378 = vpop.f32.mrb[0].mxu0
      %v379 = vpop.f32.mrb[0].mxu0
      %v380 = vadd.f32 %v280, %v379
      %v381 = vpop.f32.mrb[0].mxu0
      %382 = vmatprep.mubr.bf16.mxu0 0
      %383 = vmatmul.mubr.bf16.gmra.mrb[0].mxu0 %v326
      %v384 = vpop.f32.mrb[0].mxu0
      %v385 = vadd.f32 %v285, %v384
      %v386 = vpop.f32.mrb[0].mxu0
      %v387 = vpop.f32.mrb[0].mxu0
      %v388 = vadd.f32 %v288, %v387
      %v389 = vpop.f32.mrb[0].mxu0
      %390 = vmatprep.mubr.bf16.mxu0 0
      %391 = vmatmul.mubr.bf16.gmra.mrb[0].mxu0 %v329
      %v392 = vpop.f32.mrb[0].mxu0
      %v393 = vadd.f32 %v293, %v392
      %v394 = vpop.f32.mrb[0].mxu0
      %v395 = vpop.f32.mrb[0].mxu0
      %v396 = vadd.f32 %v296, %v395
      %v397 = vpop.f32.mrb[0].mxu0
      %398 = vdwg.mxu0
      %v399 = vld [vmem:[%s169] sm:$0xf]
      %v400 = vld [vmem:[%s169 + $0x4] sm:$0x1]
      %v401 = vld [vmem:[%s169 + $0x8] sm:$0xf]
      %v402 = vld [vmem:[%s169 + $0xc] sm:$0x1]
      %v403 = vld [vmem:[%s169 + $0x10] sm:$0xf]
      %v404 = vld [vmem:[%s169 + $0x14] sm:$0x1]
      %v405 = vld [vmem:[%s169 + $0x18] sm:$0xf]
      %v406 = vld [vmem:[%s169 + $0x1c] sm:$0x1]
      %v407 = vld [vmem:[%s169 + $0x20] sm:$0xf]
      %v408 = vld [vmem:[%s169 + $0x24] sm:$0x1]
      %v409 = vld [vmem:[%s169 + $0x28] sm:$0xf]
      %v410 = vld [vmem:[%s169 + $0x2c] sm:$0x1]
      %v411 = vld [vmem:[%s169 + $0x30] sm:$0xf]
      %v412 = vld [vmem:[%s169 + $0x34] sm:$0x1]
      %v413 = vld [vmem:[%s169 + $0x38] sm:$0xf]
      %v414 = vld [vmem:[%s169 + $0x3c] sm:$0x1]
      %vm415 = vsmask.f32 3328
      %vm416 = vsmask.f32 7440
      %vm417 = vmor %vm415, %vm416
      %v419 = vshrl.u32 %v399, 16
      %v421 = vrot.slane %v419, 4
      %v422 = vshll.u32 %v399, 16
      %v424 = vrot.slane %v422, 5
      %v425 = vor.u32 %v421, %v424
      %v426 = vrot.slane %v425, 4
      %v428 = vshll.u32 %v400, 16
      %v430 = vrot.slane %v428, 5
      %v431 = vsel %vm417, %v426, %v430
      %v433 = vshrl.u32 %v401, 16
      %v435 = vrot.slane %v433, 4
      %v436 = vshll.u32 %v401, 16
      %v438 = vrot.slane %v436, 5
      %v439 = vor.u32 %v435, %v438
      %v440 = vrot.slane %v439, 4
      %v442 = vshll.u32 %v402, 16
      %v444 = vrot.slane %v442, 5
      %v445 = vsel %vm417, %v440, %v444
      %v447 = vshrl.u32 %v403, 16
      %v449 = vrot.slane %v447, 4
      %v450 = vshll.u32 %v403, 16
      %v452 = vrot.slane %v450, 5
      %v453 = vor.u32 %v449, %v452
      %v454 = vrot.slane %v453, 4
      %v456 = vshll.u32 %v404, 16
      %v458 = vrot.slane %v456, 5
      %v459 = vsel %vm417, %v454, %v458
      %v461 = vshrl.u32 %v405, 16
      %v463 = vrot.slane %v461, 4
      %v464 = vshll.u32 %v405, 16
      %v466 = vrot.slane %v464, 5
      %v467 = vor.u32 %v463, %v466
      %v468 = vrot.slane %v467, 4
      %v470 = vshll.u32 %v406, 16
      %v472 = vrot.slane %v470, 5
      %v473 = vsel %vm417, %v468, %v472
      %v475 = vshrl.u32 %v407, 16
      %v477 = vrot.slane %v475, 4
      %v478 = vshll.u32 %v407, 16
      %v480 = vrot.slane %v478, 5
      %v481 = vor.u32 %v477, %v480
      %v482 = vrot.slane %v481, 4
      %v484 = vshll.u32 %v408, 16
      %v486 = vrot.slane %v484, 5
      %v487 = vsel %vm417, %v482, %v486
      %v489 = vshrl.u32 %v409, 16
      %v491 = vrot.slane %v489, 4
      %v492 = vshll.u32 %v409, 16
      %v494 = vrot.slane %v492, 5
      %v495 = vor.u32 %v491, %v494
      %v496 = vrot.slane %v495, 4
      %v498 = vshll.u32 %v410, 16
      %v500 = vrot.slane %v498, 5
      %v501 = vsel %vm417, %v496, %v500
      %v503 = vshrl.u32 %v411, 16
      %v505 = vrot.slane %v503, 4
      %v506 = vshll.u32 %v411, 16
      %v508 = vrot.slane %v506, 5
      %v509 = vor.u32 %v505, %v508
      %v510 = vrot.slane %v509, 4
      %v512 = vshll.u32 %v412, 16
      %v514 = vrot.slane %v512, 5
      %v515 = vsel %vm417, %v510, %v514
      %v517 = vshrl.u32 %v413, 16
      %v519 = vrot.slane %v517, 4
      %v520 = vshll.u32 %v413, 16
      %v522 = vrot.slane %v520, 5
      %v523 = vor.u32 %v519, %v522
      %v524 = vrot.slane %v523, 4
      %v526 = vshll.u32 %v414, 16
      %v528 = vrot.slane %v526, 5
      %v529 = vsel %vm417, %v524, %v528
      %s530 = scalar_lea.vmem %s1, 8
      %v531 = vld [vmem:[%s530] sm:$0xf]
      %v532 = vunpack.c.l.b16 %v431
      %v533 = vunpack.c.l.b16 %v445
      %v534 = vunpack.c.l.b16 %v459
      %v535 = vunpack.c.l.b16 %v473
      %v536 = vunpack.c.l.b16 %v487
      %v537 = vunpack.c.l.b16 %v501
      %v538 = vunpack.c.l.b16 %v515
      %v539 = vunpack.c.l.b16 %v529
      %v540 = vpack.c.b16 %v533, %v532
      %v541 = vpack.c.b16 %v535, %v534
      %v542 = vpack.c.b16 %v537, %v536
      %v543 = vpack.c.b16 %v539, %v538
      %v545 = vsel %vm217, %v540, 0
      %v548 = vsel %vm217, %v541, 0
      %v551 = vsel %vm217, %v542, 0
      %v554 = vsel %vm217, %v543, 0
      %v557 = vsel %vm230, %v531, 0
      %559 = vmatprep.subr.bf16.mxu0 0
      %560 = vmatpush1.bf16.msra.mxu0 %v557
      %561 = vmatprep.subr.bf16.mxu0 0
      %562 = vmatpush1.bf16.msra.mxu0 0
      %563 = vmatprep.subr.bf16.mxu0 0
      %564 = vmatpush1.bf16.msra.mxu0 0
      %565 = vmatprep.subr.bf16.mxu0 0
      %566 = vmatpush1.bf16.msra.mxu0 0
      %567 = vmatprep.subr.bf16.mxu0 0
      %568 = vmatpush1.bf16.msra.mxu0 0
      %569 = vmatprep.subr.bf16.mxu0 0
      %570 = vmatpush1.bf16.msra.mxu0 0
      %571 = vmatprep.subr.bf16.mxu0 0
      %572 = vmatpush1.bf16.msra.mxu0 0
      %573 = vmatprep.subr.bf16.mxu0 0
      %574 = vmatpush1.bf16.msra.mxu0 0
      %575 = vmatprep.subr.bf16.mxu0 0
      %576 = vmatpush1.bf16.msra.mxu0 0
      %577 = vmatprep.subr.bf16.mxu0 0
      %578 = vmatpush1.bf16.msra.mxu0 0
      %579 = vmatprep.subr.bf16.mxu0 0
      %580 = vmatpush1.bf16.msra.mxu0 0
      %581 = vmatprep.subr.bf16.mxu0 0
      %582 = vmatpush1.bf16.msra.mxu0 0
      %583 = vmatprep.subr.bf16.mxu0 0
      %584 = vmatpush1.bf16.msra.mxu0 0
      %585 = vmatprep.subr.bf16.mxu0 0
      %586 = vmatpush1.bf16.msra.mxu0 0
      %587 = vmatprep.subr.bf16.mxu0 0
      %588 = vmatpush1.bf16.msra.mxu0 0
      %589 = vmatprep.subr.bf16.mxu0 0
      %590 = vmatpush1.bf16.msra.mxu0 0
      %591 = vmatprep.mubr.bf16.mxu0 0
      %592 = vmatmul.mubr.bf16.gmra.mrb[0].mxu0 %v545
      %v593 = vpop.f32.mrb[0].mxu0
      %v594 = vadd.f32 0.0, %v593
      %v595 = vpop.f32.mrb[0].mxu0
      %v596 = vpop.f32.mrb[0].mxu0
      %v597 = vadd.f32 0.0, %v596
      %v598 = vpop.f32.mrb[0].mxu0
      %599 = vmatprep.mubr.bf16.mxu0 0
      %600 = vmatmul.mubr.bf16.gmra.mrb[0].mxu0 %v548
      %v601 = vpop.f32.mrb[0].mxu0
      %v602 = vadd.f32 0.0, %v601
      %v603 = vpop.f32.mrb[0].mxu0
      %v604 = vpop.f32.mrb[0].mxu0
      %v605 = vadd.f32 0.0, %v604
      %v606 = vpop.f32.mrb[0].mxu0
      %607 = vmatprep.mubr.bf16.mxu0 0
      %608 = vmatmul.mubr.bf16.gmra.mrb[0].mxu0 %v551
      %v609 = vpop.f32.mrb[0].mxu0
      %v610 = vadd.f32 0.0, %v609
      %v611 = vpop.f32.mrb[0].mxu0
      %v612 = vpop.f32.mrb[0].mxu0
      %v613 = vadd.f32 0.0, %v612
      %v614 = vpop.f32.mrb[0].mxu0
      %615 = vmatprep.mubr.bf16.mxu0 0
      %616 = vmatmul.mubr.bf16.gmra.mrb[0].mxu0 %v554
      %v617 = vpop.f32.mrb[0].mxu0
      %v618 = vadd.f32 0.0, %v617
      %v619 = vpop.f32.mrb[0].mxu0
      %v620 = vpop.f32.mrb[0].mxu0
      %v621 = vadd.f32 0.0, %v620
      %v622 = vpop.f32.mrb[0].mxu0
      %623 = vdwg.mxu0
      %v624 = vadd.f32 %v369, %v594
      %v625 = vadd.f32 %v372, %v597
      %v626 = vadd.f32 %v377, %v602
      %v627 = vadd.f32 %v380, %v605
      %v628 = vadd.f32 %v385, %v610
      %v629 = vadd.f32 %v388, %v613
      %v630 = vadd.f32 %v393, %v618
      %v631 = vadd.f32 %v396, %v621
      %s632 = scalar_lea.vmem %s169, 144
      %v633 = vld [vmem:[%s632] sm:$0xf]
      %v634 = vld [vmem:[%s632 + $0x8] sm:$0xf]
      %v635 = vld [vmem:[%s632 + $0x10] sm:$0xf]
      %v636 = vld [vmem:[%s632 + $0x18] sm:$0xf]
      %v637 = vld [vmem:[%s632 + $0x20] sm:$0xf]
      %v638 = vld [vmem:[%s632 + $0x28] sm:$0xf]
      %v639 = vld [vmem:[%s632 + $0x30] sm:$0xf]
      %v640 = vld [vmem:[%s632 + $0x38] sm:$0xf]
      %s641 = scalar_lea.vmem %s1, 12
      %v642 = vld [vmem:[%s641] sm:$0xf]
      %v651 = vunpack.c.l.b16 %v633
      %v652 = vunpack.c.l.b16 %v634
      %v653 = vunpack.c.l.b16 %v635
      %v654 = vunpack.c.l.b16 %v636
      %v655 = vunpack.c.l.b16 %v637
      %v656 = vunpack.c.l.b16 %v638
      %v657 = vunpack.c.l.b16 %v639
      %v658 = vunpack.c.l.b16 %v640
      %v659 = vpack.c.b16 %v652, %v651
      %v660 = vpack.c.b16 %v654, %v653
      %v661 = vpack.c.b16 %v656, %v655
      %v662 = vpack.c.b16 %v658, %v657
      %v664 = vsel %vm217, %v659, 0
      %v667 = vsel %vm217, %v660, 0
      %v670 = vsel %vm217, %v661, 0
      %v673 = vsel %vm217, %v662, 0
      %v676 = vsel %vm230, %v642, 0
      %678 = vmatprep.subr.bf16.mxu0 0
      %679 = vmatpush1.bf16.msra.mxu0 %v676
      %680 = vmatprep.subr.bf16.mxu0 0
      %681 = vmatpush1.bf16.msra.mxu0 0
      %682 = vmatprep.subr.bf16.mxu0 0
      %683 = vmatpush1.bf16.msra.mxu0 0
      %684 = vmatprep.subr.bf16.mxu0 0
      %685 = vmatpush1.bf16.msra.mxu0 0
      %686 = vmatprep.subr.bf16.mxu0 0
      %687 = vmatpush1.bf16.msra.mxu0 0
      %688 = vmatprep.subr.bf16.mxu0 0
      %689 = vmatpush1.bf16.msra.mxu0 0
      %690 = vmatprep.subr.bf16.mxu0 0
      %691 = vmatpush1.bf16.msra.mxu0 0
      %692 = vmatprep.subr.bf16.mxu0 0
      %693 = vmatpush1.bf16.msra.mxu0 0
      %694 = vmatprep.subr.bf16.mxu0 0
      %695 = vmatpush1.bf16.msra.mxu0 0
      %696 = vmatprep.subr.bf16.mxu0 0
      %697 = vmatpush1.bf16.msra.mxu0 0
      %698 = vmatprep.subr.bf16.mxu0 0
      %699 = vmatpush1.bf16.msra.mxu0 0
      %700 = vmatprep.subr.bf16.mxu0 0
      %701 = vmatpush1.bf16.msra.mxu0 0
      %702 = vmatprep.subr.bf16.mxu0 0
      %703 = vmatpush1.bf16.msra.mxu0 0
      %704 = vmatprep.subr.bf16.mxu0 0
      %705 = vmatpush1.bf16.msra.mxu0 0
      %706 = vmatprep.subr.bf16.mxu0 0
      %707 = vmatpush1.bf16.msra.mxu0 0
      %708 = vmatprep.subr.bf16.mxu0 0
      %709 = vmatpush1.bf16.msra.mxu0 0
      %710 = vmatprep.mubr.bf16.mxu0 0
      %711 = vmatmul.mubr.bf16.gmra.mrb[0].mxu0 %v664
      %v712 = vpop.f32.mrb[0].mxu0
      %v713 = vadd.f32 0.0, %v712
      %v714 = vpop.f32.mrb[0].mxu0
      %v715 = vpop.f32.mrb[0].mxu0
      %v716 = vadd.f32 0.0, %v715
      %v717 = vpop.f32.mrb[0].mxu0
      %718 = vmatprep.mubr.bf16.mxu0 0
      %719 = vmatmul.mubr.bf16.gmra.mrb[0].mxu0 %v667
      %v720 = vpop.f32.mrb[0].mxu0
      %v721 = vadd.f32 0.0, %v720
      %v722 = vpop.f32.mrb[0].mxu0
      %v723 = vpop.f32.mrb[0].mxu0
      %v724 = vadd.f32 0.0, %v723
      %v725 = vpop.f32.mrb[0].mxu0
      %726 = vmatprep.mubr.bf16.mxu0 0
      %727 = vmatmul.mubr.bf16.gmra.mrb[0].mxu0 %v670
      %v728 = vpop.f32.mrb[0].mxu0
      %v729 = vadd.f32 0.0, %v728
      %v730 = vpop.f32.mrb[0].mxu0
      %v731 = vpop.f32.mrb[0].mxu0
      %v732 = vadd.f32 0.0, %v731
      %v733 = vpop.f32.mrb[0].mxu0
      %734 = vmatprep.mubr.bf16.mxu0 0
      %735 = vmatmul.mubr.bf16.gmra.mrb[0].mxu0 %v673
      %v736 = vpop.f32.mrb[0].mxu0
      %v737 = vadd.f32 0.0, %v736
      %v738 = vpop.f32.mrb[0].mxu0
      %v739 = vpop.f32.mrb[0].mxu0
      %v740 = vadd.f32 0.0, %v739
      %v741 = vpop.f32.mrb[0].mxu0
      %742 = vdwg.mxu0
      %v743 = vadd.f32 %v624, %v713
      %v744 = vadd.f32 %v625, %v716
      %v745 = vadd.f32 %v626, %v721
      %v746 = vadd.f32 %v627, %v724
      %v747 = vadd.f32 %v628, %v729
      %v748 = vadd.f32 %v629, %v732
      %v749 = vadd.f32 %v630, %v737
      %v750 = vadd.f32 %v631, %v740
      %s751 = scalar_lea.vmem %s169, 216
      %v752 = vld [vmem:[%s751] sm:$0xf]
      %v753 = vld [vmem:[%s751 + $0x8] sm:$0xf]
      %v754 = vld [vmem:[%s751 + $0x10] sm:$0xf]
      %v755 = vld [vmem:[%s751 + $0x18] sm:$0xf]
      %v756 = vld [vmem:[%s751 + $0x20] sm:$0xf]
      %v757 = vld [vmem:[%s751 + $0x28] sm:$0xf]
      %v758 = vld [vmem:[%s751 + $0x30] sm:$0xf]
      %v759 = vld [vmem:[%s751 + $0x38] sm:$0xf]
      %s760 = scalar_lea.vmem %s1, 16
      %v761 = vld [vmem:[%s760] sm:$0xf]
      %v770 = vunpack.c.l.b16 %v752
      %v771 = vunpack.c.l.b16 %v753
      %v772 = vunpack.c.l.b16 %v754
      %v773 = vunpack.c.l.b16 %v755
      %v774 = vunpack.c.l.b16 %v756
      %v775 = vunpack.c.l.b16 %v757
      %v776 = vunpack.c.l.b16 %v758
      %v777 = vunpack.c.l.b16 %v759
      %v778 = vpack.c.b16 %v771, %v770
      %v779 = vpack.c.b16 %v773, %v772
      %v780 = vpack.c.b16 %v775, %v774
      %v781 = vpack.c.b16 %v777, %v776
      %v783 = vsel %vm217, %v778, 0
      %v786 = vsel %vm217, %v779, 0
      %v789 = vsel %vm217, %v780, 0
      %v792 = vsel %vm217, %v781, 0
      %v795 = vsel %vm230, %v761, 0
      %797 = vmatprep.subr.bf16.mxu0 0
      %798 = vmatpush1.bf16.msra.mxu0 %v795
      %799 = vmatprep.subr.bf16.mxu0 0
      %800 = vmatpush1.bf16.msra.mxu0 0
      %801 = vmatprep.subr.bf16.mxu0 0
      %802 = vmatpush1.bf16.msra.mxu0 0
      %803 = vmatprep.subr.bf16.mxu0 0
      %804 = vmatpush1.bf16.msra.mxu0 0
      %805 = vmatprep.subr.bf16.mxu0 0
      %806 = vmatpush1.bf16.msra.mxu0 0
      %807 = vmatprep.subr.bf16.mxu0 0
      %808 = vmatpush1.bf16.msra.mxu0 0
      %809 = vmatprep.subr.bf16.mxu0 0
      %810 = vmatpush1.bf16.msra.mxu0 0
      %811 = vmatprep.subr.bf16.mxu0 0
      %812 = vmatpush1.bf16.msra.mxu0 0
      %813 = vmatprep.subr.bf16.mxu0 0
      %814 = vmatpush1.bf16.msra.mxu0 0
      %815 = vmatprep.subr.bf16.mxu0 0
      %816 = vmatpush1.bf16.msra.mxu0 0
      %817 = vmatprep.subr.bf16.mxu0 0
      %818 = vmatpush1.bf16.msra.mxu0 0
      %819 = vmatprep.subr.bf16.mxu0 0
      %820 = vmatpush1.bf16.msra.mxu0 0
      %821 = vmatprep.subr.bf16.mxu0 0
      %822 = vmatpush1.bf16.msra.mxu0 0
      %823 = vmatprep.subr.bf16.mxu0 0
      %824 = vmatpush1.bf16.msra.mxu0 0
      %825 = vmatprep.subr.bf16.mxu0 0
      %826 = vmatpush1.bf16.msra.mxu0 0
      %827 = vmatprep.subr.bf16.mxu0 0
      %828 = vmatpush1.bf16.msra.mxu0 0
      %829 = vmatprep.mubr.bf16.mxu0 0
      %830 = vmatmul.mubr.bf16.gmra.mrb[0].mxu0 %v783
      %v831 = vpop.f32.mrb[0].mxu0
      %v832 = vadd.f32 0.0, %v831
      %v833 = vpop.f32.mrb[0].mxu0
      %v834 = vpop.f32.mrb[0].mxu0
      %v835 = vadd.f32 0.0, %v834
      %v836 = vpop.f32.mrb[0].mxu0
      %837 = vmatprep.mubr.bf16.mxu0 0
      %838 = vmatmul.mubr.bf16.gmra.mrb[0].mxu0 %v786
      %v839 = vpop.f32.mrb[0].mxu0
      %v840 = vadd.f32 0.0, %v839
      %v841 = vpop.f32.mrb[0].mxu0
      %v842 = vpop.f32.mrb[0].mxu0
      %v843 = vadd.f32 0.0, %v842
      %v844 = vpop.f32.mrb[0].mxu0
      %845 = vmatprep.mubr.bf16.mxu0 0
      %846 = vmatmul.mubr.bf16.gmra.mrb[0].mxu0 %v789
      %v847 = vpop.f32.mrb[0].mxu0
      %v848 = vadd.f32 0.0, %v847
      %v849 = vpop.f32.mrb[0].mxu0
      %v850 = vpop.f32.mrb[0].mxu0
      %v851 = vadd.f32 0.0, %v850
      %v852 = vpop.f32.mrb[0].mxu0
      %853 = vmatprep.mubr.bf16.mxu0 0
      %854 = vmatmul.mubr.bf16.gmra.mrb[0].mxu0 %v792
      %v855 = vpop.f32.mrb[0].mxu0
      %v856 = vadd.f32 0.0, %v855
      %v857 = vpop.f32.mrb[0].mxu0
      %v858 = vpop.f32.mrb[0].mxu0
      %v859 = vadd.f32 0.0, %v858
      %v860 = vpop.f32.mrb[0].mxu0
      %861 = vdwg.mxu0
      %v862 = vadd.f32 %v743, %v832
      %v863 = vadd.f32 %v744, %v835
      %v864 = vadd.f32 %v745, %v840
      %v865 = vadd.f32 %v746, %v843
      %v866 = vadd.f32 %v747, %v848
      %v867 = vadd.f32 %v748, %v851
      %v868 = vadd.f32 %v749, %v856
      %v869 = vadd.f32 %v750, %v859
      %v870 = vld [vmem:[%s632] sm:$0xf]
      %v871 = vld [vmem:[%s632 + $0x4] sm:$0x1]
      %v872 = vld [vmem:[%s632 + $0x8] sm:$0xf]
      %v873 = vld [vmem:[%s632 + $0xc] sm:$0x1]
      %v874 = vld [vmem:[%s632 + $0x10] sm:$0xf]
      %v875 = vld [vmem:[%s632 + $0x14] sm:$0x1]
      %v876 = vld [vmem:[%s632 + $0x18] sm:$0xf]
      %v877 = vld [vmem:[%s632 + $0x1c] sm:$0x1]
      %v878 = vld [vmem:[%s632 + $0x20] sm:$0xf]
      %v879 = vld [vmem:[%s632 + $0x24] sm:$0x1]
      %v880 = vld [vmem:[%s632 + $0x28] sm:$0xf]
      %v881 = vld [vmem:[%s632 + $0x2c] sm:$0x1]
      %v882 = vld [vmem:[%s632 + $0x30] sm:$0xf]
      %v883 = vld [vmem:[%s632 + $0x34] sm:$0x1]
      %v884 = vld [vmem:[%s632 + $0x38] sm:$0xf]
      %v885 = vld [vmem:[%s632 + $0x3c] sm:$0x1]
      %v887 = vshrl.u32 %v870, 16
      %v889 = vrot.slane %v887, 4
      %v890 = vshll.u32 %v870, 16
      %v892 = vrot.slane %v890, 5
      %v893 = vor.u32 %v889, %v892
      %v894 = vrot.slane %v893, 4
      %v896 = vshll.u32 %v871, 16
      %v898 = vrot.slane %v896, 5
      %v899 = vsel %vm417, %v894, %v898
      %v901 = vshrl.u32 %v872, 16
      %v903 = vrot.slane %v901, 4
      %v904 = vshll.u32 %v872, 16
      %v906 = vrot.slane %v904, 5
      %v907 = vor.u32 %v903, %v906
      %v908 = vrot.slane %v907, 4
      %v910 = vshll.u32 %v873, 16
      %v912 = vrot.slane %v910, 5
      %v913 = vsel %vm417, %v908, %v912
      %v915 = vshrl.u32 %v874, 16
      %v917 = vrot.slane %v915, 4
      %v918 = vshll.u32 %v874, 16
      %v920 = vrot.slane %v918, 5
      %v921 = vor.u32 %v917, %v920
      %v922 = vrot.slane %v921, 4
      %v924 = vshll.u32 %v875, 16
      %v926 = vrot.slane %v924, 5
      %v927 = vsel %vm417, %v922, %v926
      %v929 = vshrl.u32 %v876, 16
      %v931 = vrot.slane %v929, 4
      %v932 = vshll.u32 %v876, 16
      %v934 = vrot.slane %v932, 5
      %v935 = vor.u32 %v931, %v934
      %v936 = vrot.slane %v935, 4
      %v938 = vshll.u32 %v877, 16
      %v940 = vrot.slane %v938, 5
      %v941 = vsel %vm417, %v936, %v940
      %v943 = vshrl.u32 %v878, 16
      %v945 = vrot.slane %v943, 4
      %v946 = vshll.u32 %v878, 16
      %v948 = vrot.slane %v946, 5
      %v949 = vor.u32 %v945, %v948
      %v950 = vrot.slane %v949, 4
      %v952 = vshll.u32 %v879, 16
      %v954 = vrot.slane %v952, 5
      %v955 = vsel %vm417, %v950, %v954
      %v957 = vshrl.u32 %v880, 16
      %v959 = vrot.slane %v957, 4
      %v960 = vshll.u32 %v880, 16
      %v962 = vrot.slane %v960, 5
      %v963 = vor.u32 %v959, %v962
      %v964 = vrot.slane %v963, 4
      %v966 = vshll.u32 %v881, 16
      %v968 = vrot.slane %v966, 5
      %v969 = vsel %vm417, %v964, %v968
      %v971 = vshrl.u32 %v882, 16
      %v973 = vrot.slane %v971, 4
      %v974 = vshll.u32 %v882, 16
      %v976 = vrot.slane %v974, 5
      %v977 = vor.u32 %v973, %v976
      %v978 = vrot.slane %v977, 4
      %v980 = vshll.u32 %v883, 16
      %v982 = vrot.slane %v980, 5
      %v983 = vsel %vm417, %v978, %v982
      %v985 = vshrl.u32 %v884, 16
      %v987 = vrot.slane %v985, 4
      %v988 = vshll.u32 %v884, 16
      %v990 = vrot.slane %v988, 5
      %v991 = vor.u32 %v987, %v990
      %v992 = vrot.slane %v991, 4
      %v994 = vshll.u32 %v885, 16
      %v996 = vrot.slane %v994, 5
      %v997 = vsel %vm417, %v992, %v996
      %s998 = scalar_lea.vmem %s1, 20
      %v999 = vld [vmem:[%s998] sm:$0xf]
      %v1000 = vunpack.c.l.b16 %v899
      %v1001 = vunpack.c.l.b16 %v913
      %v1002 = vunpack.c.l.b16 %v927
      %v1003 = vunpack.c.l.b16 %v941
      %v1004 = vunpack.c.l.b16 %v955
      %v1005 = vunpack.c.l.b16 %v969
      %v1006 = vunpack.c.l.b16 %v983
      %v1007 = vunpack.c.l.b16 %v997
      %v1008 = vpack.c.b16 %v1001, %v1000
      %v1009 = vpack.c.b16 %v1003, %v1002
      %v1010 = vpack.c.b16 %v1005, %v1004
      %v1011 = vpack.c.b16 %v1007, %v1006
      %v1013 = vsel %vm217, %v1008, 0
      %v1016 = vsel %vm217, %v1009, 0
      %v1019 = vsel %vm217, %v1010, 0
      %v1022 = vsel %vm217, %v1011, 0
      %v1025 = vsel %vm230, %v999, 0
      %1027 = vmatprep.subr.bf16.mxu0 0
      %1028 = vmatpush1.bf16.msra.mxu0 %v1025
      %1029 = vmatprep.subr.bf16.mxu0 0
      %1030 = vmatpush1.bf16.msra.mxu0 0
      %1031 = vmatprep.subr.bf16.mxu0 0
      %1032 = vmatpush1.bf16.msra.mxu0 0
      %1033 = vmatprep.subr.bf16.mxu0 0
      %1034 = vmatpush1.bf16.msra.mxu0 0
      %1035 = vmatprep.subr.bf16.mxu0 0
      %1036 = vmatpush1.bf16.msra.mxu0 0
      %1037 = vmatprep.subr.bf16.mxu0 0
      %1038 = vmatpush1.bf16.msra.mxu0 0
      %1039 = vmatprep.subr.bf16.mxu0 0
      %1040 = vmatpush1.bf16.msra.mxu0 0
      %1041 = vmatprep.subr.bf16.mxu0 0
      %1042 = vmatpush1.bf16.msra.mxu0 0
      %1043 = vmatprep.subr.bf16.mxu0 0
      %1044 = vmatpush1.bf16.msra.mxu0 0
      %1045 = vmatprep.subr.bf16.mxu0 0
      %1046 = vmatpush1.bf16.msra.mxu0 0
      %1047 = vmatprep.subr.bf16.mxu0 0
      %1048 = vmatpush1.bf16.msra.mxu0 0
      %1049 = vmatprep.subr.bf16.mxu0 0
      %1050 = vmatpush1.bf16.msra.mxu0 0
      %1051 = vmatprep.subr.bf16.mxu0 0
      %1052 = vmatpush1.bf16.msra.mxu0 0
      %1053 = vmatprep.subr.bf16.mxu0 0
      %1054 = vmatpush1.bf16.msra.mxu0 0
      %1055 = vmatprep.subr.bf16.mxu0 0
      %1056 = vmatpush1.bf16.msra.mxu0 0
      %1057 = vmatprep.subr.bf16.mxu0 0
      %1058 = vmatpush1.bf16.msra.mxu0 0
      %1059 = vmatprep.mubr.bf16.mxu0 0
      %1060 = vmatmul.mubr.bf16.gmra.mrb[0].mxu0 %v1013
      %v1061 = vpop.f32.mrb[0].mxu0
      %v1062 = vadd.f32 0.0, %v1061
      %v1063 = vpop.f32.mrb[0].mxu0
      %v1064 = vpop.f32.mrb[0].mxu0
      %v1065 = vadd.f32 0.0, %v1064
      %v1066 = vpop.f32.mrb[0].mxu0
      %1067 = vmatprep.mubr.bf16.mxu0 0
      %1068 = vmatmul.mubr.bf16.gmra.mrb[0].mxu0 %v1016
      %v1069 = vpop.f32.mrb[0].mxu0
      %v1070 = vadd.f32 0.0, %v1069
      %v1071 = vpop.f32.mrb[0].mxu0
      %v1072 = vpop.f32.mrb[0].mxu0
      %v1073 = vadd.f32 0.0, %v1072
      %v1074 = vpop.f32.mrb[0].mxu0
      %1075 = vmatprep.mubr.bf16.mxu0 0
      %1076 = vmatmul.mubr.bf16.gmra.mrb[0].mxu0 %v1019
      %v1077 = vpop.f32.mrb[0].mxu0
      %v1078 = vadd.f32 0.0, %v1077
      %v1079 = vpop.f32.mrb[0].mxu0
      %v1080 = vpop.f32.mrb[0].mxu0
      %v1081 = vadd.f32 0.0, %v1080
      %v1082 = vpop.f32.mrb[0].mxu0
      %1083 = vmatprep.mubr.bf16.mxu0 0
      %1084 = vmatmul.mubr.bf16.gmra.mrb[0].mxu0 %v1022
      %v1085 = vpop.f32.mrb[0].mxu0
      %v1086 = vadd.f32 0.0, %v1085
      %v1087 = vpop.f32.mrb[0].mxu0
      %v1088 = vpop.f32.mrb[0].mxu0
      %v1089 = vadd.f32 0.0, %v1088
      %v1090 = vpop.f32.mrb[0].mxu0
      %1091 = vdwg.mxu0
      %v1092 = vadd.f32 %v862, %v1062
      %v1093 = vadd.f32 %v863, %v1065
      %v1094 = vadd.f32 %v864, %v1070
      %v1095 = vadd.f32 %v865, %v1073
      %v1096 = vadd.f32 %v866, %v1078
      %v1097 = vadd.f32 %v867, %v1081
      %v1098 = vadd.f32 %v868, %v1086
      %v1099 = vadd.f32 %v869, %v1089
      %s1100 = scalar_lea.vmem %s169, 8
      %v1101 = vld [vmem:[%s1100] sm:$0xf]
      %v1102 = vld [vmem:[%s1100 + $0x8] sm:$0xf]
      %v1103 = vld [vmem:[%s1100 + $0x10] sm:$0xf]
      %v1104 = vld [vmem:[%s1100 + $0x18] sm:$0xf]
      %v1105 = vld [vmem:[%s1100 + $0x20] sm:$0xf]
      %v1106 = vld [vmem:[%s1100 + $0x28] sm:$0xf]
      %v1107 = vld [vmem:[%s1100 + $0x30] sm:$0xf]
      %v1108 = vld [vmem:[%s1100 + $0x38] sm:$0xf]
      %s1109 = scalar_lea.vmem %s1, 24
      %v1110 = vld [vmem:[%s1109] sm:$0xf]
      %v1119 = vunpack.c.l.b16 %v1101
      %v1120 = vunpack.c.l.b16 %v1102
      %v1121 = vunpack.c.l.b16 %v1103
      %v1122 = vunpack.c.l.b16 %v1104
      %v1123 = vunpack.c.l.b16 %v1105
      %v1124 = vunpack.c.l.b16 %v1106
      %v1125 = vunpack.c.l.b16 %v1107
      %v1126 = vunpack.c.l.b16 %v1108
      %v1127 = vpack.c.b16 %v1120, %v1119
      %v1128 = vpack.c.b16 %v1122, %v1121
      %v1129 = vpack.c.b16 %v1124, %v1123
      %v1130 = vpack.c.b16 %v1126, %v1125
      %v1132 = vsel %vm217, %v1127, 0
      %v1135 = vsel %vm217, %v1128, 0
      %v1138 = vsel %vm217, %v1129, 0
      %v1141 = vsel %vm217, %v1130, 0
      %v1144 = vsel %vm230, %v1110, 0
      %1146 = vmatprep.subr.bf16.mxu0 0
      %1147 = vmatpush1.bf16.msra.mxu0 %v1144
      %1148 = vmatprep.subr.bf16.mxu0 0
      %1149 = vmatpush1.bf16.msra.mxu0 0
      %1150 = vmatprep.subr.bf16.mxu0 0
      %1151 = vmatpush1.bf16.msra.mxu0 0
      %1152 = vmatprep.subr.bf16.mxu0 0
      %1153 = vmatpush1.bf16.msra.mxu0 0
      %1154 = vmatprep.subr.bf16.mxu0 0
      %1155 = vmatpush1.bf16.msra.mxu0 0
      %1156 = vmatprep.subr.bf16.mxu0 0
      %1157 = vmatpush1.bf16.msra.mxu0 0
      %1158 = vmatprep.subr.bf16.mxu0 0
      %1159 = vmatpush1.bf16.msra.mxu0 0
      %1160 = vmatprep.subr.bf16.mxu0 0
      %1161 = vmatpush1.bf16.msra.mxu0 0
      %1162 = vmatprep.subr.bf16.mxu0 0
      %1163 = vmatpush1.bf16.msra.mxu0 0
      %1164 = vmatprep.subr.bf16.mxu0 0
      %1165 = vmatpush1.bf16.msra.mxu0 0
      %1166 = vmatprep.subr.bf16.mxu0 0
      %1167 = vmatpush1.bf16.msra.mxu0 0
      %1168 = vmatprep.subr.bf16.mxu0 0
      %1169 = vmatpush1.bf16.msra.mxu0 0
      %1170 = vmatprep.subr.bf16.mxu0 0
      %1171 = vmatpush1.bf16.msra.mxu0 0
      %1172 = vmatprep.subr.bf16.mxu0 0
      %1173 = vmatpush1.bf16.msra.mxu0 0
      %1174 = vmatprep.subr.bf16.mxu0 0
      %1175 = vmatpush1.bf16.msra.mxu0 0
      %1176 = vmatprep.subr.bf16.mxu0 0
      %1177 = vmatpush1.bf16.msra.mxu0 0
      %1178 = vmatprep.mubr.bf16.mxu0 0
      %1179 = vmatmul.mubr.bf16.gmra.mrb[0].mxu0 %v1132
      %v1180 = vpop.f32.mrb[0].mxu0
      %v1181 = vadd.f32 0.0, %v1180
      %v1182 = vpop.f32.mrb[0].mxu0
      %v1183 = vpop.f32.mrb[0].mxu0
      %v1184 = vadd.f32 0.0, %v1183
      %v1185 = vpop.f32.mrb[0].mxu0
      %1186 = vmatprep.mubr.bf16.mxu0 0
      %1187 = vmatmul.mubr.bf16.gmra.mrb[0].mxu0 %v1135
      %v1188 = vpop.f32.mrb[0].mxu0
      %v1189 = vadd.f32 0.0, %v1188
      %v1190 = vpop.f32.mrb[0].mxu0
      %v1191 = vpop.f32.mrb[0].mxu0
      %v1192 = vadd.f32 0.0, %v1191
      %v1193 = vpop.f32.mrb[0].mxu0
      %1194 = vmatprep.mubr.bf16.mxu0 0
      %1195 = vmatmul.mubr.bf16.gmra.mrb[0].mxu0 %v1138
      %v1196 = vpop.f32.mrb[0].mxu0
      %v1197 = vadd.f32 0.0, %v1196
      %v1198 = vpop.f32.mrb[0].mxu0
      %v1199 = vpop.f32.mrb[0].mxu0
      %v1200 = vadd.f32 0.0, %v1199
      %v1201 = vpop.f32.mrb[0].mxu0
      %1202 = vmatprep.mubr.bf16.mxu0 0
      %1203 = vmatmul.mubr.bf16.gmra.mrb[0].mxu0 %v1141
      %v1204 = vpop.f32.mrb[0].mxu0
      %v1205 = vadd.f32 0.0, %v1204
      %v1206 = vpop.f32.mrb[0].mxu0
      %v1207 = vpop.f32.mrb[0].mxu0
      %v1208 = vadd.f32 0.0, %v1207
      %v1209 = vpop.f32.mrb[0].mxu0
      %1210 = vdwg.mxu0
      %v1211 = vadd.f32 %v1092, %v1181
      %v1212 = vadd.f32 %v1093, %v1184
      %v1213 = vadd.f32 %v1094, %v1189
      %v1214 = vadd.f32 %v1095, %v1192
      %v1215 = vadd.f32 %v1096, %v1197
      %v1216 = vadd.f32 %v1097, %v1200
      %v1217 = vadd.f32 %v1098, %v1205
      %v1218 = vadd.f32 %v1099, %v1208
      %s1219 = scalar_lea.vmem %s169, 80
      %v1220 = vld [vmem:[%s1219] sm:$0xf]
      %v1221 = vld [vmem:[%s1219 + $0x8] sm:$0xf]
      %v1222 = vld [vmem:[%s1219 + $0x10] sm:$0xf]
      %v1223 = vld [vmem:[%s1219 + $0x18] sm:$0xf]
      %v1224 = vld [vmem:[%s1219 + $0x20] sm:$0xf]
      %v1225 = vld [vmem:[%s1219 + $0x28] sm:$0xf]
      %v1226 = vld [vmem:[%s1219 + $0x30] sm:$0xf]
      %v1227 = vld [vmem:[%s1219 + $0x38] sm:$0xf]
      %s1228 = scalar_lea.vmem %s1, 28
      %v1229 = vld [vmem:[%s1228] sm:$0xf]
      %v1238 = vunpack.c.l.b16 %v1220
      %v1239 = vunpack.c.l.b16 %v1221
      %v1240 = vunpack.c.l.b16 %v1222
      %v1241 = vunpack.c.l.b16 %v1223
      %v1242 = vunpack.c.l.b16 %v1224
      %v1243 = vunpack.c.l.b16 %v1225
      %v1244 = vunpack.c.l.b16 %v1226
      %v1245 = vunpack.c.l.b16 %v1227
      %v1246 = vpack.c.b16 %v1239, %v1238
      %v1247 = vpack.c.b16 %v1241, %v1240
      %v1248 = vpack.c.b16 %v1243, %v1242
      %v1249 = vpack.c.b16 %v1245, %v1244
      %v1251 = vsel %vm217, %v1246, 0
      %v1254 = vsel %vm217, %v1247, 0
      %v1257 = vsel %vm217, %v1248, 0
      %v1260 = vsel %vm217, %v1249, 0
      %v1263 = vsel %vm230, %v1229, 0
      %1265 = vmatprep.subr.bf16.mxu0 0
      %1266 = vmatpush1.bf16.msra.mxu0 %v1263
      %1267 = vmatprep.subr.bf16.mxu0 0
      %1268 = vmatpush1.bf16.msra.mxu0 0
      %1269 = vmatprep.subr.bf16.mxu0 0
      %1270 = vmatpush1.bf16.msra.mxu0 0
      %1271 = vmatprep.subr.bf16.mxu0 0
      %1272 = vmatpush1.bf16.msra.mxu0 0
      %1273 = vmatprep.subr.bf16.mxu0 0
      %1274 = vmatpush1.bf16.msra.mxu0 0
      %1275 = vmatprep.subr.bf16.mxu0 0
      %1276 = vmatpush1.bf16.msra.mxu0 0
      %1277 = vmatprep.subr.bf16.mxu0 0
      %1278 = vmatpush1.bf16.msra.mxu0 0
      %1279 = vmatprep.subr.bf16.mxu0 0
      %1280 = vmatpush1.bf16.msra.mxu0 0
      %1281 = vmatprep.subr.bf16.mxu0 0
      %1282 = vmatpush1.bf16.msra.mxu0 0
      %1283 = vmatprep.subr.bf16.mxu0 0
      %1284 = vmatpush1.bf16.msra.mxu0 0
      %1285 = vmatprep.subr.bf16.mxu0 0
      %1286 = vmatpush1.bf16.msra.mxu0 0
      %1287 = vmatprep.subr.bf16.mxu0 0
      %1288 = vmatpush1.bf16.msra.mxu0 0
      %1289 = vmatprep.subr.bf16.mxu0 0
      %1290 = vmatpush1.bf16.msra.mxu0 0
      %1291 = vmatprep.subr.bf16.mxu0 0
      %1292 = vmatpush1.bf16.msra.mxu0 0
      %1293 = vmatprep.subr.bf16.mxu0 0
      %1294 = vmatpush1.bf16.msra.mxu0 0
      %1295 = vmatprep.subr.bf16.mxu0 0
      %1296 = vmatpush1.bf16.msra.mxu0 0
      %1297 = vmatprep.mubr.bf16.mxu0 0
      %1298 = vmatmul.mubr.bf16.gmra.mrb[0].mxu0 %v1251
      %v1299 = vpop.f32.mrb[0].mxu0
      %v1300 = vadd.f32 0.0, %v1299
      %v1301 = vpop.f32.mrb[0].mxu0
      %v1302 = vpop.f32.mrb[0].mxu0
      %v1303 = vadd.f32 0.0, %v1302
      %v1304 = vpop.f32.mrb[0].mxu0
      %1305 = vmatprep.mubr.bf16.mxu0 0
      %1306 = vmatmul.mubr.bf16.gmra.mrb[0].mxu0 %v1254
      %v1307 = vpop.f32.mrb[0].mxu0
      %v1308 = vadd.f32 0.0, %v1307
      %v1309 = vpop.f32.mrb[0].mxu0
      %v1310 = vpop.f32.mrb[0].mxu0
      %v1311 = vadd.f32 0.0, %v1310
      %v1312 = vpop.f32.mrb[0].mxu0
      %1313 = vmatprep.mubr.bf16.mxu0 0
      %1314 = vmatmul.mubr.bf16.gmra.mrb[0].mxu0 %v1257
      %v1315 = vpop.f32.mrb[0].mxu0
      %v1316 = vadd.f32 0.0, %v1315
      %v1317 = vpop.f32.mrb[0].mxu0
      %v1318 = vpop.f32.mrb[0].mxu0
      %v1319 = vadd.f32 0.0, %v1318
      %v1320 = vpop.f32.mrb[0].mxu0
      %1321 = vmatprep.mubr.bf16.mxu0 0
      %1322 = vmatmul.mubr.bf16.gmra.mrb[0].mxu0 %v1260
      %v1323 = vpop.f32.mrb[0].mxu0
      %v1324 = vadd.f32 0.0, %v1323
      %v1325 = vpop.f32.mrb[0].mxu0
      %v1326 = vpop.f32.mrb[0].mxu0
      %v1327 = vadd.f32 0.0, %v1326
      %v1328 = vpop.f32.mrb[0].mxu0
      %1329 = vdwg.mxu0
      %v1330 = vadd.f32 %v1211, %v1300
      %v1331 = vadd.f32 %v1212, %v1303
      %v1332 = vadd.f32 %v1213, %v1308
      %v1333 = vadd.f32 %v1214, %v1311
      %v1334 = vadd.f32 %v1215, %v1316
      %v1335 = vadd.f32 %v1216, %v1319
      %v1336 = vadd.f32 %v1217, %v1324
      %v1337 = vadd.f32 %v1218, %v1327
      %v1338 = vld [vmem:[%s1100] sm:$0xf]
      %v1339 = vld [vmem:[%s1100 + $0x4] sm:$0x1]
      %v1340 = vld [vmem:[%s1100 + $0x8] sm:$0xf]
      %v1341 = vld [vmem:[%s1100 + $0xc] sm:$0x1]
      %v1342 = vld [vmem:[%s1100 + $0x10] sm:$0xf]
      %v1343 = vld [vmem:[%s1100 + $0x14] sm:$0x1]
      %v1344 = vld [vmem:[%s1100 + $0x18] sm:$0xf]
      %v1345 = vld [vmem:[%s1100 + $0x1c] sm:$0x1]
      %v1346 = vld [vmem:[%s1100 + $0x20] sm:$0xf]
      %v1347 = vld [vmem:[%s1100 + $0x24] sm:$0x1]
      %v1348 = vld [vmem:[%s1100 + $0x28] sm:$0xf]
      %v1349 = vld [vmem:[%s1100 + $0x2c] sm:$0x1]
      %v1350 = vld [vmem:[%s1100 + $0x30] sm:$0xf]
      %v1351 = vld [vmem:[%s1100 + $0x34] sm:$0x1]
      %v1352 = vld [vmem:[%s1100 + $0x38] sm:$0xf]
      %v1353 = vld [vmem:[%s1100 + $0x3c] sm:$0x1]
      %v1355 = vshrl.u32 %v1338, 16
      %v1357 = vrot.slane %v1355, 4
      %v1358 = vshll.u32 %v1338, 16
      %v1360 = vrot.slane %v1358, 5
      %v1361 = vor.u32 %v1357, %v1360
      %v1362 = vrot.slane %v1361, 4
      %v1364 = vshll.u32 %v1339, 16
      %v1366 = vrot.slane %v1364, 5
      %v1367 = vsel %vm417, %v1362, %v1366
      %v1369 = vshrl.u32 %v1340, 16
      %v1371 = vrot.slane %v1369, 4
      %v1372 = vshll.u32 %v1340, 16
      %v1374 = vrot.slane %v1372, 5
      %v1375 = vor.u32 %v1371, %v1374
      %v1376 = vrot.slane %v1375, 4
      %v1378 = vshll.u32 %v1341, 16
      %v1380 = vrot.slane %v1378, 5
      %v1381 = vsel %vm417, %v1376, %v1380
      %v1383 = vshrl.u32 %v1342, 16
      %v1385 = vrot.slane %v1383, 4
      %v1386 = vshll.u32 %v1342, 16
      %v1388 = vrot.slane %v1386, 5
      %v1389 = vor.u32 %v1385, %v1388
      %v1390 = vrot.slane %v1389, 4
      %v1392 = vshll.u32 %v1343, 16
      %v1394 = vrot.slane %v1392, 5
      %v1395 = vsel %vm417, %v1390, %v1394
      %v1397 = vshrl.u32 %v1344, 16
      %v1399 = vrot.slane %v1397, 4
      %v1400 = vshll.u32 %v1344, 16
      %v1402 = vrot.slane %v1400, 5
      %v1403 = vor.u32 %v1399, %v1402
      %v1404 = vrot.slane %v1403, 4
      %v1406 = vshll.u32 %v1345, 16
      %v1408 = vrot.slane %v1406, 5
      %v1409 = vsel %vm417, %v1404, %v1408
      %v1411 = vshrl.u32 %v1346, 16
      %v1413 = vrot.slane %v1411, 4
      %v1414 = vshll.u32 %v1346, 16
      %v1416 = vrot.slane %v1414, 5
      %v1417 = vor.u32 %v1413, %v1416
      %v1418 = vrot.slane %v1417, 4
      %v1420 = vshll.u32 %v1347, 16
      %v1422 = vrot.slane %v1420, 5
      %v1423 = vsel %vm417, %v1418, %v1422
      %v1425 = vshrl.u32 %v1348, 16
      %v1427 = vrot.slane %v1425, 4
      %v1428 = vshll.u32 %v1348, 16
      %v1430 = vrot.slane %v1428, 5
      %v1431 = vor.u32 %v1427, %v1430
      %v1432 = vrot.slane %v1431, 4
      %v1434 = vshll.u32 %v1349, 16
      %v1436 = vrot.slane %v1434, 5
      %v1437 = vsel %vm417, %v1432, %v1436
      %v1439 = vshrl.u32 %v1350, 16
      %v1441 = vrot.slane %v1439, 4
      %v1442 = vshll.u32 %v1350, 16
      %v1444 = vrot.slane %v1442, 5
      %v1445 = vor.u32 %v1441, %v1444
      %v1446 = vrot.slane %v1445, 4
      %v1448 = vshll.u32 %v1351, 16
      %v1450 = vrot.slane %v1448, 5
      %v1451 = vsel %vm417, %v1446, %v1450
      %v1453 = vshrl.u32 %v1352, 16
      %v1455 = vrot.slane %v1453, 4
      %v1456 = vshll.u32 %v1352, 16
      %v1458 = vrot.slane %v1456, 5
      %v1459 = vor.u32 %v1455, %v1458
      %v1460 = vrot.slane %v1459, 4
      %v1462 = vshll.u32 %v1353, 16
      %v1464 = vrot.slane %v1462, 5
      %v1465 = vsel %vm417, %v1460, %v1464
      %s1466 = scalar_lea.vmem %s1, 32
      %v1467 = vld [vmem:[%s1466] sm:$0xf]
      %v1468 = vunpack.c.l.b16 %v1367
      %v1469 = vunpack.c.l.b16 %v1381
      %v1470 = vunpack.c.l.b16 %v1395
      %v1471 = vunpack.c.l.b16 %v1409
      %v1472 = vunpack.c.l.b16 %v1423
      %v1473 = vunpack.c.l.b16 %v1437
      %v1474 = vunpack.c.l.b16 %v1451
      %v1475 = vunpack.c.l.b16 %v1465
      %v1476 = vpack.c.b16 %v1469, %v1468
      %v1477 = vpack.c.b16 %v1471, %v1470
      %v1478 = vpack.c.b16 %v1473, %v1472
      %v1479 = vpack.c.b16 %v1475, %v1474
      %v1481 = vsel %vm217, %v1476, 0
      %v1484 = vsel %vm217, %v1477, 0
      %v1487 = vsel %vm217, %v1478, 0
      %v1490 = vsel %vm217, %v1479, 0
      %v1493 = vsel %vm230, %v1467, 0
      %1495 = vmatprep.subr.bf16.mxu0 0
      %1496 = vmatpush1.bf16.msra.mxu0 %v1493
      %1497 = vmatprep.subr.bf16.mxu0 0
      %1498 = vmatpush1.bf16.msra.mxu0 0
      %1499 = vmatprep.subr.bf16.mxu0 0
      %1500 = vmatpush1.bf16.msra.mxu0 0
      %1501 = vmatprep.subr.bf16.mxu0 0
      %1502 = vmatpush1.bf16.msra.mxu0 0
      %1503 = vmatprep.subr.bf16.mxu0 0
      %1504 = vmatpush1.bf16.msra.mxu0 0
      %1505 = vmatprep.subr.bf16.mxu0 0
      %1506 = vmatpush1.bf16.msra.mxu0 0
      %1507 = vmatprep.subr.bf16.mxu0 0
      %1508 = vmatpush1.bf16.msra.mxu0 0
      %1509 = vmatprep.subr.bf16.mxu0 0
      %1510 = vmatpush1.bf16.msra.mxu0 0
      %1511 = vmatprep.subr.bf16.mxu0 0
      %1512 = vmatpush1.bf16.msra.mxu0 0
      %1513 = vmatprep.subr.bf16.mxu0 0
      %1514 = vmatpush1.bf16.msra.mxu0 0
      %1515 = vmatprep.subr.bf16.mxu0 0
      %1516 = vmatpush1.bf16.msra.mxu0 0
      %1517 = vmatprep.subr.bf16.mxu0 0
      %1518 = vmatpush1.bf16.msra.mxu0 0
      %1519 = vmatprep.subr.bf16.mxu0 0
      %1520 = vmatpush1.bf16.msra.mxu0 0
      %1521 = vmatprep.subr.bf16.mxu0 0
      %1522 = vmatpush1.bf16.msra.mxu0 0
      %1523 = vmatprep.subr.bf16.mxu0 0
      %1524 = vmatpush1.bf16.msra.mxu0 0
      %1525 = vmatprep.subr.bf16.mxu0 0
      %1526 = vmatpush1.bf16.msra.mxu0 0
      %1527 = vmatprep.mubr.bf16.mxu0 0
      %1528 = vmatmul.mubr.bf16.gmra.mrb[0].mxu0 %v1481
      %v1529 = vpop.f32.mrb[0].mxu0
      %v1530 = vadd.f32 0.0, %v1529
      %v1531 = vpop.f32.mrb[0].mxu0
      %v1532 = vpop.f32.mrb[0].mxu0
      %v1533 = vadd.f32 0.0, %v1532
      %v1534 = vpop.f32.mrb[0].mxu0
      %1535 = vmatprep.mubr.bf16.mxu0 0
      %1536 = vmatmul.mubr.bf16.gmra.mrb[0].mxu0 %v1484
      %v1537 = vpop.f32.mrb[0].mxu0
      %v1538 = vadd.f32 0.0, %v1537
      %v1539 = vpop.f32.mrb[0].mxu0
      %v1540 = vpop.f32.mrb[0].mxu0
      %v1541 = vadd.f32 0.0, %v1540
      %v1542 = vpop.f32.mrb[0].mxu0
      %1543 = vmatprep.mubr.bf16.mxu0 0
      %1544 = vmatmul.mubr.bf16.gmra.mrb[0].mxu0 %v1487
      %v1545 = vpop.f32.mrb[0].mxu0
      %v1546 = vadd.f32 0.0, %v1545
      %v1547 = vpop.f32.mrb[0].mxu0
      %v1548 = vpop.f32.mrb[0].mxu0
      %v1549 = vadd.f32 0.0, %v1548
      %v1550 = vpop.f32.mrb[0].mxu0
      %1551 = vmatprep.mubr.bf16.mxu0 0
      %1552 = vmatmul.mubr.bf16.gmra.mrb[0].mxu0 %v1490
      %v1553 = vpop.f32.mrb[0].mxu0
      %v1554 = vadd.f32 0.0, %v1553
      %v1555 = vpop.f32.mrb[0].mxu0
      %v1556 = vpop.f32.mrb[0].mxu0
      %v1557 = vadd.f32 0.0, %v1556
      %v1558 = vpop.f32.mrb[0].mxu0
      %1559 = vdwg.mxu0
      %v1560 = vadd.f32 %v1330, %v1530
      %v1561 = vadd.f32 %v1331, %v1533
      %v1562 = vadd.f32 %v1332, %v1538
      %v1563 = vadd.f32 %v1333, %v1541
      %v1564 = vadd.f32 %v1334, %v1546
      %v1565 = vadd.f32 %v1335, %v1549
      %v1566 = vadd.f32 %v1336, %v1554
      %v1567 = vadd.f32 %v1337, %v1557
      %v1568 = vld [vmem:[%s2] sm:$0x1]
      %v1569 = vld [vmem:[%s2 + $0x1] sm:$0x1]
      %v1570 = vlaneseq
      %v1571 = vshrl.u32 %v1570, 7
      %v1572 = vsub.s32 0, %v1571
      %v1573 = vrot.slane %v1568, %v1572
      %v1574 = vadd.f32 %v1560, %v1573
      %v1575 = vadd.f32 %v1561, %v1573
      %v1576 = vadd.f32 %v1562, %v1573
      %v1577 = vadd.f32 %v1563, %v1573
      %v1578 = vadd.f32 %v1564, %v1573
      %v1579 = vadd.f32 %v1565, %v1573
      %v1580 = vadd.f32 %v1566, %v1573
      %v1581 = vadd.f32 %v1567, %v1573
      %vm1582 = vcmp.ge.f32.partialorder %v1574, 0.0
      %vm1583 = vcmp.ge.f32.partialorder %v1575, 0.0
      %vm1584 = vcmp.ge.f32.partialorder %v1576, 0.0
      %vm1585 = vcmp.ge.f32.partialorder %v1577, 0.0
      %vm1586 = vcmp.ge.f32.partialorder %v1578, 0.0
      %vm1587 = vcmp.ge.f32.partialorder %v1579, 0.0
      %vm1588 = vcmp.ge.f32.partialorder %v1580, 0.0
      %vm1589 = vcmp.ge.f32.partialorder %v1581, 0.0
      %v1590 = vlaneseq
      %v1591 = vshrl.u32 %v1590, 7
      %v1592 = vsub.s32 0, %v1591
      %v1593 = vrot.slane %v1569, %v1592
      %v1594 = vmul.f32 %v1574, %v1593
      %v1595 = vmul.f32 %v1575, %v1593
      %v1596 = vmul.f32 %v1576, %v1593
      %v1597 = vmul.f32 %v1577, %v1593
      %v1598 = vmul.f32 %v1578, %v1593
      %v1599 = vmul.f32 %v1579, %v1593
      %v1600 = vmul.f32 %v1580, %v1593
      %v1601 = vmul.f32 %v1581, %v1593
      %v1602 = vsel %vm1582, %v1574, %v1594
      %v1603 = vsel %vm1583, %v1575, %v1595
      %v1604 = vsel %vm1584, %v1576, %v1596
      %v1605 = vsel %vm1585, %v1577, %v1597
      %v1606 = vsel %vm1586, %v1578, %v1598
      %v1607 = vsel %vm1587, %v1579, %v1599
      %v1608 = vsel %vm1588, %v1580, %v1600
      %v1609 = vsel %vm1589, %v1581, %v1601
      %v1610 = vpack.c.bf16 %v1602, %v1602
      %v1611 = vpack.c.bf16 %v1603, %v1603
      %v1612 = vpack.c.bf16 %v1604, %v1604
      %v1613 = vpack.c.bf16 %v1605, %v1605
      %v1614 = vpack.c.bf16 %v1606, %v1606
      %v1615 = vpack.c.bf16 %v1607, %v1607
      %v1616 = vpack.c.bf16 %v1608, %v1608
      %v1617 = vpack.c.bf16 %v1609, %v1609
      %vm1618 = vcmask 60416
      %1619 = vst.msk [vmem:[%s175] sm:$0xf] %vm1618, %v1610
      %1620 = vst.msk [vmem:[%s175 + $0x4] sm:$0xf] %vm1618, %v1611
      %1621 = vst.msk [vmem:[%s175 + $0x8] sm:$0xf] %vm1618, %v1612
      %1622 = vst.msk [vmem:[%s175 + $0xc] sm:$0xf] %vm1618, %v1613
      %1623 = vst.msk [vmem:[%s175 + $0x10] sm:$0xf] %vm1618, %v1614
      %1624 = vst.msk [vmem:[%s175 + $0x14] sm:$0xf] %vm1618, %v1615
      %1625 = vst.msk [vmem:[%s175 + $0x18] sm:$0xf] %vm1618, %v1616
      %1626 = vst.msk [vmem:[%s175 + $0x1c] sm:$0xf] %vm1618, %v1617
      %p1627 = scmp.lt.s32.totalorder %s14, 1
      %s1628 = scalar_select %p1627, %s14, 1
      %s1629 = smul.addr %s1628, 8
      %s1630 = smul.addr %s1629, 4
      %s1631 = scalar_lea.vmem %s3, %s1630
      // Predicated region
      $region33: #{conv2n_forward.4} parent=31 // pred_check
        %p1632 = pneg %p100
      $region34: #{conv2n_forward.4} parent=31 // pred_check_branch
        %1634 = sbr.rel (%p1632) target = $region36
      $region35: #{conv2n_forward.4} parent=31 // pred_region
        _
      $region36: #{conv2n_forward.4} parent=31 // pred_fallthru
        _
    $region32: #{conv2n_forward.4} parent=5 // pred_fallthru
      _
    %p1635 = scmp.le.s32.totalorder 2, %s9
    // Predicated region
    $region37: #{conv2n_forward.4} parent=5 // pred_check
      %p1636 = pneg %p1635
    $region38: #{conv2n_forward.4} parent=5 // pred_check_branch
      %1638 = sbr.rel (%p1636) target = $region40
    $region39: #{conv2n_forward.4} parent=5 // pred_region
      %s1639 = ssub.s32 %s9, 2
      // Predicated region
      $region41: #{conv2n_forward.4} parent=39 // pred_check
        %p1640 = pneg %p106
      $region42: #{conv2n_forward.4} parent=39 // pred_check_branch
        %1642 = sbr.rel (%p1640) target = $region44
      $region43: #{conv2n_forward.4} parent=39 // pred_region
        %p1643 = scmp.lt.s32.totalorder %s15, 1
        %s1644 = scalar_select %p1643, %s15, 1
        %s1645 = smul.addr %s1644, 8
        %s1646 = smul.addr %s1645, 4
        %s1647 = scalar_lea.vmem %s3, %s1646
      $region44: #{conv2n_forward.4} parent=39 // pred_fallthru
        _
    $region40: #{conv2n_forward.4} parent=5 // pred_fallthru
      _
  $region6: #{conv2n_forward.4} parent=0 // loop_footer
    %s13 = sadd.s32 1, %s9
  $region7: #{conv2n_forward.4} parent=0 // loop_footer_branch
    %8 = sbr.rel target = $region3
  $region8: #{conv2n_forward.4} parent=0 // loop_exit
    _

</llo_original>
